<compile_context>
chip_gen: v7x
topology: tpu7x:2x2x1
jax: 0.10.0
libtpu: 0.0.40
codegen_flags: <defaults>
</compile_context>

<pallas_src>
from functools import partial

import jax
import jax.numpy as jnp
from jax import lax
from jax.experimental import pallas as pl
from jax.experimental.pallas import tpu as pltpu


def _mlp_kernel(x_ref, w1_ref, b1_ref, w2_ref, b2_ref, w3_ref, b3_ref, o_ref):
    # Sequential starts with the activation: tanh on the raw input.
    h = jnp.tanh(x_ref[...].astype(jnp.float32))
    # Linear(l0 -> l1) + tanh   (f32 operands, f32 accumulation)
    h = jnp.tanh(jnp.dot(h, w1_ref[...],
                         preferred_element_type=jnp.float32,
                         precision=lax.Precision.HIGHEST) + b1_ref[...])
    # Linear(l1 -> l2) + tanh
    h = jnp.tanh(jnp.dot(h, w2_ref[...],
                         preferred_element_type=jnp.float32,
                         precision=lax.Precision.HIGHEST) + b2_ref[...])
    # Final Linear(l2 -> l3), no activation.
    o_ref[...] = (jnp.dot(h, w3_ref[...],
                          preferred_element_type=jnp.float32,
                          precision=lax.Precision.HIGHEST)
                  + b3_ref[...]).astype(o_ref.dtype)


@partial(jax.jit, static_argnames=("tile_b",))
def _mlp_forward_impl(x, w1, b1, w2, b2, w3, b3, *, tile_b):
    batch, in_dim = x.shape
    l1 = w1.shape[1]
    l2 = w2.shape[1]
    out_dim = w3.shape[1]

    num_tiles = pl.cdiv(batch, tile_b)
    const_map = lambda i: (0, 0)

    flops = 2 * batch * (in_dim * l1 + l1 * l2 + l2 * out_dim)
    transcendentals = batch * (in_dim + l1 + l2)
    bytes_accessed = (
        x.size * 4 + batch * out_dim * 4
        + (w1.size + w2.size + w3.size) * 4
        + (b1.size + b2.size + b3.size) * 4
    )

    return pl.pallas_call(
        _mlp_kernel,
        out_shape=jax.ShapeDtypeStruct((batch, out_dim), x.dtype),
        grid=(num_tiles,),
        in_specs=[
            pl.BlockSpec((tile_b, in_dim), lambda i: (i, 0)),   # x: batch-tiled
            pl.BlockSpec(w1.shape, const_map),                  # VMEM-resident weights
            pl.BlockSpec(b1.shape, const_map),
            pl.BlockSpec(w2.shape, const_map),
            pl.BlockSpec(b2.shape, const_map),
            pl.BlockSpec(w3.shape, const_map),
            pl.BlockSpec(b3.shape, const_map),
        ],
        out_specs=pl.BlockSpec((tile_b, out_dim), lambda i: (i, 0)),
        compiler_params=pltpu.CompilerParams(
            dimension_semantics=("parallel",),
            vmem_limit_bytes=32 * 1024 * 1024,
        ),
        cost_estimate=pl.CostEstimate(
            flops=flops,
            transcendentals=transcendentals,
            bytes_accessed=bytes_accessed,
        ),
    )(x, w1, b1, w2, b2, w3, b3)


def mlp_forward(x, w1, b1, w2, b2, w3, b3):
    """Fused MLP forward: tanh -> (x@W1+b1) -> tanh -> (x@W2+b2) -> tanh -> (x@W3+b3)."""
    batch = x.shape[0]
    # v7x has 2 TensorCores per chip -> keep 2 balanced grid steps; v5e/v6e have
    # 1 TC -> a single grid step covering the whole batch avoids per-step overhead.
    kind = jax.devices()[0].device_kind.lower()
    n_cores = 2 if "v7" in kind else 1
    tile_b = pl.cdiv(batch, n_cores)
    tile_b = max(8, ((tile_b + 7) // 8) * 8)        # sublane-aligned tile
    tile_b = min(tile_b, ((batch + 7) // 8) * 8)    # never larger than needed
    return _mlp_forward_impl(x, w1, b1, w2, b2, w3, b3, tile_b=tile_b)


def init_params(key, layers):
    """PyTorch-equivalent init: weight ~ N(0,1) of shape (out, in), bias = 0.

    Returns weights pre-transposed to (in, out) and biases as (1, out).
    """
    params = []
    for i in range(len(layers) - 1):
        key, sub = jax.random.split(key)
        w_torch = jax.random.normal(sub, (layers[i + 1], layers[i]), dtype=jnp.float32)
        params.append((w_torch.T, jnp.zeros((1, layers[i + 1]), dtype=jnp.float32)))
    return params


def reference_forward(x, params):
    h = jnp.tanh(x)
    for i, (w, b) in enumerate(params):
        h = h @ w + b
        if i < len(params) - 1:
            h = jnp.tanh(h)
    return h


if __name__ == "__main__":
    # layers = [32, 64, 64, 16], activation = tanh, time_lag = 'uniform'
    layers = [32, 64, 64, 16]
    batch = 200  # not a multiple of the tile -> exercises the ragged-block path on v7x

    key = jax.random.PRNGKey(0)
    key, xkey = jax.random.split(key)
    x = jax.random.normal(xkey, (batch, layers[0]), dtype=jnp.float32)

    params = init_params(key, layers)
    (w1, b1), (w2, b2), (w3, b3) = params

    y = mlp_forward(x, w1, b1, w2, b2, w3, b3)
    y = jax.block_until_ready(y)

    # Correctness check against plain-JAX f32 reference (all-f32 kernel path).
    y_ref = reference_forward(x, params)
    assert y.shape == (batch, layers[-1])
    rel_err = jnp.max(jnp.abs(y - y_ref)) / (jnp.max(jnp.abs(y_ref)) + 1e-6)
    assert rel_err < 1e-3, f"mismatch vs reference: rel_err={rel_err}"

    print("KERNEL_OK")
</pallas_src>

<mosaic_0001>
module attributes {stable_mosaic.version = 11 : i64} {
  func.func @_mlp_kernel(%arg0: i32, %arg1: memref<200x32xf32, #tpu.memory_space<vmem>>, %arg2: memref<32x64xf32, #tpu.memory_space<vmem>>, %arg3: memref<1x64xf32, #tpu.memory_space<vmem>>, %arg4: memref<64x64xf32, #tpu.memory_space<vmem>>, %arg5: memref<1x64xf32, #tpu.memory_space<vmem>>, %arg6: memref<64x16xf32, #tpu.memory_space<vmem>>, %arg7: memref<1x16xf32, #tpu.memory_space<vmem>>, %arg8: memref<200x16xf32, #tpu.memory_space<vmem>>) attributes {dimension_semantics = [#tpu.dimension_semantics<parallel>], iteration_bounds = array<i64: 1>, scalar_prefetch = 0 : i64, scratch_operands = 0 : i64, tpu.core_type = #tpu.core_type<tc>, window_params = [{transform_indices = @transform_0, window_bounds = array<i64: 200, 32>}, {pipeline_mode = #tpu.pipeline_mode<synchronous>, transform_indices = @transform_1, window_bounds = array<i64: 32, 64>}, {pipeline_mode = #tpu.pipeline_mode<synchronous>, transform_indices = @transform_2, window_bounds = array<i64: 1, 64>}, {pipeline_mode = #tpu.pipeline_mode<synchronous>, transform_indices = @transform_3, window_bounds = array<i64: 64, 64>}, {pipeline_mode = #tpu.pipeline_mode<synchronous>, transform_indices = @transform_4, window_bounds = array<i64: 1, 64>}, {pipeline_mode = #tpu.pipeline_mode<synchronous>, transform_indices = @transform_5, window_bounds = array<i64: 64, 16>}, {pipeline_mode = #tpu.pipeline_mode<synchronous>, transform_indices = @transform_6, window_bounds = array<i64: 1, 16>}, {transform_indices = @transform_7, window_bounds = array<i64: 200, 16>}]} {
    %c0 = arith.constant 0 : index
    %c0_0 = arith.constant 0 : index
    %0 = vector.load %arg1[%c0, %c0_0] : memref<200x32xf32, #tpu.memory_space<vmem>>, vector<200x32xf32>
    %1 = math.tanh %0 : vector<200x32xf32>
    %c0_1 = arith.constant 0 : index
    %c0_2 = arith.constant 0 : index
    %2 = vector.load %arg2[%c0_1, %c0_2] : memref<32x64xf32, #tpu.memory_space<vmem>>, vector<32x64xf32>
    %cst = arith.constant dense<0.000000e+00> : vector<200x64xf32>
    %3 = tpu.matmul %1, %2, %cst {dimension_numbers = #tpu.dot_dimension_numbers<[1], [0], [0], [1], [0, 0, 1, 1], [], []>, precision = #tpu.contract_precision<fp32>} : vector<200x32xf32>, vector<32x64xf32>, vector<200x64xf32> -> vector<200x64xf32>
    %c0_3 = arith.constant 0 : index
    %c0_4 = arith.constant 0 : index
    %4 = vector.load %arg3[%c0_3, %c0_4] : memref<1x64xf32, #tpu.memory_space<vmem>>, vector<1x64xf32>
    %5 = vector.broadcast %4 : vector<1x64xf32> to vector<200x64xf32>
    %6 = arith.addf %3, %5 : vector<200x64xf32>
    %7 = math.tanh %6 : vector<200x64xf32>
    %c0_5 = arith.constant 0 : index
    %c0_6 = arith.constant 0 : index
    %8 = vector.load %arg4[%c0_5, %c0_6] : memref<64x64xf32, #tpu.memory_space<vmem>>, vector<64x64xf32>
    %cst_7 = arith.constant dense<0.000000e+00> : vector<200x64xf32>
    %9 = tpu.matmul %7, %8, %cst_7 {dimension_numbers = #tpu.dot_dimension_numbers<[1], [0], [0], [1], [0, 0, 1, 1], [], []>, precision = #tpu.contract_precision<fp32>} : vector<200x64xf32>, vector<64x64xf32>, vector<200x64xf32> -> vector<200x64xf32>
    %c0_8 = arith.constant 0 : index
    %c0_9 = arith.constant 0 : index
    %10 = vector.load %arg5[%c0_8, %c0_9] : memref<1x64xf32, #tpu.memory_space<vmem>>, vector<1x64xf32>
    %11 = vector.broadcast %10 : vector<1x64xf32> to vector<200x64xf32>
    %12 = arith.addf %9, %11 : vector<200x64xf32>
    %13 = math.tanh %12 : vector<200x64xf32>
    %c0_10 = arith.constant 0 : index
    %c0_11 = arith.constant 0 : index
    %14 = vector.load %arg6[%c0_10, %c0_11] : memref<64x16xf32, #tpu.memory_space<vmem>>, vector<64x16xf32>
    %cst_12 = arith.constant dense<0.000000e+00> : vector<200x16xf32>
    %15 = tpu.matmul %13, %14, %cst_12 {dimension_numbers = #tpu.dot_dimension_numbers<[1], [0], [0], [1], [0, 0, 1, 1], [], []>, precision = #tpu.contract_precision<fp32>} : vector<200x64xf32>, vector<64x16xf32>, vector<200x16xf32> -> vector<200x16xf32>
    %c0_13 = arith.constant 0 : index
    %c0_14 = arith.constant 0 : index
    %16 = vector.load %arg7[%c0_13, %c0_14] : memref<1x16xf32, #tpu.memory_space<vmem>>, vector<1x16xf32>
    %17 = vector.broadcast %16 : vector<1x16xf32> to vector<200x16xf32>
    %18 = arith.addf %15, %17 : vector<200x16xf32>
    %c0_15 = arith.constant 0 : index
    %c0_16 = arith.constant 0 : index
    %19 = vector.load %arg8[%c0_15, %c0_16] : memref<200x16xf32, #tpu.memory_space<vmem>>, vector<200x16xf32>
    tpu.vector_store %arg8[%c0_15, %c0_16], %18 {strides = array<i32>} : memref<200x16xf32, #tpu.memory_space<vmem>>, vector<200x16xf32>,
    return
  }
  func.func @transform_0(%arg0: i32) -> (i32, i32) {
    %c0_i32 = arith.constant 0 : i32
    %c0_i32_0 = arith.constant 0 : i32
    return %arg0, %c0_i32 : i32, i32
  }
  func.func @transform_1(%arg0: i32) -> (i32, i32) {
    %c0_i32 = arith.constant 0 : i32
    %c0_i32_0 = arith.constant 0 : i32
    %c0_i32_1 = arith.constant 0 : i32
    return %c0_i32, %c0_i32_0 : i32, i32
  }
  func.func @transform_2(%arg0: i32) -> (i32, i32) {
    %c0_i32 = arith.constant 0 : i32
    %c0_i32_0 = arith.constant 0 : i32
    %c0_i32_1 = arith.constant 0 : i32
    return %c0_i32, %c0_i32_0 : i32, i32
  }
  func.func @transform_3(%arg0: i32) -> (i32, i32) {
    %c0_i32 = arith.constant 0 : i32
    %c0_i32_0 = arith.constant 0 : i32
    %c0_i32_1 = arith.constant 0 : i32
    return %c0_i32, %c0_i32_0 : i32, i32
  }
  func.func @transform_4(%arg0: i32) -> (i32, i32) {
    %c0_i32 = arith.constant 0 : i32
    %c0_i32_0 = arith.constant 0 : i32
    %c0_i32_1 = arith.constant 0 : i32
    return %c0_i32, %c0_i32_0 : i32, i32
  }
  func.func @transform_5(%arg0: i32) -> (i32, i32) {
    %c0_i32 = arith.constant 0 : i32
    %c0_i32_0 = arith.constant 0 : i32
    %c0_i32_1 = arith.constant 0 : i32
    return %c0_i32, %c0_i32_0 : i32, i32
  }
  func.func @transform_6(%arg0: i32) -> (i32, i32) {
    %c0_i32 = arith.constant 0 : i32
    %c0_i32_0 = arith.constant 0 : i32
    %c0_i32_1 = arith.constant 0 : i32
    return %c0_i32, %c0_i32_0 : i32, i32
  }
  func.func @transform_7(%arg0: i32) -> (i32, i32) {
    %c0_i32 = arith.constant 0 : i32
    %c0_i32_0 = arith.constant 0 : i32
    return %arg0, %c0_i32 : i32, i32
  }
}

</mosaic_0001>

<llo_original>
// kernel: _mlp_forward_impl.1
$region0: #{_mlp_forward_impl.1}
  #allocation0 [shape = 'u32[]', space=smem, size = 0x4, offset = 0x4, fixed_abs, tag = 'smem constant byte address 0x4 - core index']
  #allocation1 [shape = 'u32[144,128]{1,0:T(1,128)}', space=vmem, size = 0x12000, scoped, tag = 'internal scratch']
  %s0 = inlined_call_operand.vmem [shape: f32[200,32], index: 0, kind: input, shape index: {}]
  %s1 = inlined_call_operand.vmem [shape: f32[32,64], index: 1, kind: input, shape index: {}]
  %s2 = inlined_call_operand.vmem [shape: f32[1,64], index: 2, kind: input, shape index: {}]
  %s3 = inlined_call_operand.vmem [shape: f32[64,64], index: 3, kind: input, shape index: {}]
  %s4 = inlined_call_operand.vmem [shape: f32[1,64], index: 4, kind: input, shape index: {}]
  %s5 = inlined_call_operand.vmem [shape: f32[64,16], index: 5, kind: input, shape index: {}]
  %s6 = inlined_call_operand.vmem [shape: f32[1,16], index: 6, kind: input, shape index: {}]
  %s7 = inlined_call_operand.vmem [shape: f32[200,16], index: 7, kind: output, shape index: {}]
  %s8 = sld [smem:[#allocation0]]
  $region38: #{_mlp_forward_impl.1} parent=0
    _
  %s10 = ssub.s32 1, %s8
  %s11 = scalar_select 0, %s10, %s8
  // Predicated region
  $region2: #{_mlp_forward_impl.1} parent=0 // pred_check
    _
  $region3: #{_mlp_forward_impl.1} parent=0 // pred_check_branch
    %13 = sbr.rel (0) target = $region5
  $region4: #{_mlp_forward_impl.1} parent=0 // pred_region
    _
  $region5: #{_mlp_forward_impl.1} parent=0 // pred_fallthru
    _
  // Predicated region
  $region6: #{_mlp_forward_impl.1} parent=0 // pred_check
    _
  $region7: #{_mlp_forward_impl.1} parent=0 // pred_check_branch
    %15 = sbr.rel (0) target = $region9
  $region8: #{_mlp_forward_impl.1} parent=0 // pred_region
    _
  $region9: #{_mlp_forward_impl.1} parent=0 // pred_fallthru
    _
  // Predicated region
  $region10: #{_mlp_forward_impl.1} parent=0 // pred_check
    _
  $region11: #{_mlp_forward_impl.1} parent=0 // pred_check_branch
    %17 = sbr.rel (0) target = $region13
  $region12: #{_mlp_forward_impl.1} parent=0 // pred_region
    _
  $region13: #{_mlp_forward_impl.1} parent=0 // pred_fallthru
    _
  // Predicated region
  $region14: #{_mlp_forward_impl.1} parent=0 // pred_check
    _
  $region15: #{_mlp_forward_impl.1} parent=0 // pred_check_branch
    %19 = sbr.rel (0) target = $region17
  $region16: #{_mlp_forward_impl.1} parent=0 // pred_region
    _
  $region17: #{_mlp_forward_impl.1} parent=0 // pred_fallthru
    _
  // Predicated region
  $region18: #{_mlp_forward_impl.1} parent=0 // pred_check
    _
  $region19: #{_mlp_forward_impl.1} parent=0 // pred_check_branch
    %21 = sbr.rel (0) target = $region21
  $region20: #{_mlp_forward_impl.1} parent=0 // pred_region
    _
  $region21: #{_mlp_forward_impl.1} parent=0 // pred_fallthru
    _
  // Predicated region
  $region22: #{_mlp_forward_impl.1} parent=0 // pred_check
    _
  $region23: #{_mlp_forward_impl.1} parent=0 // pred_check_branch
    %23 = sbr.rel (0) target = $region25
  $region24: #{_mlp_forward_impl.1} parent=0 // pred_region
    _
  $region25: #{_mlp_forward_impl.1} parent=0 // pred_fallthru
    _
  // Predicated region
  $region26: #{_mlp_forward_impl.1} parent=0 // pred_check
    _
  $region27: #{_mlp_forward_impl.1} parent=0 // pred_check_branch
    %25 = sbr.rel (0) target = $region29
  $region28: #{_mlp_forward_impl.1} parent=0 // pred_region
    _
  $region29: #{_mlp_forward_impl.1} parent=0 // pred_fallthru
    _
  %v26 = vld [vmem:[%s0] sm:$0xff]
  %v27 = vld [vmem:[%s0 + $0x8] sm:$0xff]
  %v28 = vld [vmem:[%s0 + $0x10] sm:$0xff]
  %v29 = vld [vmem:[%s0 + $0x18] sm:$0xff]
  %v30 = vld [vmem:[%s0 + $0x20] sm:$0xff]
  %v31 = vld [vmem:[%s0 + $0x28] sm:$0xff]
  %v32 = vld [vmem:[%s0 + $0x30] sm:$0xff]
  %v33 = vld [vmem:[%s0 + $0x38] sm:$0xff]
  %v34 = vld [vmem:[%s0 + $0x40] sm:$0xff]
  %v35 = vld [vmem:[%s0 + $0x48] sm:$0xff]
  %v36 = vld [vmem:[%s0 + $0x50] sm:$0xff]
  %v37 = vld [vmem:[%s0 + $0x58] sm:$0xff]
  %v38 = vld [vmem:[%s0 + $0x60] sm:$0xff]
  %v39 = vld [vmem:[%s0 + $0x68] sm:$0xff]
  %v40 = vld [vmem:[%s0 + $0x70] sm:$0xff]
  %v41 = vld [vmem:[%s0 + $0x78] sm:$0xff]
  %v42 = vld [vmem:[%s0 + $0x80] sm:$0xff]
  %v43 = vld [vmem:[%s0 + $0x88] sm:$0xff]
  %v44 = vld [vmem:[%s0 + $0x90] sm:$0xff]
  %v45 = vld [vmem:[%s0 + $0x98] sm:$0xff]
  %v46 = vld [vmem:[%s0 + $0xa0] sm:$0xff]
  %v47 = vld [vmem:[%s0 + $0xa8] sm:$0xff]
  %v48 = vld [vmem:[%s0 + $0xb0] sm:$0xff]
  %v49 = vld [vmem:[%s0 + $0xb8] sm:$0xff]
  %v50 = vld [vmem:[%s0 + $0xc0] sm:$0xff]
  %v51 = vtanh.pop %v26
  %v52 = vtanh.pop %v27
  %v53 = vtanh.pop %v28
  %v54 = vtanh.pop %v29
  %v55 = vtanh.pop %v30
  %v56 = vtanh.pop %v31
  %v57 = vtanh.pop %v32
  %v58 = vtanh.pop %v33
  %v59 = vtanh.pop %v34
  %v60 = vtanh.pop %v35
  %v61 = vtanh.pop %v36
  %v62 = vtanh.pop %v37
  %v63 = vtanh.pop %v38
  %v64 = vtanh.pop %v39
  %v65 = vtanh.pop %v40
  %v66 = vtanh.pop %v41
  %v67 = vtanh.pop %v42
  %v68 = vtanh.pop %v43
  %v69 = vtanh.pop %v44
  %v70 = vtanh.pop %v45
  %v71 = vtanh.pop %v46
  %v72 = vtanh.pop %v47
  %v73 = vtanh.pop %v48
  %v74 = vtanh.pop %v49
  %v75 = vtanh.pop %v50
  %v76 = vld [vmem:[%s1] sm:$0xff]
  %v77 = vld [vmem:[%s1 + $0x8] sm:$0xff]
  %v78 = vld [vmem:[%s1 + $0x10] sm:$0xff]
  %v79 = vld [vmem:[%s1 + $0x18] sm:$0xff]
  %v80 = vld [vmem:[%s2] sm:$0x1]
  %v82 = vlaneseq
  %v83 = vshrl.u32 %v82, 7
  %v84 = vsub.s32 0, %v83
  %v85 = vrot.slane %v80, %v84
  %vm87 = vcmask 261120
  %v89 = vsel %vm87, %v51, 0
  %v92 = vsel %vm87, %v52, 0
  %v95 = vsel %vm87, %v53, 0
  %v98 = vsel %vm87, %v54, 0
  %v101 = vsel %vm87, %v55, 0
  %v104 = vsel %vm87, %v56, 0
  %v107 = vsel %vm87, %v57, 0
  %v110 = vsel %vm87, %v58, 0
  %v113 = vsel %vm87, %v59, 0
  %v116 = vsel %vm87, %v60, 0
  %v119 = vsel %vm87, %v61, 0
  %v122 = vsel %vm87, %v62, 0
  %v125 = vsel %vm87, %v63, 0
  %v128 = vsel %vm87, %v64, 0
  %v131 = vsel %vm87, %v65, 0
  %v134 = vsel %vm87, %v66, 0
  %v137 = vsel %vm87, %v67, 0
  %v140 = vsel %vm87, %v68, 0
  %v143 = vsel %vm87, %v69, 0
  %v146 = vsel %vm87, %v70, 0
  %v149 = vsel %vm87, %v71, 0
  %v152 = vsel %vm87, %v72, 0
  %v155 = vsel %vm87, %v73, 0
  %v158 = vsel %vm87, %v74, 0
  %v161 = vsel %vm87, %v75, 0
  %163 = vmatprep.subr.mxu0 0.0
  %v164 = vand.u32 %v76, 4294901760
  %165 = vmatpush1.msra.mxu0 %v164
  %166 = vmatprep.subr.mxu0 0.0
  %v167 = vand.u32 %v77, 4294901760
  %168 = vmatpush1.msra.mxu0 %v167
  %169 = vmatprep.subr.mxu0 0.0
  %v170 = vand.u32 %v78, 4294901760
  %171 = vmatpush1.msra.mxu0 %v170
  %172 = vmatprep.subr.mxu0 0.0
  %v173 = vand.u32 %v79, 4294901760
  %174 = vmatpush1.msra.mxu0 %v173
  %175 = vmatprep.subr.mxu0 0.0
  %176 = vmatpush1.msra.mxu0 0.0
  %177 = vmatprep.subr.mxu0 0.0
  %178 = vmatpush1.msra.mxu0 0.0
  %179 = vmatprep.subr.mxu0 0.0
  %180 = vmatpush1.msra.mxu0 0.0
  %181 = vmatprep.subr.mxu0 0.0
  %182 = vmatpush1.msra.mxu0 0.0
  %183 = vmatprep.subr.mxu0 0.0
  %184 = vmatpush1.msra.mxu0 0.0
  %185 = vmatprep.subr.mxu0 0.0
  %186 = vmatpush1.msra.mxu0 0.0
  %187 = vmatprep.subr.mxu0 0.0
  %188 = vmatpush1.msra.mxu0 0.0
  %189 = vmatprep.subr.mxu0 0.0
  %190 = vmatpush1.msra.mxu0 0.0
  %191 = vmatprep.subr.mxu0 0.0
  %192 = vmatpush1.msra.mxu0 0.0
  %193 = vmatprep.subr.mxu0 0.0
  %194 = vmatpush1.msra.mxu0 0.0
  %195 = vmatprep.subr.mxu0 0.0
  %196 = vmatpush1.msra.mxu0 0.0
  %197 = vmatprep.subr.mxu0 0.0
  %198 = vmatpush1.msra.mxu0 0.0
  %199 = vmatprep.subr.mxu0 0.0
  %200 = vmatpush1.msra.mxu0 0.0
  %201 = vmatprep.subr.mxu0 0.0
  %202 = vmatpush1.msra.mxu0 0.0
  %203 = vmatprep.subr.mxu0 0.0
  %204 = vmatpush1.msra.mxu0 0.0
  %205 = vmatprep.subr.mxu0 0.0
  %206 = vmatpush1.msra.mxu0 0.0
  %207 = vmatprep.subr.mxu0 0.0
  %208 = vmatpush1.msra.mxu0 0.0
  %209 = vmatprep.subr.mxu0 0.0
  %210 = vmatpush1.msra.mxu0 0.0
  %211 = vmatprep.subr.mxu0 0.0
  %212 = vmatpush1.msra.mxu0 0.0
  %213 = vmatprep.subr.mxu0 0.0
  %214 = vmatpush1.msra.mxu0 0.0
  %215 = vmatprep.subr.mxu0 0.0
  %216 = vmatpush1.msra.mxu0 0.0
  %217 = vmatprep.subr.mxu0 0.0
  %218 = vmatpush1.msra.mxu0 0.0
  %219 = vmatprep.subr.mxu0 0.0
  %220 = vmatpush1.msra.mxu0 0.0
  %221 = vmatprep.subr.mxu0 0.0
  %222 = vmatpush1.msra.mxu0 0.0
  %223 = vmatprep.subr.mxu0 0.0
  %224 = vmatpush1.msra.mxu0 0.0
  %225 = vmatprep.subr.mxu0 0.0
  %226 = vmatpush1.msra.mxu0 0.0
  %227 = vmatprep.subr.mxu0 0.0
  %228 = vmatpush1.msra.mxu0 0.0
  %229 = vmatprep.subr.mxu0 0.0
  %230 = vmatpush1.msra.mxu0 0.0
  %231 = vmatprep.mubr.f32.mxu0 0.0
  %v232 = vand.u32 %v89, 4294901760
  %v233 = vsub.f32 %v89, %v232
  %v234 = vand.u32 %v233, 4294901760
  %v235 = vsub.f32 %v233, %v234
  %v236 = vand.u32 %v235, 4294901760
  %237 = vmatmul.mubr.f32.gmra.mrb[0].mxu0 %v236
  %v238 = vpop.f32.mrb[0].mxu0
  %v239 = vadd.f32 %v85, %v238
  %v240 = vpop.f32.mrb[0].mxu0
  %241 = vmatprep.mubr.f32.mxu0 0.0
  %v242 = vand.u32 %v92, 4294901760
  %v243 = vsub.f32 %v92, %v242
  %v244 = vand.u32 %v243, 4294901760
  %v245 = vsub.f32 %v243, %v244
  %v246 = vand.u32 %v245, 4294901760
  %247 = vmatmul.mubr.f32.gmra.mrb[0].mxu0 %v246
  %v248 = vpop.f32.mrb[0].mxu0
  %v249 = vadd.f32 %v85, %v248
  %v250 = vpop.f32.mrb[0].mxu0
  %251 = vmatprep.mubr.f32.mxu0 0.0
  %v252 = vand.u32 %v95, 4294901760
  %v253 = vsub.f32 %v95, %v252
  %v254 = vand.u32 %v253, 4294901760
  %v255 = vsub.f32 %v253, %v254
  %v256 = vand.u32 %v255, 4294901760
  %257 = vmatmul.mubr.f32.gmra.mrb[0].mxu0 %v256
  %v258 = vpop.f32.mrb[0].mxu0
  %v259 = vadd.f32 %v85, %v258
  %v260 = vpop.f32.mrb[0].mxu0
  %261 = vmatprep.mubr.f32.mxu0 0.0
  %v262 = vand.u32 %v98, 4294901760
  %v263 = vsub.f32 %v98, %v262
  %v264 = vand.u32 %v263, 4294901760
  %v265 = vsub.f32 %v263, %v264
  %v266 = vand.u32 %v265, 4294901760
  %267 = vmatmul.mubr.f32.gmra.mrb[0].mxu0 %v266
  %v268 = vpop.f32.mrb[0].mxu0
  %v269 = vadd.f32 %v85, %v268
  %v270 = vpop.f32.mrb[0].mxu0
  %271 = vmatprep.mubr.f32.mxu0 0.0
  %v272 = vand.u32 %v101, 4294901760
  %v273 = vsub.f32 %v101, %v272
  %v274 = vand.u32 %v273, 4294901760
  %v275 = vsub.f32 %v273, %v274
  %v276 = vand.u32 %v275, 4294901760
  %277 = vmatmul.mubr.f32.gmra.mrb[0].mxu0 %v276
  %v278 = vpop.f32.mrb[0].mxu0
  %v279 = vadd.f32 %v85, %v278
  %v280 = vpop.f32.mrb[0].mxu0
  %281 = vmatprep.mubr.f32.mxu0 0.0
  %v282 = vand.u32 %v104, 4294901760
  %v283 = vsub.f32 %v104, %v282
  %v284 = vand.u32 %v283, 4294901760
  %v285 = vsub.f32 %v283, %v284
  %v286 = vand.u32 %v285, 4294901760
  %287 = vmatmul.mubr.f32.gmra.mrb[0].mxu0 %v286
  %v288 = vpop.f32.mrb[0].mxu0
  %v289 = vadd.f32 %v85, %v288
  %v290 = vpop.f32.mrb[0].mxu0
  %291 = vmatprep.mubr.f32.mxu0 0.0
  %v292 = vand.u32 %v107, 4294901760
  %v293 = vsub.f32 %v107, %v292
  %v294 = vand.u32 %v293, 4294901760
  %v295 = vsub.f32 %v293, %v294
  %v296 = vand.u32 %v295, 4294901760
  %297 = vmatmul.mubr.f32.gmra.mrb[0].mxu0 %v296
  %v298 = vpop.f32.mrb[0].mxu0
  %v299 = vadd.f32 %v85, %v298
  %v300 = vpop.f32.mrb[0].mxu0
  %301 = vmatprep.mubr.f32.mxu0 0.0
  %v302 = vand.u32 %v110, 4294901760
  %v303 = vsub.f32 %v110, %v302
  %v304 = vand.u32 %v303, 4294901760
  %v305 = vsub.f32 %v303, %v304
  %v306 = vand.u32 %v305, 4294901760
  %307 = vmatmul.mubr.f32.gmra.mrb[0].mxu0 %v306
  %v308 = vpop.f32.mrb[0].mxu0
  %v309 = vadd.f32 %v85, %v308
  %v310 = vpop.f32.mrb[0].mxu0
  %311 = vmatprep.mubr.f32.mxu0 0.0
  %v312 = vand.u32 %v113, 4294901760
  %v313 = vsub.f32 %v113, %v312
  %v314 = vand.u32 %v313, 4294901760
  %v315 = vsub.f32 %v313, %v314
  %v316 = vand.u32 %v315, 4294901760
  %317 = vmatmul.mubr.f32.gmra.mrb[0].mxu0 %v316
  %v318 = vpop.f32.mrb[0].mxu0
  %v319 = vadd.f32 %v85, %v318
  %v320 = vpop.f32.mrb[0].mxu0
  %321 = vmatprep.mubr.f32.mxu0 0.0
  %v322 = vand.u32 %v116, 4294901760
  %v323 = vsub.f32 %v116, %v322
  %v324 = vand.u32 %v323, 4294901760
  %v325 = vsub.f32 %v323, %v324
  %v326 = vand.u32 %v325, 4294901760
  %327 = vmatmul.mubr.f32.gmra.mrb[0].mxu0 %v326
  %v328 = vpop.f32.mrb[0].mxu0
  %v329 = vadd.f32 %v85, %v328
  %v330 = vpop.f32.mrb[0].mxu0
  %331 = vmatprep.mubr.f32.mxu0 0.0
  %v332 = vand.u32 %v119, 4294901760
  %v333 = vsub.f32 %v119, %v332
  %v334 = vand.u32 %v333, 4294901760
  %v335 = vsub.f32 %v333, %v334
  %v336 = vand.u32 %v335, 4294901760
  %337 = vmatmul.mubr.f32.gmra.mrb[0].mxu0 %v336
  %v338 = vpop.f32.mrb[0].mxu0
  %v339 = vadd.f32 %v85, %v338
  %v340 = vpop.f32.mrb[0].mxu0
  %341 = vmatprep.mubr.f32.mxu0 0.0
  %v342 = vand.u32 %v122, 4294901760
  %v343 = vsub.f32 %v122, %v342
  %v344 = vand.u32 %v343, 4294901760
  %v345 = vsub.f32 %v343, %v344
  %v346 = vand.u32 %v345, 4294901760
  %347 = vmatmul.mubr.f32.gmra.mrb[0].mxu0 %v346
  %v348 = vpop.f32.mrb[0].mxu0
  %v349 = vadd.f32 %v85, %v348
  %v350 = vpop.f32.mrb[0].mxu0
  %351 = vmatprep.mubr.f32.mxu0 0.0
  %v352 = vand.u32 %v125, 4294901760
  %v353 = vsub.f32 %v125, %v352
  %v354 = vand.u32 %v353, 4294901760
  %v355 = vsub.f32 %v353, %v354
  %v356 = vand.u32 %v355, 4294901760
  %357 = vmatmul.mubr.f32.gmra.mrb[0].mxu0 %v356
  %v358 = vpop.f32.mrb[0].mxu0
  %v359 = vadd.f32 %v85, %v358
  %v360 = vpop.f32.mrb[0].mxu0
  %361 = vmatprep.mubr.f32.mxu0 0.0
  %v362 = vand.u32 %v128, 4294901760
  %v363 = vsub.f32 %v128, %v362
  %v364 = vand.u32 %v363, 4294901760
  %v365 = vsub.f32 %v363, %v364
  %v366 = vand.u32 %v365, 4294901760
  %367 = vmatmul.mubr.f32.gmra.mrb[0].mxu0 %v366
  %v368 = vpop.f32.mrb[0].mxu0
  %v369 = vadd.f32 %v85, %v368
  %v370 = vpop.f32.mrb[0].mxu0
  %371 = vmatprep.mubr.f32.mxu0 0.0
  %v372 = vand.u32 %v131, 4294901760
  %v373 = vsub.f32 %v131, %v372
  %v374 = vand.u32 %v373, 4294901760
  %v375 = vsub.f32 %v373, %v374
  %v376 = vand.u32 %v375, 4294901760
  %377 = vmatmul.mubr.f32.gmra.mrb[0].mxu0 %v376
  %v378 = vpop.f32.mrb[0].mxu0
  %v379 = vadd.f32 %v85, %v378
  %v380 = vpop.f32.mrb[0].mxu0
  %381 = vmatprep.mubr.f32.mxu0 0.0
  %v382 = vand.u32 %v134, 4294901760
  %v383 = vsub.f32 %v134, %v382
  %v384 = vand.u32 %v383, 4294901760
  %v385 = vsub.f32 %v383, %v384
  %v386 = vand.u32 %v385, 4294901760
  %387 = vmatmul.mubr.f32.gmra.mrb[0].mxu0 %v386
  %v388 = vpop.f32.mrb[0].mxu0
  %v389 = vadd.f32 %v85, %v388
  %v390 = vpop.f32.mrb[0].mxu0
  %391 = vmatprep.mubr.f32.mxu0 0.0
  %v392 = vand.u32 %v137, 4294901760
  %v393 = vsub.f32 %v137, %v392
  %v394 = vand.u32 %v393, 4294901760
  %v395 = vsub.f32 %v393, %v394
  %v396 = vand.u32 %v395, 4294901760
  %397 = vmatmul.mubr.f32.gmra.mrb[0].mxu0 %v396
  %v398 = vpop.f32.mrb[0].mxu0
  %v399 = vadd.f32 %v85, %v398
  %v400 = vpop.f32.mrb[0].mxu0
  %401 = vmatprep.mubr.f32.mxu0 0.0
  %v402 = vand.u32 %v140, 4294901760
  %v403 = vsub.f32 %v140, %v402
  %v404 = vand.u32 %v403, 4294901760
  %v405 = vsub.f32 %v403, %v404
  %v406 = vand.u32 %v405, 4294901760
  %407 = vmatmul.mubr.f32.gmra.mrb[0].mxu0 %v406
  %v408 = vpop.f32.mrb[0].mxu0
  %v409 = vadd.f32 %v85, %v408
  %v410 = vpop.f32.mrb[0].mxu0
  %411 = vmatprep.mubr.f32.mxu0 0.0
  %v412 = vand.u32 %v143, 4294901760
  %v413 = vsub.f32 %v143, %v412
  %v414 = vand.u32 %v413, 4294901760
  %v415 = vsub.f32 %v413, %v414
  %v416 = vand.u32 %v415, 4294901760
  %417 = vmatmul.mubr.f32.gmra.mrb[0].mxu0 %v416
  %v418 = vpop.f32.mrb[0].mxu0
  %v419 = vadd.f32 %v85, %v418
  %v420 = vpop.f32.mrb[0].mxu0
  %421 = vmatprep.mubr.f32.mxu0 0.0
  %v422 = vand.u32 %v146, 4294901760
  %v423 = vsub.f32 %v146, %v422
  %v424 = vand.u32 %v423, 4294901760
  %v425 = vsub.f32 %v423, %v424
  %v426 = vand.u32 %v425, 4294901760
  %427 = vmatmul.mubr.f32.gmra.mrb[0].mxu0 %v426
  %v428 = vpop.f32.mrb[0].mxu0
  %v429 = vadd.f32 %v85, %v428
  %v430 = vpop.f32.mrb[0].mxu0
  %431 = vmatprep.mubr.f32.mxu0 0.0
  %v432 = vand.u32 %v149, 4294901760
  %v433 = vsub.f32 %v149, %v432
  %v434 = vand.u32 %v433, 4294901760
  %v435 = vsub.f32 %v433, %v434
  %v436 = vand.u32 %v435, 4294901760
  %437 = vmatmul.mubr.f32.gmra.mrb[0].mxu0 %v436
  %v438 = vpop.f32.mrb[0].mxu0
  %v439 = vadd.f32 %v85, %v438
  %v440 = vpop.f32.mrb[0].mxu0
  %441 = vmatprep.mubr.f32.mxu0 0.0
  %v442 = vand.u32 %v152, 4294901760
  %v443 = vsub.f32 %v152, %v442
  %v444 = vand.u32 %v443, 4294901760
  %v445 = vsub.f32 %v443, %v444
  %v446 = vand.u32 %v445, 4294901760
  %447 = vmatmul.mubr.f32.gmra.mrb[0].mxu0 %v446
  %v448 = vpop.f32.mrb[0].mxu0
  %v449 = vadd.f32 %v85, %v448
  %v450 = vpop.f32.mrb[0].mxu0
  %451 = vmatprep.mubr.f32.mxu0 0.0
  %v452 = vand.u32 %v155, 4294901760
  %v453 = vsub.f32 %v155, %v452
  %v454 = vand.u32 %v453, 4294901760
  %v455 = vsub.f32 %v453, %v454
  %v456 = vand.u32 %v455, 4294901760
  %457 = vmatmul.mubr.f32.gmra.mrb[0].mxu0 %v456
  %v458 = vpop.f32.mrb[0].mxu0
  %v459 = vadd.f32 %v85, %v458
  %v460 = vpop.f32.mrb[0].mxu0
  %461 = vmatprep.mubr.f32.mxu0 0.0
  %v462 = vand.u32 %v158, 4294901760
  %v463 = vsub.f32 %v158, %v462
  %v464 = vand.u32 %v463, 4294901760
  %v465 = vsub.f32 %v463, %v464
  %v466 = vand.u32 %v465, 4294901760
  %467 = vmatmul.mubr.f32.gmra.mrb[0].mxu0 %v466
  %v468 = vpop.f32.mrb[0].mxu0
  %v469 = vadd.f32 %v85, %v468
  %v470 = vpop.f32.mrb[0].mxu0
  %471 = vmatprep.mubr.f32.mxu0 0.0
  %v472 = vand.u32 %v161, 4294901760
  %v473 = vsub.f32 %v161, %v472
  %v474 = vand.u32 %v473, 4294901760
  %v475 = vsub.f32 %v473, %v474
  %v476 = vand.u32 %v475, 4294901760
  %477 = vmatmul.mubr.f32.gmra.mrb[0].mxu0 %v476
  %v478 = vpop.f32.mrb[0].mxu0
  %v479 = vadd.f32 %v85, %v478
  %v480 = vpop.f32.mrb[0].mxu0
  %481 = vdwg.mxu0
  %482 = vmatprep.subr.mxu0 0.0
  %v483 = vand.u32 %v76, 4294901760
  %v484 = vsub.f32 %v76, %v483
  %v485 = vand.u32 %v484, 4294901760
  %v486 = vsub.f32 %v484, %v485
  %v487 = vand.u32 %v486, 4294901760
  %488 = vmatpush1.msra.mxu0 %v487
  %489 = vmatprep.subr.mxu0 0.0
  %v490 = vand.u32 %v77, 4294901760
  %v491 = vsub.f32 %v77, %v490
  %v492 = vand.u32 %v491, 4294901760
  %v493 = vsub.f32 %v491, %v492
  %v494 = vand.u32 %v493, 4294901760
  %495 = vmatpush1.msra.mxu0 %v494
  %496 = vmatprep.subr.mxu0 0.0
  %v497 = vand.u32 %v78, 4294901760
  %v498 = vsub.f32 %v78, %v497
  %v499 = vand.u32 %v498, 4294901760
  %v500 = vsub.f32 %v498, %v499
  %v501 = vand.u32 %v500, 4294901760
  %502 = vmatpush1.msra.mxu0 %v501
  %503 = vmatprep.subr.mxu0 0.0
  %v504 = vand.u32 %v79, 4294901760
  %v505 = vsub.f32 %v79, %v504
  %v506 = vand.u32 %v505, 4294901760
  %v507 = vsub.f32 %v505, %v506
  %v508 = vand.u32 %v507, 4294901760
  %509 = vmatpush1.msra.mxu0 %v508
  %510 = vmatprep.subr.mxu0 0.0
  %511 = vmatpush1.msra.mxu0 0.0
  %512 = vmatprep.subr.mxu0 0.0
  %513 = vmatpush1.msra.mxu0 0.0
  %514 = vmatprep.subr.mxu0 0.0
  %515 = vmatpush1.msra.mxu0 0.0
  %516 = vmatprep.subr.mxu0 0.0
  %517 = vmatpush1.msra.mxu0 0.0
  %518 = vmatprep.subr.mxu0 0.0
  %519 = vmatpush1.msra.mxu0 0.0
  %520 = vmatprep.subr.mxu0 0.0
  %521 = vmatpush1.msra.mxu0 0.0
  %522 = vmatprep.subr.mxu0 0.0
  %523 = vmatpush1.msra.mxu0 0.0
  %524 = vmatprep.subr.mxu0 0.0
  %525 = vmatpush1.msra.mxu0 0.0
  %526 = vmatprep.subr.mxu0 0.0
  %527 = vmatpush1.msra.mxu0 0.0
  %528 = vmatprep.subr.mxu0 0.0
  %529 = vmatpush1.msra.mxu0 0.0
  %530 = vmatprep.subr.mxu0 0.0
  %531 = vmatpush1.msra.mxu0 0.0
  %532 = vmatprep.subr.mxu0 0.0
  %533 = vmatpush1.msra.mxu0 0.0
  %534 = vmatprep.subr.mxu0 0.0
  %535 = vmatpush1.msra.mxu0 0.0
  %536 = vmatprep.subr.mxu0 0.0
  %537 = vmatpush1.msra.mxu0 0.0
  %538 = vmatprep.subr.mxu0 0.0
  %539 = vmatpush1.msra.mxu0 0.0
  %540 = vmatprep.subr.mxu0 0.0
  %541 = vmatpush1.msra.mxu0 0.0
  %542 = vmatprep.subr.mxu0 0.0
  %543 = vmatpush1.msra.mxu0 0.0
  %544 = vmatprep.subr.mxu0 0.0
  %545 = vmatpush1.msra.mxu0 0.0
  %546 = vmatprep.subr.mxu0 0.0
  %547 = vmatpush1.msra.mxu0 0.0
  %548 = vmatprep.subr.mxu0 0.0
  %549 = vmatpush1.msra.mxu0 0.0
  %550 = vmatprep.subr.mxu0 0.0
  %551 = vmatpush1.msra.mxu0 0.0
  %552 = vmatprep.subr.mxu0 0.0
  %553 = vmatpush1.msra.mxu0 0.0
  %554 = vmatprep.subr.mxu0 0.0
  %555 = vmatpush1.msra.mxu0 0.0
  %556 = vmatprep.subr.mxu0 0.0
  %557 = vmatpush1.msra.mxu0 0.0
  %558 = vmatprep.subr.mxu0 0.0
  %559 = vmatpush1.msra.mxu0 0.0
  %560 = vmatprep.subr.mxu0 0.0
  %561 = vmatpush1.msra.mxu0 0.0
  %562 = vmatprep.subr.mxu0 0.0
  %563 = vmatpush1.msra.mxu0 0.0
  %564 = vmatprep.subr.mxu0 0.0
  %565 = vmatpush1.msra.mxu0 0.0
  %566 = vmatprep.mubr.f32.mxu0 0.0
  %v567 = vand.u32 %v89, 4294901760
  %568 = vmatmul.mubr.f32.gmra.mrb[0].mxu0 %v567
  %v569 = vpop.f32.mrb[0].mxu0
  %v570 = vadd.f32 %v239, %v569
  %v571 = vpop.f32.mrb[0].mxu0
  %572 = vmatprep.mubr.f32.mxu0 0.0
  %v573 = vand.u32 %v92, 4294901760
  %574 = vmatmul.mubr.f32.gmra.mrb[0].mxu0 %v573
  %v575 = vpop.f32.mrb[0].mxu0
  %v576 = vadd.f32 %v249, %v575
  %v577 = vpop.f32.mrb[0].mxu0
  %578 = vmatprep.mubr.f32.mxu0 0.0
  %v579 = vand.u32 %v95, 4294901760
  %580 = vmatmul.mubr.f32.gmra.mrb[0].mxu0 %v579
  %v581 = vpop.f32.mrb[0].mxu0
  %v582 = vadd.f32 %v259, %v581
  %v583 = vpop.f32.mrb[0].mxu0
  %584 = vmatprep.mubr.f32.mxu0 0.0
  %v585 = vand.u32 %v98, 4294901760
  %586 = vmatmul.mubr.f32.gmra.mrb[0].mxu0 %v585
  %v587 = vpop.f32.mrb[0].mxu0
  %v588 = vadd.f32 %v269, %v587
  %v589 = vpop.f32.mrb[0].mxu0
  %590 = vmatprep.mubr.f32.mxu0 0.0
  %v591 = vand.u32 %v101, 4294901760
  %592 = vmatmul.mubr.f32.gmra.mrb[0].mxu0 %v591
  %v593 = vpop.f32.mrb[0].mxu0
  %v594 = vadd.f32 %v279, %v593
  %v595 = vpop.f32.mrb[0].mxu0
  %596 = vmatprep.mubr.f32.mxu0 0.0
  %v597 = vand.u32 %v104, 4294901760
  %598 = vmatmul.mubr.f32.gmra.mrb[0].mxu0 %v597
  %v599 = vpop.f32.mrb[0].mxu0
  %v600 = vadd.f32 %v289, %v599
  %v601 = vpop.f32.mrb[0].mxu0
  %602 = vmatprep.mubr.f32.mxu0 0.0
  %v603 = vand.u32 %v107, 4294901760
  %604 = vmatmul.mubr.f32.gmra.mrb[0].mxu0 %v603
  %v605 = vpop.f32.mrb[0].mxu0
  %v606 = vadd.f32 %v299, %v605
  %v607 = vpop.f32.mrb[0].mxu0
  %608 = vmatprep.mubr.f32.mxu0 0.0
  %v609 = vand.u32 %v110, 4294901760
  %610 = vmatmul.mubr.f32.gmra.mrb[0].mxu0 %v609
  %v611 = vpop.f32.mrb[0].mxu0
  %v612 = vadd.f32 %v309, %v611
  %v613 = vpop.f32.mrb[0].mxu0
  %614 = vmatprep.mubr.f32.mxu0 0.0
  %v615 = vand.u32 %v113, 4294901760
  %616 = vmatmul.mubr.f32.gmra.mrb[0].mxu0 %v615
  %v617 = vpop.f32.mrb[0].mxu0
  %v618 = vadd.f32 %v319, %v617
  %v619 = vpop.f32.mrb[0].mxu0
  %620 = vmatprep.mubr.f32.mxu0 0.0
  %v621 = vand.u32 %v116, 4294901760
  %622 = vmatmul.mubr.f32.gmra.mrb[0].mxu0 %v621
  %v623 = vpop.f32.mrb[0].mxu0
  %v624 = vadd.f32 %v329, %v623
  %v625 = vpop.f32.mrb[0].mxu0
  %626 = vmatprep.mubr.f32.mxu0 0.0
  %v627 = vand.u32 %v119, 4294901760
  %628 = vmatmul.mubr.f32.gmra.mrb[0].mxu0 %v627
  %v629 = vpop.f32.mrb[0].mxu0
  %v630 = vadd.f32 %v339, %v629
  %v631 = vpop.f32.mrb[0].mxu0
  %632 = vmatprep.mubr.f32.mxu0 0.0
  %v633 = vand.u32 %v122, 4294901760
  %634 = vmatmul.mubr.f32.gmra.mrb[0].mxu0 %v633
  %v635 = vpop.f32.mrb[0].mxu0
  %v636 = vadd.f32 %v349, %v635
  %v637 = vpop.f32.mrb[0].mxu0
  %638 = vmatprep.mubr.f32.mxu0 0.0
  %v639 = vand.u32 %v125, 4294901760
  %640 = vmatmul.mubr.f32.gmra.mrb[0].mxu0 %v639
  %v641 = vpop.f32.mrb[0].mxu0
  %v642 = vadd.f32 %v359, %v641
  %v643 = vpop.f32.mrb[0].mxu0
  %644 = vmatprep.mubr.f32.mxu0 0.0
  %v645 = vand.u32 %v128, 4294901760
  %646 = vmatmul.mubr.f32.gmra.mrb[0].mxu0 %v645
  %v647 = vpop.f32.mrb[0].mxu0
  %v648 = vadd.f32 %v369, %v647
  %v649 = vpop.f32.mrb[0].mxu0
  %650 = vmatprep.mubr.f32.mxu0 0.0
  %v651 = vand.u32 %v131, 4294901760
  %652 = vmatmul.mubr.f32.gmra.mrb[0].mxu0 %v651
  %v653 = vpop.f32.mrb[0].mxu0
  %v654 = vadd.f32 %v379, %v653
  %v655 = vpop.f32.mrb[0].mxu0
  %656 = vmatprep.mubr.f32.mxu0 0.0
  %v657 = vand.u32 %v134, 4294901760
  %658 = vmatmul.mubr.f32.gmra.mrb[0].mxu0 %v657
  %v659 = vpop.f32.mrb[0].mxu0
  %v660 = vadd.f32 %v389, %v659
  %v661 = vpop.f32.mrb[0].mxu0
  %662 = vmatprep.mubr.f32.mxu0 0.0
  %v663 = vand.u32 %v137, 4294901760
  %664 = vmatmul.mubr.f32.gmra.mrb[0].mxu0 %v663
  %v665 = vpop.f32.mrb[0].mxu0
  %v666 = vadd.f32 %v399, %v665
  %v667 = vpop.f32.mrb[0].mxu0
  %668 = vmatprep.mubr.f32.mxu0 0.0
  %v669 = vand.u32 %v140, 4294901760
  %670 = vmatmul.mubr.f32.gmra.mrb[0].mxu0 %v669
  %v671 = vpop.f32.mrb[0].mxu0
  %v672 = vadd.f32 %v409, %v671
  %v673 = vpop.f32.mrb[0].mxu0
  %674 = vmatprep.mubr.f32.mxu0 0.0
  %v675 = vand.u32 %v143, 4294901760
  %676 = vmatmul.mubr.f32.gmra.mrb[0].mxu0 %v675
  %v677 = vpop.f32.mrb[0].mxu0
  %v678 = vadd.f32 %v419, %v677
  %v679 = vpop.f32.mrb[0].mxu0
  %680 = vmatprep.mubr.f32.mxu0 0.0
  %v681 = vand.u32 %v146, 4294901760
  %682 = vmatmul.mubr.f32.gmra.mrb[0].mxu0 %v681
  %v683 = vpop.f32.mrb[0].mxu0
  %v684 = vadd.f32 %v429, %v683
  %v685 = vpop.f32.mrb[0].mxu0
  %686 = vmatprep.mubr.f32.mxu0 0.0
  %v687 = vand.u32 %v149, 4294901760
  %688 = vmatmul.mubr.f32.gmra.mrb[0].mxu0 %v687
  %v689 = vpop.f32.mrb[0].mxu0
  %v690 = vadd.f32 %v439, %v689
  %v691 = vpop.f32.mrb[0].mxu0
  %692 = vmatprep.mubr.f32.mxu0 0.0
  %v693 = vand.u32 %v152, 4294901760
  %694 = vmatmul.mubr.f32.gmra.mrb[0].mxu0 %v693
  %v695 = vpop.f32.mrb[0].mxu0
  %v696 = vadd.f32 %v449, %v695
  %v697 = vpop.f32.mrb[0].mxu0
  %698 = vmatprep.mubr.f32.mxu0 0.0
  %v699 = vand.u32 %v155, 4294901760
  %700 = vmatmul.mubr.f32.gmra.mrb[0].mxu0 %v699
  %v701 = vpop.f32.mrb[0].mxu0
  %v702 = vadd.f32 %v459, %v701
  %v703 = vpop.f32.mrb[0].mxu0
  %704 = vmatprep.mubr.f32.mxu0 0.0
  %v705 = vand.u32 %v158, 4294901760
  %706 = vmatmul.mubr.f32.gmra.mrb[0].mxu0 %v705
  %v707 = vpop.f32.mrb[0].mxu0
  %v708 = vadd.f32 %v469, %v707
  %v709 = vpop.f32.mrb[0].mxu0
  %710 = vmatprep.mubr.f32.mxu0 0.0
  %v711 = vand.u32 %v161, 4294901760
  %712 = vmatmul.mubr.f32.gmra.mrb[0].mxu0 %v711
  %v713 = vpop.f32.mrb[0].mxu0
  %v714 = vadd.f32 %v479, %v713
  %v715 = vpop.f32.mrb[0].mxu0
  %716 = vdwg.mxu0
  %717 = vmatprep.subr.mxu0 0.0
  %v718 = vand.u32 %v76, 4294901760
  %v719 = vsub.f32 %v76, %v718
  %720 = vmatpush1.msra.mxu0 %v719
  %721 = vmatprep.subr.mxu0 0.0
  %v722 = vand.u32 %v77, 4294901760
  %v723 = vsub.f32 %v77, %v722
  %724 = vmatpush1.msra.mxu0 %v723
  %725 = vmatprep.subr.mxu0 0.0
  %v726 = vand.u32 %v78, 4294901760
  %v727 = vsub.f32 %v78, %v726
  %728 = vmatpush1.msra.mxu0 %v727
  %729 = vmatprep.subr.mxu0 0.0
  %v730 = vand.u32 %v79, 4294901760
  %v731 = vsub.f32 %v79, %v730
  %732 = vmatpush1.msra.mxu0 %v731
  %733 = vmatprep.subr.mxu0 0.0
  %734 = vmatpush1.msra.mxu0 0.0
  %735 = vmatprep.subr.mxu0 0.0
  %736 = vmatpush1.msra.mxu0 0.0
  %737 = vmatprep.subr.mxu0 0.0
  %738 = vmatpush1.msra.mxu0 0.0
  %739 = vmatprep.subr.mxu0 0.0
  %740 = vmatpush1.msra.mxu0 0.0
  %741 = vmatprep.subr.mxu0 0.0
  %742 = vmatpush1.msra.mxu0 0.0
  %743 = vmatprep.subr.mxu0 0.0
  %744 = vmatpush1.msra.mxu0 0.0
  %745 = vmatprep.subr.mxu0 0.0
  %746 = vmatpush1.msra.mxu0 0.0
  %747 = vmatprep.subr.mxu0 0.0
  %748 = vmatpush1.msra.mxu0 0.0
  %749 = vmatprep.subr.mxu0 0.0
  %750 = vmatpush1.msra.mxu0 0.0
  %751 = vmatprep.subr.mxu0 0.0
  %752 = vmatpush1.msra.mxu0 0.0
  %753 = vmatprep.subr.mxu0 0.0
  %754 = vmatpush1.msra.mxu0 0.0
  %755 = vmatprep.subr.mxu0 0.0
  %756 = vmatpush1.msra.mxu0 0.0
  %757 = vmatprep.subr.mxu0 0.0
  %758 = vmatpush1.msra.mxu0 0.0
  %759 = vmatprep.subr.mxu0 0.0
  %760 = vmatpush1.msra.mxu0 0.0
  %761 = vmatprep.subr.mxu0 0.0
  %762 = vmatpush1.msra.mxu0 0.0
  %763 = vmatprep.subr.mxu0 0.0
  %764 = vmatpush1.msra.mxu0 0.0
  %765 = vmatprep.subr.mxu0 0.0
  %766 = vmatpush1.msra.mxu0 0.0
  %767 = vmatprep.subr.mxu0 0.0
  %768 = vmatpush1.msra.mxu0 0.0
  %769 = vmatprep.subr.mxu0 0.0
  %770 = vmatpush1.msra.mxu0 0.0
  %771 = vmatprep.subr.mxu0 0.0
  %772 = vmatpush1.msra.mxu0 0.0
  %773 = vmatprep.subr.mxu0 0.0
  %774 = vmatpush1.msra.mxu0 0.0
  %775 = vmatprep.subr.mxu0 0.0
  %776 = vmatpush1.msra.mxu0 0.0
  %777 = vmatprep.subr.mxu0 0.0
  %778 = vmatpush1.msra.mxu0 0.0
  %779 = vmatprep.subr.mxu0 0.0
  %780 = vmatpush1.msra.mxu0 0.0
  %781 = vmatprep.subr.mxu0 0.0
  %782 = vmatpush1.msra.mxu0 0.0
  %783 = vmatprep.subr.mxu0 0.0
  %784 = vmatpush1.msra.mxu0 0.0
  %785 = vmatprep.subr.mxu0 0.0
  %786 = vmatpush1.msra.mxu0 0.0
  %787 = vmatprep.subr.mxu0 0.0
  %788 = vmatpush1.msra.mxu0 0.0
  %789 = vmatprep.mubr.f32.mxu0 0.0
  %v790 = vand.u32 %v89, 4294901760
  %v791 = vsub.f32 %v89, %v790
  %792 = vmatmul.mubr.f32.gmra.mrb[0].mxu0 %v791
  %v793 = vpop.f32.mrb[0].mxu0
  %v794 = vadd.f32 %v570, %v793
  %v795 = vpop.f32.mrb[0].mxu0
  %796 = vmatprep.mubr.f32.mxu0 0.0
  %v797 = vand.u32 %v92, 4294901760
  %v798 = vsub.f32 %v92, %v797
  %799 = vmatmul.mubr.f32.gmra.mrb[0].mxu0 %v798
  %v800 = vpop.f32.mrb[0].mxu0
  %v801 = vadd.f32 %v576, %v800
  %v802 = vpop.f32.mrb[0].mxu0
  %803 = vmatprep.mubr.f32.mxu0 0.0
  %v804 = vand.u32 %v95, 4294901760
  %v805 = vsub.f32 %v95, %v804
  %806 = vmatmul.mubr.f32.gmra.mrb[0].mxu0 %v805
  %v807 = vpop.f32.mrb[0].mxu0
  %v808 = vadd.f32 %v582, %v807
  %v809 = vpop.f32.mrb[0].mxu0
  %810 = vmatprep.mubr.f32.mxu0 0.0
  %v811 = vand.u32 %v98, 4294901760
  %v812 = vsub.f32 %v98, %v811
  %813 = vmatmul.mubr.f32.gmra.mrb[0].mxu0 %v812
  %v814 = vpop.f32.mrb[0].mxu0
  %v815 = vadd.f32 %v588, %v814
  %v816 = vpop.f32.mrb[0].mxu0
  %817 = vmatprep.mubr.f32.mxu0 0.0
  %v818 = vand.u32 %v101, 4294901760
  %v819 = vsub.f32 %v101, %v818
  %820 = vmatmul.mubr.f32.gmra.mrb[0].mxu0 %v819
  %v821 = vpop.f32.mrb[0].mxu0
  %v822 = vadd.f32 %v594, %v821
  %v823 = vpop.f32.mrb[0].mxu0
  %824 = vmatprep.mubr.f32.mxu0 0.0
  %v825 = vand.u32 %v104, 4294901760
  %v826 = vsub.f32 %v104, %v825
  %827 = vmatmul.mubr.f32.gmra.mrb[0].mxu0 %v826
  %v828 = vpop.f32.mrb[0].mxu0
  %v829 = vadd.f32 %v600, %v828
  %v830 = vpop.f32.mrb[0].mxu0
  %831 = vmatprep.mubr.f32.mxu0 0.0
  %v832 = vand.u32 %v107, 4294901760
  %v833 = vsub.f32 %v107, %v832
  %834 = vmatmul.mubr.f32.gmra.mrb[0].mxu0 %v833
  %v835 = vpop.f32.mrb[0].mxu0
  %v836 = vadd.f32 %v606, %v835
  %v837 = vpop.f32.mrb[0].mxu0
  %838 = vmatprep.mubr.f32.mxu0 0.0
  %v839 = vand.u32 %v110, 4294901760
  %v840 = vsub.f32 %v110, %v839
  %841 = vmatmul.mubr.f32.gmra.mrb[0].mxu0 %v840
  %v842 = vpop.f32.mrb[0].mxu0
  %v843 = vadd.f32 %v612, %v842
  %v844 = vpop.f32.mrb[0].mxu0
  %845 = vmatprep.mubr.f32.mxu0 0.0
  %v846 = vand.u32 %v113, 4294901760
  %v847 = vsub.f32 %v113, %v846
  %848 = vmatmul.mubr.f32.gmra.mrb[0].mxu0 %v847
  %v849 = vpop.f32.mrb[0].mxu0
  %v850 = vadd.f32 %v618, %v849
  %v851 = vpop.f32.mrb[0].mxu0
  %852 = vmatprep.mubr.f32.mxu0 0.0
  %v853 = vand.u32 %v116, 4294901760
  %v854 = vsub.f32 %v116, %v853
  %855 = vmatmul.mubr.f32.gmra.mrb[0].mxu0 %v854
  %v856 = vpop.f32.mrb[0].mxu0
  %v857 = vadd.f32 %v624, %v856
  %v858 = vpop.f32.mrb[0].mxu0
  %859 = vmatprep.mubr.f32.mxu0 0.0
  %v860 = vand.u32 %v119, 4294901760
  %v861 = vsub.f32 %v119, %v860
  %862 = vmatmul.mubr.f32.gmra.mrb[0].mxu0 %v861
  %v863 = vpop.f32.mrb[0].mxu0
  %v864 = vadd.f32 %v630, %v863
  %v865 = vpop.f32.mrb[0].mxu0
  %866 = vmatprep.mubr.f32.mxu0 0.0
  %v867 = vand.u32 %v122, 4294901760
  %v868 = vsub.f32 %v122, %v867
  %869 = vmatmul.mubr.f32.gmra.mrb[0].mxu0 %v868
  %v870 = vpop.f32.mrb[0].mxu0
  %v871 = vadd.f32 %v636, %v870
  %v872 = vpop.f32.mrb[0].mxu0
  %873 = vmatprep.mubr.f32.mxu0 0.0
  %v874 = vand.u32 %v125, 4294901760
  %v875 = vsub.f32 %v125, %v874
  %876 = vmatmul.mubr.f32.gmra.mrb[0].mxu0 %v875
  %v877 = vpop.f32.mrb[0].mxu0
  %v878 = vadd.f32 %v642, %v877
  %v879 = vpop.f32.mrb[0].mxu0
  %880 = vmatprep.mubr.f32.mxu0 0.0
  %v881 = vand.u32 %v128, 4294901760
  %v882 = vsub.f32 %v128, %v881
  %883 = vmatmul.mubr.f32.gmra.mrb[0].mxu0 %v882
  %v884 = vpop.f32.mrb[0].mxu0
  %v885 = vadd.f32 %v648, %v884
  %v886 = vpop.f32.mrb[0].mxu0
  %887 = vmatprep.mubr.f32.mxu0 0.0
  %v888 = vand.u32 %v131, 4294901760
  %v889 = vsub.f32 %v131, %v888
  %890 = vmatmul.mubr.f32.gmra.mrb[0].mxu0 %v889
  %v891 = vpop.f32.mrb[0].mxu0
  %v892 = vadd.f32 %v654, %v891
  %v893 = vpop.f32.mrb[0].mxu0
  %894 = vmatprep.mubr.f32.mxu0 0.0
  %v895 = vand.u32 %v134, 4294901760
  %v896 = vsub.f32 %v134, %v895
  %897 = vmatmul.mubr.f32.gmra.mrb[0].mxu0 %v896
  %v898 = vpop.f32.mrb[0].mxu0
  %v899 = vadd.f32 %v660, %v898
  %v900 = vpop.f32.mrb[0].mxu0
  %901 = vmatprep.mubr.f32.mxu0 0.0
  %v902 = vand.u32 %v137, 4294901760
  %v903 = vsub.f32 %v137, %v902
  %904 = vmatmul.mubr.f32.gmra.mrb[0].mxu0 %v903
  %v905 = vpop.f32.mrb[0].mxu0
  %v906 = vadd.f32 %v666, %v905
  %v907 = vpop.f32.mrb[0].mxu0
  %908 = vmatprep.mubr.f32.mxu0 0.0
  %v909 = vand.u32 %v140, 4294901760
  %v910 = vsub.f32 %v140, %v909
  %911 = vmatmul.mubr.f32.gmra.mrb[0].mxu0 %v910
  %v912 = vpop.f32.mrb[0].mxu0
  %v913 = vadd.f32 %v672, %v912
  %v914 = vpop.f32.mrb[0].mxu0
  %915 = vmatprep.mubr.f32.mxu0 0.0
  %v916 = vand.u32 %v143, 4294901760
  %v917 = vsub.f32 %v143, %v916
  %918 = vmatmul.mubr.f32.gmra.mrb[0].mxu0 %v917
  %v919 = vpop.f32.mrb[0].mxu0
  %v920 = vadd.f32 %v678, %v919
  %v921 = vpop.f32.mrb[0].mxu0
  %922 = vmatprep.mubr.f32.mxu0 0.0
  %v923 = vand.u32 %v146, 4294901760
  %v924 = vsub.f32 %v146, %v923
  %925 = vmatmul.mubr.f32.gmra.mrb[0].mxu0 %v924
  %v926 = vpop.f32.mrb[0].mxu0
  %v927 = vadd.f32 %v684, %v926
  %v928 = vpop.f32.mrb[0].mxu0
  %929 = vmatprep.mubr.f32.mxu0 0.0
  %v930 = vand.u32 %v149, 4294901760
  %v931 = vsub.f32 %v149, %v930
  %932 = vmatmul.mubr.f32.gmra.mrb[0].mxu0 %v931
  %v933 = vpop.f32.mrb[0].mxu0
  %v934 = vadd.f32 %v690, %v933
  %v935 = vpop.f32.mrb[0].mxu0
  %936 = vmatprep.mubr.f32.mxu0 0.0
  %v937 = vand.u32 %v152, 4294901760
  %v938 = vsub.f32 %v152, %v937
  %939 = vmatmul.mubr.f32.gmra.mrb[0].mxu0 %v938
  %v940 = vpop.f32.mrb[0].mxu0
  %v941 = vadd.f32 %v696, %v940
  %v942 = vpop.f32.mrb[0].mxu0
  %943 = vmatprep.mubr.f32.mxu0 0.0
  %v944 = vand.u32 %v155, 4294901760
  %v945 = vsub.f32 %v155, %v944
  %946 = vmatmul.mubr.f32.gmra.mrb[0].mxu0 %v945
  %v947 = vpop.f32.mrb[0].mxu0
  %v948 = vadd.f32 %v702, %v947
  %v949 = vpop.f32.mrb[0].mxu0
  %950 = vmatprep.mubr.f32.mxu0 0.0
  %v951 = vand.u32 %v158, 4294901760
  %v952 = vsub.f32 %v158, %v951
  %953 = vmatmul.mubr.f32.gmra.mrb[0].mxu0 %v952
  %v954 = vpop.f32.mrb[0].mxu0
  %v955 = vadd.f32 %v708, %v954
  %v956 = vpop.f32.mrb[0].mxu0
  %957 = vmatprep.mubr.f32.mxu0 0.0
  %v958 = vand.u32 %v161, 4294901760
  %v959 = vsub.f32 %v161, %v958
  %960 = vmatmul.mubr.f32.gmra.mrb[0].mxu0 %v959
  %v961 = vpop.f32.mrb[0].mxu0
  %v962 = vadd.f32 %v714, %v961
  %v963 = vpop.f32.mrb[0].mxu0
  %964 = vdwg.mxu0
  %965 = vmatprep.subr.mxu0 0.0
  %v966 = vand.u32 %v76, 4294901760
  %967 = vmatpush1.msra.mxu0 %v966
  %968 = vmatprep.subr.mxu0 0.0
  %v969 = vand.u32 %v77, 4294901760
  %970 = vmatpush1.msra.mxu0 %v969
  %971 = vmatprep.subr.mxu0 0.0
  %v972 = vand.u32 %v78, 4294901760
  %973 = vmatpush1.msra.mxu0 %v972
  %974 = vmatprep.subr.mxu0 0.0
  %v975 = vand.u32 %v79, 4294901760
  %976 = vmatpush1.msra.mxu0 %v975
  %977 = vmatprep.subr.mxu0 0.0
  %978 = vmatpush1.msra.mxu0 0.0
  %979 = vmatprep.subr.mxu0 0.0
  %980 = vmatpush1.msra.mxu0 0.0
  %981 = vmatprep.subr.mxu0 0.0
  %982 = vmatpush1.msra.mxu0 0.0
  %983 = vmatprep.subr.mxu0 0.0
  %984 = vmatpush1.msra.mxu0 0.0
  %985 = vmatprep.subr.mxu0 0.0
  %986 = vmatpush1.msra.mxu0 0.0
  %987 = vmatprep.subr.mxu0 0.0
  %988 = vmatpush1.msra.mxu0 0.0
  %989 = vmatprep.subr.mxu0 0.0
  %990 = vmatpush1.msra.mxu0 0.0
  %991 = vmatprep.subr.mxu0 0.0
  %992 = vmatpush1.msra.mxu0 0.0
  %993 = vmatprep.subr.mxu0 0.0
  %994 = vmatpush1.msra.mxu0 0.0
  %995 = vmatprep.subr.mxu0 0.0
  %996 = vmatpush1.msra.mxu0 0.0
  %997 = vmatprep.subr.mxu0 0.0
  %998 = vmatpush1.msra.mxu0 0.0
  %999 = vmatprep.subr.mxu0 0.0
  %1000 = vmatpush1.msra.mxu0 0.0
  %1001 = vmatprep.subr.mxu0 0.0
  %1002 = vmatpush1.msra.mxu0 0.0
  %1003 = vmatprep.subr.mxu0 0.0
  %1004 = vmatpush1.msra.mxu0 0.0
  %1005 = vmatprep.subr.mxu0 0.0
  %1006 = vmatpush1.msra.mxu0 0.0
  %1007 = vmatprep.subr.mxu0 0.0
  %1008 = vmatpush1.msra.mxu0 0.0
  %1009 = vmatprep.subr.mxu0 0.0
  %1010 = vmatpush1.msra.mxu0 0.0
  %1011 = vmatprep.subr.mxu0 0.0
  %1012 = vmatpush1.msra.mxu0 0.0
  %1013 = vmatprep.subr.mxu0 0.0
  %1014 = vmatpush1.msra.mxu0 0.0
  %1015 = vmatprep.subr.mxu0 0.0
  %1016 = vmatpush1.msra.mxu0 0.0
  %1017 = vmatprep.subr.mxu0 0.0
  %1018 = vmatpush1.msra.mxu0 0.0
  %1019 = vmatprep.subr.mxu0 0.0
  %1020 = vmatpush1.msra.mxu0 0.0
  %1021 = vmatprep.subr.mxu0 0.0
  %1022 = vmatpush1.msra.mxu0 0.0
  %1023 = vmatprep.subr.mxu0 0.0
  %1024 = vmatpush1.msra.mxu0 0.0
  %1025 = vmatprep.subr.mxu0 0.0
  %1026 = vmatpush1.msra.mxu0 0.0
  %1027 = vmatprep.subr.mxu0 0.0
  %1028 = vmatpush1.msra.mxu0 0.0
  %1029 = vmatprep.subr.mxu0 0.0
  %1030 = vmatpush1.msra.mxu0 0.0
  %1031 = vmatprep.subr.mxu0 0.0
  %1032 = vmatpush1.msra.mxu0 0.0
  %1033 = vmatprep.mubr.f32.mxu0 0.0
  %v1034 = vand.u32 %v89, 4294901760
  %v1035 = vsub.f32 %v89, %v1034
  %v1036 = vand.u32 %v1035, 4294901760
  %1037 = vmatmul.mubr.f32.gmra.mrb[0].mxu0 %v1036
  %v1038 = vpop.f32.mrb[0].mxu0
  %v1039 = vadd.f32 %v794, %v1038
  %v1040 = vpop.f32.mrb[0].mxu0
  %1041 = vmatprep.mubr.f32.mxu0 0.0
  %v1042 = vand.u32 %v92, 4294901760
  %v1043 = vsub.f32 %v92, %v1042
  %v1044 = vand.u32 %v1043, 4294901760
  %1045 = vmatmul.mubr.f32.gmra.mrb[0].mxu0 %v1044
  %v1046 = vpop.f32.mrb[0].mxu0
  %v1047 = vadd.f32 %v801, %v1046
  %v1048 = vpop.f32.mrb[0].mxu0
  %1049 = vmatprep.mubr.f32.mxu0 0.0
  %v1050 = vand.u32 %v95, 4294901760
  %v1051 = vsub.f32 %v95, %v1050
  %v1052 = vand.u32 %v1051, 4294901760
  %1053 = vmatmul.mubr.f32.gmra.mrb[0].mxu0 %v1052
  %v1054 = vpop.f32.mrb[0].mxu0
  %v1055 = vadd.f32 %v808, %v1054
  %v1056 = vpop.f32.mrb[0].mxu0
  %1057 = vmatprep.mubr.f32.mxu0 0.0
  %v1058 = vand.u32 %v98, 4294901760
  %v1059 = vsub.f32 %v98, %v1058
  %v1060 = vand.u32 %v1059, 4294901760
  %1061 = vmatmul.mubr.f32.gmra.mrb[0].mxu0 %v1060
  %v1062 = vpop.f32.mrb[0].mxu0
  %v1063 = vadd.f32 %v815, %v1062
  %v1064 = vpop.f32.mrb[0].mxu0
  %1065 = vmatprep.mubr.f32.mxu0 0.0
  %v1066 = vand.u32 %v101, 4294901760
  %v1067 = vsub.f32 %v101, %v1066
  %v1068 = vand.u32 %v1067, 4294901760
  %1069 = vmatmul.mubr.f32.gmra.mrb[0].mxu0 %v1068
  %v1070 = vpop.f32.mrb[0].mxu0
  %v1071 = vadd.f32 %v822, %v1070
  %v1072 = vpop.f32.mrb[0].mxu0
  %1073 = vmatprep.mubr.f32.mxu0 0.0
  %v1074 = vand.u32 %v104, 4294901760
  %v1075 = vsub.f32 %v104, %v1074
  %v1076 = vand.u32 %v1075, 4294901760
  %1077 = vmatmul.mubr.f32.gmra.mrb[0].mxu0 %v1076
  %v1078 = vpop.f32.mrb[0].mxu0
  %v1079 = vadd.f32 %v829, %v1078
  %v1080 = vpop.f32.mrb[0].mxu0
  %1081 = vmatprep.mubr.f32.mxu0 0.0
  %v1082 = vand.u32 %v107, 4294901760
  %v1083 = vsub.f32 %v107, %v1082
  %v1084 = vand.u32 %v1083, 4294901760
  %1085 = vmatmul.mubr.f32.gmra.mrb[0].mxu0 %v1084
  %v1086 = vpop.f32.mrb[0].mxu0
  %v1087 = vadd.f32 %v836, %v1086
  %v1088 = vpop.f32.mrb[0].mxu0
  %1089 = vmatprep.mubr.f32.mxu0 0.0
  %v1090 = vand.u32 %v110, 4294901760
  %v1091 = vsub.f32 %v110, %v1090
  %v1092 = vand.u32 %v1091, 4294901760
  %1093 = vmatmul.mubr.f32.gmra.mrb[0].mxu0 %v1092
  %v1094 = vpop.f32.mrb[0].mxu0
  %v1095 = vadd.f32 %v843, %v1094
  %v1096 = vpop.f32.mrb[0].mxu0
  %1097 = vmatprep.mubr.f32.mxu0 0.0
  %v1098 = vand.u32 %v113, 4294901760
  %v1099 = vsub.f32 %v113, %v1098
  %v1100 = vand.u32 %v1099, 4294901760
  %1101 = vmatmul.mubr.f32.gmra.mrb[0].mxu0 %v1100
  %v1102 = vpop.f32.mrb[0].mxu0
  %v1103 = vadd.f32 %v850, %v1102
  %v1104 = vpop.f32.mrb[0].mxu0
  %1105 = vmatprep.mubr.f32.mxu0 0.0
  %v1106 = vand.u32 %v116, 4294901760
  %v1107 = vsub.f32 %v116, %v1106
  %v1108 = vand.u32 %v1107, 4294901760
  %1109 = vmatmul.mubr.f32.gmra.mrb[0].mxu0 %v1108
  %v1110 = vpop.f32.mrb[0].mxu0
  %v1111 = vadd.f32 %v857, %v1110
  %v1112 = vpop.f32.mrb[0].mxu0
  %1113 = vmatprep.mubr.f32.mxu0 0.0
  %v1114 = vand.u32 %v119, 4294901760
  %v1115 = vsub.f32 %v119, %v1114
  %v1116 = vand.u32 %v1115, 4294901760
  %1117 = vmatmul.mubr.f32.gmra.mrb[0].mxu0 %v1116
  %v1118 = vpop.f32.mrb[0].mxu0
  %v1119 = vadd.f32 %v864, %v1118
  %v1120 = vpop.f32.mrb[0].mxu0
  %1121 = vmatprep.mubr.f32.mxu0 0.0
  %v1122 = vand.u32 %v122, 4294901760
  %v1123 = vsub.f32 %v122, %v1122
  %v1124 = vand.u32 %v1123, 4294901760
  %1125 = vmatmul.mubr.f32.gmra.mrb[0].mxu0 %v1124
  %v1126 = vpop.f32.mrb[0].mxu0
  %v1127 = vadd.f32 %v871, %v1126
  %v1128 = vpop.f32.mrb[0].mxu0
  %1129 = vmatprep.mubr.f32.mxu0 0.0
  %v1130 = vand.u32 %v125, 4294901760
  %v1131 = vsub.f32 %v125, %v1130
  %v1132 = vand.u32 %v1131, 4294901760
  %1133 = vmatmul.mubr.f32.gmra.mrb[0].mxu0 %v1132
  %v1134 = vpop.f32.mrb[0].mxu0
  %v1135 = vadd.f32 %v878, %v1134
  %v1136 = vpop.f32.mrb[0].mxu0
  %1137 = vmatprep.mubr.f32.mxu0 0.0
  %v1138 = vand.u32 %v128, 4294901760
  %v1139 = vsub.f32 %v128, %v1138
  %v1140 = vand.u32 %v1139, 4294901760
  %1141 = vmatmul.mubr.f32.gmra.mrb[0].mxu0 %v1140
  %v1142 = vpop.f32.mrb[0].mxu0
  %v1143 = vadd.f32 %v885, %v1142
  %v1144 = vpop.f32.mrb[0].mxu0
  %1145 = vmatprep.mubr.f32.mxu0 0.0
  %v1146 = vand.u32 %v131, 4294901760
  %v1147 = vsub.f32 %v131, %v1146
  %v1148 = vand.u32 %v1147, 4294901760
  %1149 = vmatmul.mubr.f32.gmra.mrb[0].mxu0 %v1148
  %v1150 = vpop.f32.mrb[0].mxu0
  %v1151 = vadd.f32 %v892, %v1150
  %v1152 = vpop.f32.mrb[0].mxu0
  %1153 = vmatprep.mubr.f32.mxu0 0.0
  %v1154 = vand.u32 %v134, 4294901760
  %v1155 = vsub.f32 %v134, %v1154
  %v1156 = vand.u32 %v1155, 4294901760
  %1157 = vmatmul.mubr.f32.gmra.mrb[0].mxu0 %v1156
  %v1158 = vpop.f32.mrb[0].mxu0
  %v1159 = vadd.f32 %v899, %v1158
  %v1160 = vpop.f32.mrb[0].mxu0
  %1161 = vmatprep.mubr.f32.mxu0 0.0
  %v1162 = vand.u32 %v137, 4294901760
  %v1163 = vsub.f32 %v137, %v1162
  %v1164 = vand.u32 %v1163, 4294901760
  %1165 = vmatmul.mubr.f32.gmra.mrb[0].mxu0 %v1164
  %v1166 = vpop.f32.mrb[0].mxu0
  %v1167 = vadd.f32 %v906, %v1166
  %v1168 = vpop.f32.mrb[0].mxu0
  %1169 = vmatprep.mubr.f32.mxu0 0.0
  %v1170 = vand.u32 %v140, 4294901760
  %v1171 = vsub.f32 %v140, %v1170
  %v1172 = vand.u32 %v1171, 4294901760
  %1173 = vmatmul.mubr.f32.gmra.mrb[0].mxu0 %v1172
  %v1174 = vpop.f32.mrb[0].mxu0
  %v1175 = vadd.f32 %v913, %v1174
  %v1176 = vpop.f32.mrb[0].mxu0
  %1177 = vmatprep.mubr.f32.mxu0 0.0
  %v1178 = vand.u32 %v143, 4294901760
  %v1179 = vsub.f32 %v143, %v1178
  %v1180 = vand.u32 %v1179, 4294901760
  %1181 = vmatmul.mubr.f32.gmra.mrb[0].mxu0 %v1180
  %v1182 = vpop.f32.mrb[0].mxu0
  %v1183 = vadd.f32 %v920, %v1182
  %v1184 = vpop.f32.mrb[0].mxu0
  %1185 = vmatprep.mubr.f32.mxu0 0.0
  %v1186 = vand.u32 %v146, 4294901760
  %v1187 = vsub.f32 %v146, %v1186
  %v1188 = vand.u32 %v1187, 4294901760
  %1189 = vmatmul.mubr.f32.gmra.mrb[0].mxu0 %v1188
  %v1190 = vpop.f32.mrb[0].mxu0
  %v1191 = vadd.f32 %v927, %v1190
  %v1192 = vpop.f32.mrb[0].mxu0
  %1193 = vmatprep.mubr.f32.mxu0 0.0
  %v1194 = vand.u32 %v149, 4294901760
  %v1195 = vsub.f32 %v149, %v1194
  %v1196 = vand.u32 %v1195, 4294901760
  %1197 = vmatmul.mubr.f32.gmra.mrb[0].mxu0 %v1196
  %v1198 = vpop.f32.mrb[0].mxu0
  %v1199 = vadd.f32 %v934, %v1198
  %v1200 = vpop.f32.mrb[0].mxu0
  %1201 = vmatprep.mubr.f32.mxu0 0.0
  %v1202 = vand.u32 %v152, 4294901760
  %v1203 = vsub.f32 %v152, %v1202
  %v1204 = vand.u32 %v1203, 4294901760
  %1205 = vmatmul.mubr.f32.gmra.mrb[0].mxu0 %v1204
  %v1206 = vpop.f32.mrb[0].mxu0
  %v1207 = vadd.f32 %v941, %v1206
  %v1208 = vpop.f32.mrb[0].mxu0
  %1209 = vmatprep.mubr.f32.mxu0 0.0
  %v1210 = vand.u32 %v155, 4294901760
  %v1211 = vsub.f32 %v155, %v1210
  %v1212 = vand.u32 %v1211, 4294901760
  %1213 = vmatmul.mubr.f32.gmra.mrb[0].mxu0 %v1212
  %v1214 = vpop.f32.mrb[0].mxu0
  %v1215 = vadd.f32 %v948, %v1214
  %v1216 = vpop.f32.mrb[0].mxu0
  %1217 = vmatprep.mubr.f32.mxu0 0.0
  %v1218 = vand.u32 %v158, 4294901760
  %v1219 = vsub.f32 %v158, %v1218
  %v1220 = vand.u32 %v1219, 4294901760
  %1221 = vmatmul.mubr.f32.gmra.mrb[0].mxu0 %v1220
  %v1222 = vpop.f32.mrb[0].mxu0
  %v1223 = vadd.f32 %v955, %v1222
  %v1224 = vpop.f32.mrb[0].mxu0
  %1225 = vmatprep.mubr.f32.mxu0 0.0
  %v1226 = vand.u32 %v161, 4294901760
  %v1227 = vsub.f32 %v161, %v1226
  %v1228 = vand.u32 %v1227, 4294901760
  %1229 = vmatmul.mubr.f32.gmra.mrb[0].mxu0 %v1228
  %v1230 = vpop.f32.mrb[0].mxu0
  %v1231 = vadd.f32 %v962, %v1230
  %v1232 = vpop.f32.mrb[0].mxu0
  %1233 = vdwg.mxu0
  %1234 = vmatprep.subr.mxu0 0.0
  %v1235 = vand.u32 %v76, 4294901760
  %v1236 = vsub.f32 %v76, %v1235
  %v1237 = vand.u32 %v1236, 4294901760
  %1238 = vmatpush1.msra.mxu0 %v1237
  %1239 = vmatprep.subr.mxu0 0.0
  %v1240 = vand.u32 %v77, 4294901760
  %v1241 = vsub.f32 %v77, %v1240
  %v1242 = vand.u32 %v1241, 4294901760
  %1243 = vmatpush1.msra.mxu0 %v1242
  %1244 = vmatprep.subr.mxu0 0.0
  %v1245 = vand.u32 %v78, 4294901760
  %v1246 = vsub.f32 %v78, %v1245
  %v1247 = vand.u32 %v1246, 4294901760
  %1248 = vmatpush1.msra.mxu0 %v1247
  %1249 = vmatprep.subr.mxu0 0.0
  %v1250 = vand.u32 %v79, 4294901760
  %v1251 = vsub.f32 %v79, %v1250
  %v1252 = vand.u32 %v1251, 4294901760
  %1253 = vmatpush1.msra.mxu0 %v1252
  %1254 = vmatprep.subr.mxu0 0.0
  %1255 = vmatpush1.msra.mxu0 0.0
  %1256 = vmatprep.subr.mxu0 0.0
  %1257 = vmatpush1.msra.mxu0 0.0
  %1258 = vmatprep.subr.mxu0 0.0
  %1259 = vmatpush1.msra.mxu0 0.0
  %1260 = vmatprep.subr.mxu0 0.0
  %1261 = vmatpush1.msra.mxu0 0.0
  %1262 = vmatprep.subr.mxu0 0.0
  %1263 = vmatpush1.msra.mxu0 0.0
  %1264 = vmatprep.subr.mxu0 0.0
  %1265 = vmatpush1.msra.mxu0 0.0
  %1266 = vmatprep.subr.mxu0 0.0
  %1267 = vmatpush1.msra.mxu0 0.0
  %1268 = vmatprep.subr.mxu0 0.0
  %1269 = vmatpush1.msra.mxu0 0.0
  %1270 = vmatprep.subr.mxu0 0.0
  %1271 = vmatpush1.msra.mxu0 0.0
  %1272 = vmatprep.subr.mxu0 0.0
  %1273 = vmatpush1.msra.mxu0 0.0
  %1274 = vmatprep.subr.mxu0 0.0
  %1275 = vmatpush1.msra.mxu0 0.0
  %1276 = vmatprep.subr.mxu0 0.0
  %1277 = vmatpush1.msra.mxu0 0.0
  %1278 = vmatprep.subr.mxu0 0.0
  %1279 = vmatpush1.msra.mxu0 0.0
  %1280 = vmatprep.subr.mxu0 0.0
  %1281 = vmatpush1.msra.mxu0 0.0
  %1282 = vmatprep.subr.mxu0 0.0
  %1283 = vmatpush1.msra.mxu0 0.0
  %1284 = vmatprep.subr.mxu0 0.0
  %1285 = vmatpush1.msra.mxu0 0.0
  %1286 = vmatprep.subr.mxu0 0.0
  %1287 = vmatpush1.msra.mxu0 0.0
  %1288 = vmatprep.subr.mxu0 0.0
  %1289 = vmatpush1.msra.mxu0 0.0
  %1290 = vmatprep.subr.mxu0 0.0
  %1291 = vmatpush1.msra.mxu0 0.0
  %1292 = vmatprep.subr.mxu0 0.0
  %1293 = vmatpush1.msra.mxu0 0.0
  %1294 = vmatprep.subr.mxu0 0.0
  %1295 = vmatpush1.msra.mxu0 0.0
  %1296 = vmatprep.subr.mxu0 0.0
  %1297 = vmatpush1.msra.mxu0 0.0
  %1298 = vmatprep.subr.mxu0 0.0
  %1299 = vmatpush1.msra.mxu0 0.0
  %1300 = vmatprep.subr.mxu0 0.0
  %1301 = vmatpush1.msra.mxu0 0.0
  %1302 = vmatprep.subr.mxu0 0.0
  %1303 = vmatpush1.msra.mxu0 0.0
  %1304 = vmatprep.subr.mxu0 0.0
  %1305 = vmatpush1.msra.mxu0 0.0
  %1306 = vmatprep.subr.mxu0 0.0
  %1307 = vmatpush1.msra.mxu0 0.0
  %1308 = vmatprep.subr.mxu0 0.0
  %1309 = vmatpush1.msra.mxu0 0.0
  %1310 = vmatprep.mubr.f32.mxu0 0.0
  %v1311 = vand.u32 %v89, 4294901760
  %1312 = vmatmul.mubr.f32.gmra.mrb[0].mxu0 %v1311
  %v1313 = vpop.f32.mrb[0].mxu0
  %v1314 = vadd.f32 %v1039, %v1313
  %v1315 = vpop.f32.mrb[0].mxu0
  %1316 = vmatprep.mubr.f32.mxu0 0.0
  %v1317 = vand.u32 %v92, 4294901760
  %1318 = vmatmul.mubr.f32.gmra.mrb[0].mxu0 %v1317
  %v1319 = vpop.f32.mrb[0].mxu0
  %v1320 = vadd.f32 %v1047, %v1319
  %v1321 = vpop.f32.mrb[0].mxu0
  %1322 = vmatprep.mubr.f32.mxu0 0.0
  %v1323 = vand.u32 %v95, 4294901760
  %1324 = vmatmul.mubr.f32.gmra.mrb[0].mxu0 %v1323
  %v1325 = vpop.f32.mrb[0].mxu0
  %v1326 = vadd.f32 %v1055, %v1325
  %v1327 = vpop.f32.mrb[0].mxu0
  %1328 = vmatprep.mubr.f32.mxu0 0.0
  %v1329 = vand.u32 %v98, 4294901760
  %1330 = vmatmul.mubr.f32.gmra.mrb[0].mxu0 %v1329
  %v1331 = vpop.f32.mrb[0].mxu0
  %v1332 = vadd.f32 %v1063, %v1331
  %v1333 = vpop.f32.mrb[0].mxu0
  %1334 = vmatprep.mubr.f32.mxu0 0.0
  %v1335 = vand.u32 %v101, 4294901760
  %1336 = vmatmul.mubr.f32.gmra.mrb[0].mxu0 %v1335
  %v1337 = vpop.f32.mrb[0].mxu0
  %v1338 = vadd.f32 %v1071, %v1337
  %v1339 = vpop.f32.mrb[0].mxu0
  %1340 = vmatprep.mubr.f32.mxu0 0.0
  %v1341 = vand.u32 %v104, 4294901760
  %1342 = vmatmul.mubr.f32.gmra.mrb[0].mxu0 %v1341
  %v1343 = vpop.f32.mrb[0].mxu0
  %v1344 = vadd.f32 %v1079, %v1343
  %v1345 = vpop.f32.mrb[0].mxu0
  %1346 = vmatprep.mubr.f32.mxu0 0.0
  %v1347 = vand.u32 %v107, 4294901760
  %1348 = vmatmul.mubr.f32.gmra.mrb[0].mxu0 %v1347
  %v1349 = vpop.f32.mrb[0].mxu0
  %v1350 = vadd.f32 %v1087, %v1349
  %v1351 = vpop.f32.mrb[0].mxu0
  %1352 = vmatprep.mubr.f32.mxu0 0.0
  %v1353 = vand.u32 %v110, 4294901760
  %1354 = vmatmul.mubr.f32.gmra.mrb[0].mxu0 %v1353
  %v1355 = vpop.f32.mrb[0].mxu0
  %v1356 = vadd.f32 %v1095, %v1355
  %v1357 = vpop.f32.mrb[0].mxu0
  %1358 = vmatprep.mubr.f32.mxu0 0.0
  %v1359 = vand.u32 %v113, 4294901760
  %1360 = vmatmul.mubr.f32.gmra.mrb[0].mxu0 %v1359
  %v1361 = vpop.f32.mrb[0].mxu0
  %v1362 = vadd.f32 %v1103, %v1361
  %v1363 = vpop.f32.mrb[0].mxu0
  %1364 = vmatprep.mubr.f32.mxu0 0.0
  %v1365 = vand.u32 %v116, 4294901760
  %1366 = vmatmul.mubr.f32.gmra.mrb[0].mxu0 %v1365
  %v1367 = vpop.f32.mrb[0].mxu0
  %v1368 = vadd.f32 %v1111, %v1367
  %v1369 = vpop.f32.mrb[0].mxu0
  %1370 = vmatprep.mubr.f32.mxu0 0.0
  %v1371 = vand.u32 %v119, 4294901760
  %1372 = vmatmul.mubr.f32.gmra.mrb[0].mxu0 %v1371
  %v1373 = vpop.f32.mrb[0].mxu0
  %v1374 = vadd.f32 %v1119, %v1373
  %v1375 = vpop.f32.mrb[0].mxu0
  %1376 = vmatprep.mubr.f32.mxu0 0.0
  %v1377 = vand.u32 %v122, 4294901760
  %1378 = vmatmul.mubr.f32.gmra.mrb[0].mxu0 %v1377
  %v1379 = vpop.f32.mrb[0].mxu0
  %v1380 = vadd.f32 %v1127, %v1379
  %v1381 = vpop.f32.mrb[0].mxu0
  %1382 = vmatprep.mubr.f32.mxu0 0.0
  %v1383 = vand.u32 %v125, 4294901760
  %1384 = vmatmul.mubr.f32.gmra.mrb[0].mxu0 %v1383
  %v1385 = vpop.f32.mrb[0].mxu0
  %v1386 = vadd.f32 %v1135, %v1385
  %v1387 = vpop.f32.mrb[0].mxu0
  %1388 = vmatprep.mubr.f32.mxu0 0.0
  %v1389 = vand.u32 %v128, 4294901760
  %1390 = vmatmul.mubr.f32.gmra.mrb[0].mxu0 %v1389
  %v1391 = vpop.f32.mrb[0].mxu0
  %v1392 = vadd.f32 %v1143, %v1391
  %v1393 = vpop.f32.mrb[0].mxu0
  %1394 = vmatprep.mubr.f32.mxu0 0.0
  %v1395 = vand.u32 %v131, 4294901760
  %1396 = vmatmul.mubr.f32.gmra.mrb[0].mxu0 %v1395
  %v1397 = vpop.f32.mrb[0].mxu0
  %v1398 = vadd.f32 %v1151, %v1397
  %v1399 = vpop.f32.mrb[0].mxu0
  %1400 = vmatprep.mubr.f32.mxu0 0.0
  %v1401 = vand.u32 %v134, 4294901760
  %1402 = vmatmul.mubr.f32.gmra.mrb[0].mxu0 %v1401
  %v1403 = vpop.f32.mrb[0].mxu0
  %v1404 = vadd.f32 %v1159, %v1403
  %v1405 = vpop.f32.mrb[0].mxu0
  %1406 = vmatprep.mubr.f32.mxu0 0.0
  %v1407 = vand.u32 %v137, 4294901760
  %1408 = vmatmul.mubr.f32.gmra.mrb[0].mxu0 %v1407
  %v1409 = vpop.f32.mrb[0].mxu0
  %v1410 = vadd.f32 %v1167, %v1409
  %v1411 = vpop.f32.mrb[0].mxu0
  %1412 = vmatprep.mubr.f32.mxu0 0.0
  %v1413 = vand.u32 %v140, 4294901760
  %1414 = vmatmul.mubr.f32.gmra.mrb[0].mxu0 %v1413
  %v1415 = vpop.f32.mrb[0].mxu0
  %v1416 = vadd.f32 %v1175, %v1415
  %v1417 = vpop.f32.mrb[0].mxu0
  %1418 = vmatprep.mubr.f32.mxu0 0.0
  %v1419 = vand.u32 %v143, 4294901760
  %1420 = vmatmul.mubr.f32.gmra.mrb[0].mxu0 %v1419
  %v1421 = vpop.f32.mrb[0].mxu0
  %v1422 = vadd.f32 %v1183, %v1421
  %v1423 = vpop.f32.mrb[0].mxu0
  %1424 = vmatprep.mubr.f32.mxu0 0.0
  %v1425 = vand.u32 %v146, 4294901760
  %1426 = vmatmul.mubr.f32.gmra.mrb[0].mxu0 %v1425
  %v1427 = vpop.f32.mrb[0].mxu0
  %v1428 = vadd.f32 %v1191, %v1427
  %v1429 = vpop.f32.mrb[0].mxu0
  %1430 = vmatprep.mubr.f32.mxu0 0.0
  %v1431 = vand.u32 %v149, 4294901760
  %1432 = vmatmul.mubr.f32.gmra.mrb[0].mxu0 %v1431
  %v1433 = vpop.f32.mrb[0].mxu0
  %v1434 = vadd.f32 %v1199, %v1433
  %v1435 = vpop.f32.mrb[0].mxu0
  %1436 = vmatprep.mubr.f32.mxu0 0.0
  %v1437 = vand.u32 %v152, 4294901760
  %1438 = vmatmul.mubr.f32.gmra.mrb[0].mxu0 %v1437
  %v1439 = vpop.f32.mrb[0].mxu0
  %v1440 = vadd.f32 %v1207, %v1439
  %v1441 = vpop.f32.mrb[0].mxu0
  %1442 = vmatprep.mubr.f32.mxu0 0.0
  %v1443 = vand.u32 %v155, 4294901760
  %1444 = vmatmul.mubr.f32.gmra.mrb[0].mxu0 %v1443
  %v1445 = vpop.f32.mrb[0].mxu0
  %v1446 = vadd.f32 %v1215, %v1445
  %v1447 = vpop.f32.mrb[0].mxu0
  %1448 = vmatprep.mubr.f32.mxu0 0.0
  %v1449 = vand.u32 %v158, 4294901760
  %1450 = vmatmul.mubr.f32.gmra.mrb[0].mxu0 %v1449
  %v1451 = vpop.f32.mrb[0].mxu0
  %v1452 = vadd.f32 %v1223, %v1451
  %v1453 = vpop.f32.mrb[0].mxu0
  %1454 = vmatprep.mubr.f32.mxu0 0.0
  %v1455 = vand.u32 %v161, 4294901760
  %1456 = vmatmul.mubr.f32.gmra.mrb[0].mxu0 %v1455
  %v1457 = vpop.f32.mrb[0].mxu0
  %v1458 = vadd.f32 %v1231, %v1457
  %v1459 = vpop.f32.mrb[0].mxu0
  %1460 = vdwg.mxu0
  %1461 = vmatprep.subr.mxu0 0.0
  %v1462 = vand.u32 %v76, 4294901760
  %1463 = vmatpush1.msra.mxu0 %v1462
  %1464 = vmatprep.subr.mxu0 0.0
  %v1465 = vand.u32 %v77, 4294901760
  %1466 = vmatpush1.msra.mxu0 %v1465
  %1467 = vmatprep.subr.mxu0 0.0
  %v1468 = vand.u32 %v78, 4294901760
  %1469 = vmatpush1.msra.mxu0 %v1468
  %1470 = vmatprep.subr.mxu0 0.0
  %v1471 = vand.u32 %v79, 4294901760
  %1472 = vmatpush1.msra.mxu0 %v1471
  %1473 = vmatprep.subr.mxu0 0.0
  %1474 = vmatpush1.msra.mxu0 0.0
  %1475 = vmatprep.subr.mxu0 0.0
  %1476 = vmatpush1.msra.mxu0 0.0
  %1477 = vmatprep.subr.mxu0 0.0
  %1478 = vmatpush1.msra.mxu0 0.0
  %1479 = vmatprep.subr.mxu0 0.0
  %1480 = vmatpush1.msra.mxu0 0.0
  %1481 = vmatprep.subr.mxu0 0.0
  %1482 = vmatpush1.msra.mxu0 0.0
  %1483 = vmatprep.subr.mxu0 0.0
  %1484 = vmatpush1.msra.mxu0 0.0
  %1485 = vmatprep.subr.mxu0 0.0
  %1486 = vmatpush1.msra.mxu0 0.0
  %1487 = vmatprep.subr.mxu0 0.0
  %1488 = vmatpush1.msra.mxu0 0.0
  %1489 = vmatprep.subr.mxu0 0.0
  %1490 = vmatpush1.msra.mxu0 0.0
  %1491 = vmatprep.subr.mxu0 0.0
  %1492 = vmatpush1.msra.mxu0 0.0
  %1493 = vmatprep.subr.mxu0 0.0
  %1494 = vmatpush1.msra.mxu0 0.0
  %1495 = vmatprep.subr.mxu0 0.0
  %1496 = vmatpush1.msra.mxu0 0.0
  %1497 = vmatprep.subr.mxu0 0.0
  %1498 = vmatpush1.msra.mxu0 0.0
  %1499 = vmatprep.subr.mxu0 0.0
  %1500 = vmatpush1.msra.mxu0 0.0
  %1501 = vmatprep.subr.mxu0 0.0
  %1502 = vmatpush1.msra.mxu0 0.0
  %1503 = vmatprep.subr.mxu0 0.0
  %1504 = vmatpush1.msra.mxu0 0.0
  %1505 = vmatprep.subr.mxu0 0.0
  %1506 = vmatpush1.msra.mxu0 0.0
  %1507 = vmatprep.subr.mxu0 0.0
  %1508 = vmatpush1.msra.mxu0 0.0
  %1509 = vmatprep.subr.mxu0 0.0
  %1510 = vmatpush1.msra.mxu0 0.0
  %1511 = vmatprep.subr.mxu0 0.0
  %1512 = vmatpush1.msra.mxu0 0.0
  %1513 = vmatprep.subr.mxu0 0.0
  %1514 = vmatpush1.msra.mxu0 0.0
  %1515 = vmatprep.subr.mxu0 0.0
  %1516 = vmatpush1.msra.mxu0 0.0
  %1517 = vmatprep.subr.mxu0 0.0
  %1518 = vmatpush1.msra.mxu0 0.0
  %1519 = vmatprep.subr.mxu0 0.0
  %1520 = vmatpush1.msra.mxu0 0.0
  %1521 = vmatprep.subr.mxu0 0.0
  %1522 = vmatpush1.msra.mxu0 0.0
  %1523 = vmatprep.subr.mxu0 0.0
  %1524 = vmatpush1.msra.mxu0 0.0
  %1525 = vmatprep.subr.mxu0 0.0
  %1526 = vmatpush1.msra.mxu0 0.0
  %1527 = vmatprep.subr.mxu0 0.0
  %1528 = vmatpush1.msra.mxu0 0.0
  %1529 = vmatprep.mubr.f32.mxu0 0.0
  %v1530 = vand.u32 %v89, 4294901760
  %1531 = vmatmul.mubr.f32.gmra.mrb[0].mxu0 %v1530
  %v1532 = vpop.f32.mrb[0].mxu0
  %v1533 = vadd.f32 %v1314, %v1532
  %v1534 = vpop.f32.mrb[0].mxu0
  %1535 = vmatprep.mubr.f32.mxu0 0.0
  %v1536 = vand.u32 %v92, 4294901760
  %1537 = vmatmul.mubr.f32.gmra.mrb[0].mxu0 %v1536
  %v1538 = vpop.f32.mrb[0].mxu0
  %v1539 = vadd.f32 %v1320, %v1538
  %v1540 = vpop.f32.mrb[0].mxu0
  %1541 = vmatprep.mubr.f32.mxu0 0.0
  %v1542 = vand.u32 %v95, 4294901760
  %1543 = vmatmul.mubr.f32.gmra.mrb[0].mxu0 %v1542
  %v1544 = vpop.f32.mrb[0].mxu0
  %v1545 = vadd.f32 %v1326, %v1544
  %v1546 = vpop.f32.mrb[0].mxu0
  %1547 = vmatprep.mubr.f32.mxu0 0.0
  %v1548 = vand.u32 %v98, 4294901760
  %1549 = vmatmul.mubr.f32.gmra.mrb[0].mxu0 %v1548
  %v1550 = vpop.f32.mrb[0].mxu0
  %v1551 = vadd.f32 %v1332, %v1550
  %v1552 = vpop.f32.mrb[0].mxu0
  %1553 = vmatprep.mubr.f32.mxu0 0.0
  %v1554 = vand.u32 %v101, 4294901760
  %1555 = vmatmul.mubr.f32.gmra.mrb[0].mxu0 %v1554
  %v1556 = vpop.f32.mrb[0].mxu0
  %v1557 = vadd.f32 %v1338, %v1556
  %v1558 = vpop.f32.mrb[0].mxu0
  %1559 = vmatprep.mubr.f32.mxu0 0.0
  %v1560 = vand.u32 %v104, 4294901760
  %1561 = vmatmul.mubr.f32.gmra.mrb[0].mxu0 %v1560
  %v1562 = vpop.f32.mrb[0].mxu0
  %v1563 = vadd.f32 %v1344, %v1562
  %v1564 = vpop.f32.mrb[0].mxu0
  %1565 = vmatprep.mubr.f32.mxu0 0.0
  %v1566 = vand.u32 %v107, 4294901760
  %1567 = vmatmul.mubr.f32.gmra.mrb[0].mxu0 %v1566
  %v1568 = vpop.f32.mrb[0].mxu0
  %v1569 = vadd.f32 %v1350, %v1568
  %v1570 = vpop.f32.mrb[0].mxu0
  %1571 = vmatprep.mubr.f32.mxu0 0.0
  %v1572 = vand.u32 %v110, 4294901760
  %1573 = vmatmul.mubr.f32.gmra.mrb[0].mxu0 %v1572
  %v1574 = vpop.f32.mrb[0].mxu0
  %v1575 = vadd.f32 %v1356, %v1574
  %v1576 = vpop.f32.mrb[0].mxu0
  %1577 = vmatprep.mubr.f32.mxu0 0.0
  %v1578 = vand.u32 %v113, 4294901760
  %1579 = vmatmul.mubr.f32.gmra.mrb[0].mxu0 %v1578
  %v1580 = vpop.f32.mrb[0].mxu0
  %v1581 = vadd.f32 %v1362, %v1580
  %v1582 = vpop.f32.mrb[0].mxu0
  %1583 = vmatprep.mubr.f32.mxu0 0.0
  %v1584 = vand.u32 %v116, 4294901760
  %1585 = vmatmul.mubr.f32.gmra.mrb[0].mxu0 %v1584
  %v1586 = vpop.f32.mrb[0].mxu0
  %v1587 = vadd.f32 %v1368, %v1586
  %v1588 = vpop.f32.mrb[0].mxu0
  %1589 = vmatprep.mubr.f32.mxu0 0.0
  %v1590 = vand.u32 %v119, 4294901760
  %1591 = vmatmul.mubr.f32.gmra.mrb[0].mxu0 %v1590
  %v1592 = vpop.f32.mrb[0].mxu0
  %v1593 = vadd.f32 %v1374, %v1592
  %v1594 = vpop.f32.mrb[0].mxu0
  %1595 = vmatprep.mubr.f32.mxu0 0.0
  %v1596 = vand.u32 %v122, 4294901760
  %1597 = vmatmul.mubr.f32.gmra.mrb[0].mxu0 %v1596
  %v1598 = vpop.f32.mrb[0].mxu0
  %v1599 = vadd.f32 %v1380, %v1598
  %v1600 = vpop.f32.mrb[0].mxu0
  %1601 = vmatprep.mubr.f32.mxu0 0.0
  %v1602 = vand.u32 %v125, 4294901760
  %1603 = vmatmul.mubr.f32.gmra.mrb[0].mxu0 %v1602
  %v1604 = vpop.f32.mrb[0].mxu0
  %v1605 = vadd.f32 %v1386, %v1604
  %v1606 = vpop.f32.mrb[0].mxu0
  %1607 = vmatprep.mubr.f32.mxu0 0.0
  %v1608 = vand.u32 %v128, 4294901760
  %1609 = vmatmul.mubr.f32.gmra.mrb[0].mxu0 %v1608
  %v1610 = vpop.f32.mrb[0].mxu0
  %v1611 = vadd.f32 %v1392, %v1610
  %v1612 = vpop.f32.mrb[0].mxu0
  %1613 = vmatprep.mubr.f32.mxu0 0.0
  %v1614 = vand.u32 %v131, 4294901760
  %1615 = vmatmul.mubr.f32.gmra.mrb[0].mxu0 %v1614
  %v1616 = vpop.f32.mrb[0].mxu0
  %v1617 = vadd.f32 %v1398, %v1616
  %v1618 = vpop.f32.mrb[0].mxu0
  %1619 = vmatprep.mubr.f32.mxu0 0.0
  %v1620 = vand.u32 %v134, 4294901760
  %1621 = vmatmul.mubr.f32.gmra.mrb[0].mxu0 %v1620
  %v1622 = vpop.f32.mrb[0].mxu0
  %v1623 = vadd.f32 %v1404, %v1622
  %v1624 = vpop.f32.mrb[0].mxu0
  %1625 = vmatprep.mubr.f32.mxu0 0.0
  %v1626 = vand.u32 %v137, 4294901760
  %1627 = vmatmul.mubr.f32.gmra.mrb[0].mxu0 %v1626
  %v1628 = vpop.f32.mrb[0].mxu0
  %v1629 = vadd.f32 %v1410, %v1628
  %v1630 = vpop.f32.mrb[0].mxu0
  %1631 = vmatprep.mubr.f32.mxu0 0.0
  %v1632 = vand.u32 %v140, 4294901760
  %1633 = vmatmul.mubr.f32.gmra.mrb[0].mxu0 %v1632
  %v1634 = vpop.f32.mrb[0].mxu0
  %v1635 = vadd.f32 %v1416, %v1634
  %v1636 = vpop.f32.mrb[0].mxu0
  %1637 = vmatprep.mubr.f32.mxu0 0.0
  %v1638 = vand.u32 %v143, 4294901760
  %1639 = vmatmul.mubr.f32.gmra.mrb[0].mxu0 %v1638
  %v1640 = vpop.f32.mrb[0].mxu0
  %v1641 = vadd.f32 %v1422, %v1640
  %v1642 = vpop.f32.mrb[0].mxu0
  %1643 = vmatprep.mubr.f32.mxu0 0.0
  %v1644 = vand.u32 %v146, 4294901760
  %1645 = vmatmul.mubr.f32.gmra.mrb[0].mxu0 %v1644
  %v1646 = vpop.f32.mrb[0].mxu0
  %v1647 = vadd.f32 %v1428, %v1646
  %v1648 = vpop.f32.mrb[0].mxu0
  %1649 = vmatprep.mubr.f32.mxu0 0.0
  %v1650 = vand.u32 %v149, 4294901760
  %1651 = vmatmul.mubr.f32.gmra.mrb[0].mxu0 %v1650
  %v1652 = vpop.f32.mrb[0].mxu0
  %v1653 = vadd.f32 %v1434, %v1652
  %v1654 = vpop.f32.mrb[0].mxu0
  %1655 = vmatprep.mubr.f32.mxu0 0.0
  %v1656 = vand.u32 %v152, 4294901760
  %1657 = vmatmul.mubr.f32.gmra.mrb[0].mxu0 %v1656
  %v1658 = vpop.f32.mrb[0].mxu0
  %v1659 = vadd.f32 %v1440, %v1658
  %v1660 = vpop.f32.mrb[0].mxu0
  %1661 = vmatprep.mubr.f32.mxu0 0.0
  %v1662 = vand.u32 %v155, 4294901760
  %1663 = vmatmul.mubr.f32.gmra.mrb[0].mxu0 %v1662
  %v1664 = vpop.f32.mrb[0].mxu0
  %v1665 = vadd.f32 %v1446, %v1664
  %v1666 = vpop.f32.mrb[0].mxu0
  %1667 = vmatprep.mubr.f32.mxu0 0.0
  %v1668 = vand.u32 %v158, 4294901760
  %1669 = vmatmul.mubr.f32.gmra.mrb[0].mxu0 %v1668
  %v1670 = vpop.f32.mrb[0].mxu0
  %v1671 = vadd.f32 %v1452, %v1670
  %v1672 = vpop.f32.mrb[0].mxu0
  %1673 = vmatprep.mubr.f32.mxu0 0.0
  %v1674 = vand.u32 %v161, 4294901760
  %1675 = vmatmul.mubr.f32.gmra.mrb[0].mxu0 %v1674
  %v1676 = vpop.f32.mrb[0].mxu0
  %v1677 = vadd.f32 %v1458, %v1676
  %v1678 = vpop.f32.mrb[0].mxu0
  %1679 = vdwg.mxu0
  %v1680 = vtanh.pop %v1533
  %v1681 = vtanh.pop %v1539
  %v1682 = vtanh.pop %v1545
  %v1683 = vtanh.pop %v1551
  %v1684 = vtanh.pop %v1557
  %v1685 = vtanh.pop %v1563
  %v1686 = vtanh.pop %v1569
  %v1687 = vtanh.pop %v1575
  %v1688 = vtanh.pop %v1581
  %v1689 = vtanh.pop %v1587
  %v1690 = vtanh.pop %v1593
  %v1691 = vtanh.pop %v1599
  %v1692 = vtanh.pop %v1605
  %v1693 = vtanh.pop %v1611
  %v1694 = vtanh.pop %v1617
  %v1695 = vtanh.pop %v1623
  %v1696 = vtanh.pop %v1629
  %v1697 = vtanh.pop %v1635
  %v1698 = vtanh.pop %v1641
  %v1699 = vtanh.pop %v1647
  %v1700 = vtanh.pop %v1653
  %v1701 = vtanh.pop %v1659
  %v1702 = vtanh.pop %v1665
  %v1703 = vtanh.pop %v1671
  %v1704 = vtanh.pop %v1677
  %v1705 = vld [vmem:[%s3] sm:$0xff]
  %v1706 = vld [vmem:[%s3 + $0x8] sm:$0xff]
  %v1707 = vld [vmem:[%s3 + $0x10] sm:$0xff]
  %v1708 = vld [vmem:[%s3 + $0x18] sm:$0xff]
  %v1709 = vld [vmem:[%s3 + $0x20] sm:$0xff]
  %v1710 = vld [vmem:[%s3 + $0x28] sm:$0xff]
  %v1711 = vld [vmem:[%s3 + $0x30] sm:$0xff]
  %v1712 = vld [vmem:[%s3 + $0x38] sm:$0xff]
  %v1713 = vld [vmem:[%s4] sm:$0x1]
  %v1715 = vlaneseq
  %v1716 = vshrl.u32 %v1715, 7
  %v1717 = vsub.s32 0, %v1716
  %v1718 = vrot.slane %v1713, %v1717
  %vm1720 = vcmask 523264
  %v1722 = vsel %vm1720, %v1680, 0
  %v1725 = vsel %vm1720, %v1681, 0
  %v1728 = vsel %vm1720, %v1682, 0
  %v1731 = vsel %vm1720, %v1683, 0
  %v1734 = vsel %vm1720, %v1684, 0
  %v1737 = vsel %vm1720, %v1685, 0
  %v1740 = vsel %vm1720, %v1686, 0
  %v1743 = vsel %vm1720, %v1687, 0
  %v1746 = vsel %vm1720, %v1688, 0
  %v1749 = vsel %vm1720, %v1689, 0
  %v1752 = vsel %vm1720, %v1690, 0
  %v1755 = vsel %vm1720, %v1691, 0
  %v1758 = vsel %vm1720, %v1692, 0
  %v1761 = vsel %vm1720, %v1693, 0
  %v1764 = vsel %vm1720, %v1694, 0
  %v1767 = vsel %vm1720, %v1695, 0
  %v1770 = vsel %vm1720, %v1696, 0
  %v1773 = vsel %vm1720, %v1697, 0
  %v1776 = vsel %vm1720, %v1698, 0
  %v1779 = vsel %vm1720, %v1699, 0
  %v1782 = vsel %vm1720, %v1700, 0
  %v1785 = vsel %vm1720, %v1701, 0
  %v1788 = vsel %vm1720, %v1702, 0
  %v1791 = vsel %vm1720, %v1703, 0
  %v1794 = vsel %vm1720, %v1704, 0
  %1796 = vmatprep.subr.mxu0 0.0
  %v1797 = vand.u32 %v1705, 4294901760
  %1798 = vmatpush1.msra.mxu0 %v1797
  %1799 = vmatprep.subr.mxu0 0.0
  %v1800 = vand.u32 %v1706, 4294901760
  %1801 = vmatpush1.msra.mxu0 %v1800
  %1802 = vmatprep.subr.mxu0 0.0
  %v1803 = vand.u32 %v1707, 4294901760
  %1804 = vmatpush1.msra.mxu0 %v1803
  %1805 = vmatprep.subr.mxu0 0.0
  %v1806 = vand.u32 %v1708, 4294901760
  %1807 = vmatpush1.msra.mxu0 %v1806
  %1808 = vmatprep.subr.mxu0 0.0
  %v1809 = vand.u32 %v1709, 4294901760
  %1810 = vmatpush1.msra.mxu0 %v1809
  %1811 = vmatprep.subr.mxu0 0.0
  %v1812 = vand.u32 %v1710, 4294901760
  %1813 = vmatpush1.msra.mxu0 %v1812
  %1814 = vmatprep.subr.mxu0 0.0
  %v1815 = vand.u32 %v1711, 4294901760
  %1816 = vmatpush1.msra.mxu0 %v1815
  %1817 = vmatprep.subr.mxu0 0.0
  %v1818 = vand.u32 %v1712, 4294901760
  %1819 = vmatpush1.msra.mxu0 %v1818
  %1820 = vmatprep.subr.mxu0 0.0
  %1821 = vmatpush1.msra.mxu0 0.0
  %1822 = vmatprep.subr.mxu0 0.0
  %1823 = vmatpush1.msra.mxu0 0.0
  %1824 = vmatprep.subr.mxu0 0.0
  %1825 = vmatpush1.msra.mxu0 0.0
  %1826 = vmatprep.subr.mxu0 0.0
  %1827 = vmatpush1.msra.mxu0 0.0
  %1828 = vmatprep.subr.mxu0 0.0
  %1829 = vmatpush1.msra.mxu0 0.0
  %1830 = vmatprep.subr.mxu0 0.0
  %1831 = vmatpush1.msra.mxu0 0.0
  %1832 = vmatprep.subr.mxu0 0.0
  %1833 = vmatpush1.msra.mxu0 0.0
  %1834 = vmatprep.subr.mxu0 0.0
  %1835 = vmatpush1.msra.mxu0 0.0
  %1836 = vmatprep.subr.mxu0 0.0
  %1837 = vmatpush1.msra.mxu0 0.0
  %1838 = vmatprep.subr.mxu0 0.0
  %1839 = vmatpush1.msra.mxu0 0.0
  %1840 = vmatprep.subr.mxu0 0.0
  %1841 = vmatpush1.msra.mxu0 0.0
  %1842 = vmatprep.subr.mxu0 0.0
  %1843 = vmatpush1.msra.mxu0 0.0
  %1844 = vmatprep.subr.mxu0 0.0
  %1845 = vmatpush1.msra.mxu0 0.0
  %1846 = vmatprep.subr.mxu0 0.0
  %1847 = vmatpush1.msra.mxu0 0.0
  %1848 = vmatprep.subr.mxu0 0.0
  %1849 = vmatpush1.msra.mxu0 0.0
  %1850 = vmatprep.subr.mxu0 0.0
  %1851 = vmatpush1.msra.mxu0 0.0
  %1852 = vmatprep.subr.mxu0 0.0
  %1853 = vmatpush1.msra.mxu0 0.0
  %1854 = vmatprep.subr.mxu0 0.0
  %1855 = vmatpush1.msra.mxu0 0.0
  %1856 = vmatprep.subr.mxu0 0.0
  %1857 = vmatpush1.msra.mxu0 0.0
  %1858 = vmatprep.subr.mxu0 0.0
  %1859 = vmatpush1.msra.mxu0 0.0
  %1860 = vmatprep.subr.mxu0 0.0
  %1861 = vmatpush1.msra.mxu0 0.0
  %1862 = vmatprep.subr.mxu0 0.0
  %1863 = vmatpush1.msra.mxu0 0.0
  %1864 = vmatprep.subr.mxu0 0.0
  %1865 = vmatpush1.msra.mxu0 0.0
  %1866 = vmatprep.subr.mxu0 0.0
  %1867 = vmatpush1.msra.mxu0 0.0
  %1868 = vmatprep.mubr.f32.mxu0 0.0
  %v1869 = vand.u32 %v1722, 4294901760
  %v1870 = vsub.f32 %v1722, %v1869
  %v1871 = vand.u32 %v1870, 4294901760
  %v1872 = vsub.f32 %v1870, %v1871
  %v1873 = vand.u32 %v1872, 4294901760
  %1874 = vmatmul.mubr.f32.gmra.mrb[0].mxu0 %v1873
  %v1875 = vpop.f32.mrb[0].mxu0
  %v1876 = vadd.f32 %v1718, %v1875
  %v1877 = vpop.f32.mrb[0].mxu0
  %1878 = vmatprep.mubr.f32.mxu0 0.0
  %v1879 = vand.u32 %v1725, 4294901760
  %v1880 = vsub.f32 %v1725, %v1879
  %v1881 = vand.u32 %v1880, 4294901760
  %v1882 = vsub.f32 %v1880, %v1881
  %v1883 = vand.u32 %v1882, 4294901760
  %1884 = vmatmul.mubr.f32.gmra.mrb[0].mxu0 %v1883
  %v1885 = vpop.f32.mrb[0].mxu0
  %v1886 = vadd.f32 %v1718, %v1885
  %v1887 = vpop.f32.mrb[0].mxu0
  %1888 = vmatprep.mubr.f32.mxu0 0.0
  %v1889 = vand.u32 %v1728, 4294901760
  %v1890 = vsub.f32 %v1728, %v1889
  %v1891 = vand.u32 %v1890, 4294901760
  %v1892 = vsub.f32 %v1890, %v1891
  %v1893 = vand.u32 %v1892, 4294901760
  %1894 = vmatmul.mubr.f32.gmra.mrb[0].mxu0 %v1893
  %v1895 = vpop.f32.mrb[0].mxu0
  %v1896 = vadd.f32 %v1718, %v1895
  %v1897 = vpop.f32.mrb[0].mxu0
  %1898 = vmatprep.mubr.f32.mxu0 0.0
  %v1899 = vand.u32 %v1731, 4294901760
  %v1900 = vsub.f32 %v1731, %v1899
  %v1901 = vand.u32 %v1900, 4294901760
  %v1902 = vsub.f32 %v1900, %v1901
  %v1903 = vand.u32 %v1902, 4294901760
  %1904 = vmatmul.mubr.f32.gmra.mrb[0].mxu0 %v1903
  %v1905 = vpop.f32.mrb[0].mxu0
  %v1906 = vadd.f32 %v1718, %v1905
  %v1907 = vpop.f32.mrb[0].mxu0
  %1908 = vmatprep.mubr.f32.mxu0 0.0
  %v1909 = vand.u32 %v1734, 4294901760
  %v1910 = vsub.f32 %v1734, %v1909
  %v1911 = vand.u32 %v1910, 4294901760
  %v1912 = vsub.f32 %v1910, %v1911
  %v1913 = vand.u32 %v1912, 4294901760
  %1914 = vmatmul.mubr.f32.gmra.mrb[0].mxu0 %v1913
  %v1915 = vpop.f32.mrb[0].mxu0
  %v1916 = vadd.f32 %v1718, %v1915
  %v1917 = vpop.f32.mrb[0].mxu0
  %1918 = vmatprep.mubr.f32.mxu0 0.0
  %v1919 = vand.u32 %v1737, 4294901760
  %v1920 = vsub.f32 %v1737, %v1919
  %v1921 = vand.u32 %v1920, 4294901760
  %v1922 = vsub.f32 %v1920, %v1921
  %v1923 = vand.u32 %v1922, 4294901760
  %1924 = vmatmul.mubr.f32.gmra.mrb[0].mxu0 %v1923
  %v1925 = vpop.f32.mrb[0].mxu0
  %v1926 = vadd.f32 %v1718, %v1925
  %v1927 = vpop.f32.mrb[0].mxu0
  %1928 = vmatprep.mubr.f32.mxu0 0.0
  %v1929 = vand.u32 %v1740, 4294901760
  %v1930 = vsub.f32 %v1740, %v1929
  %v1931 = vand.u32 %v1930, 4294901760
  %v1932 = vsub.f32 %v1930, %v1931
  %v1933 = vand.u32 %v1932, 4294901760
  %1934 = vmatmul.mubr.f32.gmra.mrb[0].mxu0 %v1933
  %v1935 = vpop.f32.mrb[0].mxu0
  %v1936 = vadd.f32 %v1718, %v1935
  %v1937 = vpop.f32.mrb[0].mxu0
  %1938 = vmatprep.mubr.f32.mxu0 0.0
  %v1939 = vand.u32 %v1743, 4294901760
  %v1940 = vsub.f32 %v1743, %v1939
  %v1941 = vand.u32 %v1940, 4294901760
  %v1942 = vsub.f32 %v1940, %v1941
  %v1943 = vand.u32 %v1942, 4294901760
  %1944 = vmatmul.mubr.f32.gmra.mrb[0].mxu0 %v1943
  %v1945 = vpop.f32.mrb[0].mxu0
  %v1946 = vadd.f32 %v1718, %v1945
  %v1947 = vpop.f32.mrb[0].mxu0
  %1948 = vmatprep.mubr.f32.mxu0 0.0
  %v1949 = vand.u32 %v1746, 4294901760
  %v1950 = vsub.f32 %v1746, %v1949
  %v1951 = vand.u32 %v1950, 4294901760
  %v1952 = vsub.f32 %v1950, %v1951
  %v1953 = vand.u32 %v1952, 4294901760
  %1954 = vmatmul.mubr.f32.gmra.mrb[0].mxu0 %v1953
  %v1955 = vpop.f32.mrb[0].mxu0
  %v1956 = vadd.f32 %v1718, %v1955
  %v1957 = vpop.f32.mrb[0].mxu0
  %1958 = vmatprep.mubr.f32.mxu0 0.0
  %v1959 = vand.u32 %v1749, 4294901760
  %v1960 = vsub.f32 %v1749, %v1959
  %v1961 = vand.u32 %v1960, 4294901760
  %v1962 = vsub.f32 %v1960, %v1961
  %v1963 = vand.u32 %v1962, 4294901760
  %1964 = vmatmul.mubr.f32.gmra.mrb[0].mxu0 %v1963
  %v1965 = vpop.f32.mrb[0].mxu0
  %v1966 = vadd.f32 %v1718, %v1965
  %v1967 = vpop.f32.mrb[0].mxu0
  %1968 = vmatprep.mubr.f32.mxu0 0.0
  %v1969 = vand.u32 %v1752, 4294901760
  %v1970 = vsub.f32 %v1752, %v1969
  %v1971 = vand.u32 %v1970, 4294901760
  %v1972 = vsub.f32 %v1970, %v1971
  %v1973 = vand.u32 %v1972, 4294901760
  %1974 = vmatmul.mubr.f32.gmra.mrb[0].mxu0 %v1973
  %v1975 = vpop.f32.mrb[0].mxu0
  %v1976 = vadd.f32 %v1718, %v1975
  %v1977 = vpop.f32.mrb[0].mxu0
  %1978 = vmatprep.mubr.f32.mxu0 0.0
  %v1979 = vand.u32 %v1755, 4294901760
  %v1980 = vsub.f32 %v1755, %v1979
  %v1981 = vand.u32 %v1980, 4294901760
  %v1982 = vsub.f32 %v1980, %v1981
  %v1983 = vand.u32 %v1982, 4294901760
  %1984 = vmatmul.mubr.f32.gmra.mrb[0].mxu0 %v1983
  %v1985 = vpop.f32.mrb[0].mxu0
  %v1986 = vadd.f32 %v1718, %v1985
  %v1987 = vpop.f32.mrb[0].mxu0
  %1988 = vmatprep.mubr.f32.mxu0 0.0
  %v1989 = vand.u32 %v1758, 4294901760
  %v1990 = vsub.f32 %v1758, %v1989
  %v1991 = vand.u32 %v1990, 4294901760
  %v1992 = vsub.f32 %v1990, %v1991
  %v1993 = vand.u32 %v1992, 4294901760
  %1994 = vmatmul.mubr.f32.gmra.mrb[0].mxu0 %v1993
  %v1995 = vpop.f32.mrb[0].mxu0
  %v1996 = vadd.f32 %v1718, %v1995
  %v1997 = vpop.f32.mrb[0].mxu0
  %1998 = vmatprep.mubr.f32.mxu0 0.0
  %v1999 = vand.u32 %v1761, 4294901760
  %v2000 = vsub.f32 %v1761, %v1999
  %v2001 = vand.u32 %v2000, 4294901760
  %v2002 = vsub.f32 %v2000, %v2001
  %v2003 = vand.u32 %v2002, 4294901760
  %2004 = vmatmul.mubr.f32.gmra.mrb[0].mxu0 %v2003
  %v2005 = vpop.f32.mrb[0].mxu0
  %v2006 = vadd.f32 %v1718, %v2005
  %v2007 = vpop.f32.mrb[0].mxu0
  %2008 = vmatprep.mubr.f32.mxu0 0.0
  %v2009 = vand.u32 %v1764, 4294901760
  %v2010 = vsub.f32 %v1764, %v2009
  %v2011 = vand.u32 %v2010, 4294901760
  %v2012 = vsub.f32 %v2010, %v2011
  %v2013 = vand.u32 %v2012, 4294901760
  %2014 = vmatmul.mubr.f32.gmra.mrb[0].mxu0 %v2013
  %v2015 = vpop.f32.mrb[0].mxu0
  %v2016 = vadd.f32 %v1718, %v2015
  %v2017 = vpop.f32.mrb[0].mxu0
  %2018 = vmatprep.mubr.f32.mxu0 0.0
  %v2019 = vand.u32 %v1767, 4294901760
  %v2020 = vsub.f32 %v1767, %v2019
  %v2021 = vand.u32 %v2020, 4294901760
  %v2022 = vsub.f32 %v2020, %v2021
  %v2023 = vand.u32 %v2022, 4294901760
  %2024 = vmatmul.mubr.f32.gmra.mrb[0].mxu0 %v2023
  %v2025 = vpop.f32.mrb[0].mxu0
  %v2026 = vadd.f32 %v1718, %v2025
  %v2027 = vpop.f32.mrb[0].mxu0
  %2028 = vmatprep.mubr.f32.mxu0 0.0
  %v2029 = vand.u32 %v1770, 4294901760
  %v2030 = vsub.f32 %v1770, %v2029
  %v2031 = vand.u32 %v2030, 4294901760
  %v2032 = vsub.f32 %v2030, %v2031
  %v2033 = vand.u32 %v2032, 4294901760
  %2034 = vmatmul.mubr.f32.gmra.mrb[0].mxu0 %v2033
  %v2035 = vpop.f32.mrb[0].mxu0
  %v2036 = vadd.f32 %v1718, %v2035
  %v2037 = vpop.f32.mrb[0].mxu0
  %2038 = vmatprep.mubr.f32.mxu0 0.0
  %v2039 = vand.u32 %v1773, 4294901760
  %v2040 = vsub.f32 %v1773, %v2039
  %v2041 = vand.u32 %v2040, 4294901760
  %v2042 = vsub.f32 %v2040, %v2041
  %v2043 = vand.u32 %v2042, 4294901760
  %2044 = vmatmul.mubr.f32.gmra.mrb[0].mxu0 %v2043
  %v2045 = vpop.f32.mrb[0].mxu0
  %v2046 = vadd.f32 %v1718, %v2045
  %v2047 = vpop.f32.mrb[0].mxu0
  %2048 = vmatprep.mubr.f32.mxu0 0.0
  %v2049 = vand.u32 %v1776, 4294901760
  %v2050 = vsub.f32 %v1776, %v2049
  %v2051 = vand.u32 %v2050, 4294901760
  %v2052 = vsub.f32 %v2050, %v2051
  %v2053 = vand.u32 %v2052, 4294901760
  %2054 = vmatmul.mubr.f32.gmra.mrb[0].mxu0 %v2053
  %v2055 = vpop.f32.mrb[0].mxu0
  %v2056 = vadd.f32 %v1718, %v2055
  %v2057 = vpop.f32.mrb[0].mxu0
  %2058 = vmatprep.mubr.f32.mxu0 0.0
  %v2059 = vand.u32 %v1779, 4294901760
  %v2060 = vsub.f32 %v1779, %v2059
  %v2061 = vand.u32 %v2060, 4294901760
  %v2062 = vsub.f32 %v2060, %v2061
  %v2063 = vand.u32 %v2062, 4294901760
  %2064 = vmatmul.mubr.f32.gmra.mrb[0].mxu0 %v2063
  %v2065 = vpop.f32.mrb[0].mxu0
  %v2066 = vadd.f32 %v1718, %v2065
  %v2067 = vpop.f32.mrb[0].mxu0
  %2068 = vmatprep.mubr.f32.mxu0 0.0
  %v2069 = vand.u32 %v1782, 4294901760
  %v2070 = vsub.f32 %v1782, %v2069
  %v2071 = vand.u32 %v2070, 4294901760
  %v2072 = vsub.f32 %v2070, %v2071
  %v2073 = vand.u32 %v2072, 4294901760
  %2074 = vmatmul.mubr.f32.gmra.mrb[0].mxu0 %v2073
  %v2075 = vpop.f32.mrb[0].mxu0
  %v2076 = vadd.f32 %v1718, %v2075
  %v2077 = vpop.f32.mrb[0].mxu0
  %2078 = vmatprep.mubr.f32.mxu0 0.0
  %v2079 = vand.u32 %v1785, 4294901760
  %v2080 = vsub.f32 %v1785, %v2079
  %v2081 = vand.u32 %v2080, 4294901760
  %v2082 = vsub.f32 %v2080, %v2081
  %v2083 = vand.u32 %v2082, 4294901760
  %2084 = vmatmul.mubr.f32.gmra.mrb[0].mxu0 %v2083
  %v2085 = vpop.f32.mrb[0].mxu0
  %v2086 = vadd.f32 %v1718, %v2085
  %v2087 = vpop.f32.mrb[0].mxu0
  %2088 = vmatprep.mubr.f32.mxu0 0.0
  %v2089 = vand.u32 %v1788, 4294901760
  %v2090 = vsub.f32 %v1788, %v2089
  %v2091 = vand.u32 %v2090, 4294901760
  %v2092 = vsub.f32 %v2090, %v2091
  %v2093 = vand.u32 %v2092, 4294901760
  %2094 = vmatmul.mubr.f32.gmra.mrb[0].mxu0 %v2093
  %v2095 = vpop.f32.mrb[0].mxu0
  %v2096 = vadd.f32 %v1718, %v2095
  %v2097 = vpop.f32.mrb[0].mxu0
  %2098 = vmatprep.mubr.f32.mxu0 0.0
  %v2099 = vand.u32 %v1791, 4294901760
  %v2100 = vsub.f32 %v1791, %v2099
  %v2101 = vand.u32 %v2100, 4294901760
  %v2102 = vsub.f32 %v2100, %v2101
  %v2103 = vand.u32 %v2102, 4294901760
  %2104 = vmatmul.mubr.f32.gmra.mrb[0].mxu0 %v2103
  %v2105 = vpop.f32.mrb[0].mxu0
  %v2106 = vadd.f32 %v1718, %v2105
  %v2107 = vpop.f32.mrb[0].mxu0
  %2108 = vmatprep.mubr.f32.mxu0 0.0
  %v2109 = vand.u32 %v1794, 4294901760
  %v2110 = vsub.f32 %v1794, %v2109
  %v2111 = vand.u32 %v2110, 4294901760
  %v2112 = vsub.f32 %v2110, %v2111
  %v2113 = vand.u32 %v2112, 4294901760
  %2114 = vmatmul.mubr.f32.gmra.mrb[0].mxu0 %v2113
  %v2115 = vpop.f32.mrb[0].mxu0
  %v2116 = vadd.f32 %v1718, %v2115
  %v2117 = vpop.f32.mrb[0].mxu0
  %2118 = vdwg.mxu0
  %2119 = vmatprep.subr.mxu0 0.0
  %v2120 = vand.u32 %v1705, 4294901760
  %v2121 = vsub.f32 %v1705, %v2120
  %v2122 = vand.u32 %v2121, 4294901760
  %v2123 = vsub.f32 %v2121, %v2122
  %v2124 = vand.u32 %v2123, 4294901760
  %2125 = vmatpush1.msra.mxu0 %v2124
  %2126 = vmatprep.subr.mxu0 0.0
  %v2127 = vand.u32 %v1706, 4294901760
  %v2128 = vsub.f32 %v1706, %v2127
  %v2129 = vand.u32 %v2128, 4294901760
  %v2130 = vsub.f32 %v2128, %v2129
  %v2131 = vand.u32 %v2130, 4294901760
  %2132 = vmatpush1.msra.mxu0 %v2131
  %2133 = vmatprep.subr.mxu0 0.0
  %v2134 = vand.u32 %v1707, 4294901760
  %v2135 = vsub.f32 %v1707, %v2134
  %v2136 = vand.u32 %v2135, 4294901760
  %v2137 = vsub.f32 %v2135, %v2136
  %v2138 = vand.u32 %v2137, 4294901760
  %2139 = vmatpush1.msra.mxu0 %v2138
  %2140 = vmatprep.subr.mxu0 0.0
  %v2141 = vand.u32 %v1708, 4294901760
  %v2142 = vsub.f32 %v1708, %v2141
  %v2143 = vand.u32 %v2142, 4294901760
  %v2144 = vsub.f32 %v2142, %v2143
  %v2145 = vand.u32 %v2144, 4294901760
  %2146 = vmatpush1.msra.mxu0 %v2145
  %2147 = vmatprep.subr.mxu0 0.0
  %v2148 = vand.u32 %v1709, 4294901760
  %v2149 = vsub.f32 %v1709, %v2148
  %v2150 = vand.u32 %v2149, 4294901760
  %v2151 = vsub.f32 %v2149, %v2150
  %v2152 = vand.u32 %v2151, 4294901760
  %2153 = vmatpush1.msra.mxu0 %v2152
  %2154 = vmatprep.subr.mxu0 0.0
  %v2155 = vand.u32 %v1710, 4294901760
  %v2156 = vsub.f32 %v1710, %v2155
  %v2157 = vand.u32 %v2156, 4294901760
  %v2158 = vsub.f32 %v2156, %v2157
  %v2159 = vand.u32 %v2158, 4294901760
  %2160 = vmatpush1.msra.mxu0 %v2159
  %2161 = vmatprep.subr.mxu0 0.0
  %v2162 = vand.u32 %v1711, 4294901760
  %v2163 = vsub.f32 %v1711, %v2162
  %v2164 = vand.u32 %v2163, 4294901760
  %v2165 = vsub.f32 %v2163, %v2164
  %v2166 = vand.u32 %v2165, 4294901760
  %2167 = vmatpush1.msra.mxu0 %v2166
  %2168 = vmatprep.subr.mxu0 0.0
  %v2169 = vand.u32 %v1712, 4294901760
  %v2170 = vsub.f32 %v1712, %v2169
  %v2171 = vand.u32 %v2170, 4294901760
  %v2172 = vsub.f32 %v2170, %v2171
  %v2173 = vand.u32 %v2172, 4294901760
  %2174 = vmatpush1.msra.mxu0 %v2173
  %2175 = vmatprep.subr.mxu0 0.0
  %2176 = vmatpush1.msra.mxu0 0.0
  %2177 = vmatprep.subr.mxu0 0.0
  %2178 = vmatpush1.msra.mxu0 0.0
  %2179 = vmatprep.subr.mxu0 0.0
  %2180 = vmatpush1.msra.mxu0 0.0
  %2181 = vmatprep.subr.mxu0 0.0
  %2182 = vmatpush1.msra.mxu0 0.0
  %2183 = vmatprep.subr.mxu0 0.0
  %2184 = vmatpush1.msra.mxu0 0.0
  %2185 = vmatprep.subr.mxu0 0.0
  %2186 = vmatpush1.msra.mxu0 0.0
  %2187 = vmatprep.subr.mxu0 0.0
  %2188 = vmatpush1.msra.mxu0 0.0
  %2189 = vmatprep.subr.mxu0 0.0
  %2190 = vmatpush1.msra.mxu0 0.0
  %2191 = vmatprep.subr.mxu0 0.0
  %2192 = vmatpush1.msra.mxu0 0.0
  %2193 = vmatprep.subr.mxu0 0.0
  %2194 = vmatpush1.msra.mxu0 0.0
  %2195 = vmatprep.subr.mxu0 0.0
  %2196 = vmatpush1.msra.mxu0 0.0
  %2197 = vmatprep.subr.mxu0 0.0
  %2198 = vmatpush1.msra.mxu0 0.0
  %2199 = vmatprep.subr.mxu0 0.0
  %2200 = vmatpush1.msra.mxu0 0.0
  %2201 = vmatprep.subr.mxu0 0.0
  %2202 = vmatpush1.msra.mxu0 0.0
  %2203 = vmatprep.subr.mxu0 0.0
  %2204 = vmatpush1.msra.mxu0 0.0
  %2205 = vmatprep.subr.mxu0 0.0
  %2206 = vmatpush1.msra.mxu0 0.0
  %2207 = vmatprep.subr.mxu0 0.0
  %2208 = vmatpush1.msra.mxu0 0.0
  %2209 = vmatprep.subr.mxu0 0.0
  %2210 = vmatpush1.msra.mxu0 0.0
  %2211 = vmatprep.subr.mxu0 0.0
  %2212 = vmatpush1.msra.mxu0 0.0
  %2213 = vmatprep.subr.mxu0 0.0
  %2214 = vmatpush1.msra.mxu0 0.0
  %2215 = vmatprep.subr.mxu0 0.0
  %2216 = vmatpush1.msra.mxu0 0.0
  %2217 = vmatprep.subr.mxu0 0.0
  %2218 = vmatpush1.msra.mxu0 0.0
  %2219 = vmatprep.subr.mxu0 0.0
  %2220 = vmatpush1.msra.mxu0 0.0
  %2221 = vmatprep.subr.mxu0 0.0
  %2222 = vmatpush1.msra.mxu0 0.0
  %2223 = vmatprep.mubr.f32.mxu0 0.0
  %v2224 = vand.u32 %v1722, 4294901760
  %2225 = vmatmul.mubr.f32.gmra.mrb[0].mxu0 %v2224
  %v2226 = vpop.f32.mrb[0].mxu0
  %v2227 = vadd.f32 %v1876, %v2226
  %v2228 = vpop.f32.mrb[0].mxu0
  %2229 = vmatprep.mubr.f32.mxu0 0.0
  %v2230 = vand.u32 %v1725, 4294901760
  %2231 = vmatmul.mubr.f32.gmra.mrb[0].mxu0 %v2230
  %v2232 = vpop.f32.mrb[0].mxu0
  %v2233 = vadd.f32 %v1886, %v2232
  %v2234 = vpop.f32.mrb[0].mxu0
  %2235 = vmatprep.mubr.f32.mxu0 0.0
  %v2236 = vand.u32 %v1728, 4294901760
  %2237 = vmatmul.mubr.f32.gmra.mrb[0].mxu0 %v2236
  %v2238 = vpop.f32.mrb[0].mxu0
  %v2239 = vadd.f32 %v1896, %v2238
  %v2240 = vpop.f32.mrb[0].mxu0
  %2241 = vmatprep.mubr.f32.mxu0 0.0
  %v2242 = vand.u32 %v1731, 4294901760
  %2243 = vmatmul.mubr.f32.gmra.mrb[0].mxu0 %v2242
  %v2244 = vpop.f32.mrb[0].mxu0
  %v2245 = vadd.f32 %v1906, %v2244
  %v2246 = vpop.f32.mrb[0].mxu0
  %2247 = vmatprep.mubr.f32.mxu0 0.0
  %v2248 = vand.u32 %v1734, 4294901760
  %2249 = vmatmul.mubr.f32.gmra.mrb[0].mxu0 %v2248
  %v2250 = vpop.f32.mrb[0].mxu0
  %v2251 = vadd.f32 %v1916, %v2250
  %v2252 = vpop.f32.mrb[0].mxu0
  %2253 = vmatprep.mubr.f32.mxu0 0.0
  %v2254 = vand.u32 %v1737, 4294901760
  %2255 = vmatmul.mubr.f32.gmra.mrb[0].mxu0 %v2254
  %v2256 = vpop.f32.mrb[0].mxu0
  %v2257 = vadd.f32 %v1926, %v2256
  %v2258 = vpop.f32.mrb[0].mxu0
  %2259 = vmatprep.mubr.f32.mxu0 0.0
  %v2260 = vand.u32 %v1740, 4294901760
  %2261 = vmatmul.mubr.f32.gmra.mrb[0].mxu0 %v2260
  %v2262 = vpop.f32.mrb[0].mxu0
  %v2263 = vadd.f32 %v1936, %v2262
  %v2264 = vpop.f32.mrb[0].mxu0
  %2265 = vmatprep.mubr.f32.mxu0 0.0
  %v2266 = vand.u32 %v1743, 4294901760
  %2267 = vmatmul.mubr.f32.gmra.mrb[0].mxu0 %v2266
  %v2268 = vpop.f32.mrb[0].mxu0
  %v2269 = vadd.f32 %v1946, %v2268
  %v2270 = vpop.f32.mrb[0].mxu0
  %2271 = vmatprep.mubr.f32.mxu0 0.0
  %v2272 = vand.u32 %v1746, 4294901760
  %2273 = vmatmul.mubr.f32.gmra.mrb[0].mxu0 %v2272
  %v2274 = vpop.f32.mrb[0].mxu0
  %v2275 = vadd.f32 %v1956, %v2274
  %v2276 = vpop.f32.mrb[0].mxu0
  %2277 = vmatprep.mubr.f32.mxu0 0.0
  %v2278 = vand.u32 %v1749, 4294901760
  %2279 = vmatmul.mubr.f32.gmra.mrb[0].mxu0 %v2278
  %v2280 = vpop.f32.mrb[0].mxu0
  %v2281 = vadd.f32 %v1966, %v2280
  %v2282 = vpop.f32.mrb[0].mxu0
  %2283 = vmatprep.mubr.f32.mxu0 0.0
  %v2284 = vand.u32 %v1752, 4294901760
  %2285 = vmatmul.mubr.f32.gmra.mrb[0].mxu0 %v2284
  %v2286 = vpop.f32.mrb[0].mxu0
  %v2287 = vadd.f32 %v1976, %v2286
  %v2288 = vpop.f32.mrb[0].mxu0
  %2289 = vmatprep.mubr.f32.mxu0 0.0
  %v2290 = vand.u32 %v1755, 4294901760
  %2291 = vmatmul.mubr.f32.gmra.mrb[0].mxu0 %v2290
  %v2292 = vpop.f32.mrb[0].mxu0
  %v2293 = vadd.f32 %v1986, %v2292
  %v2294 = vpop.f32.mrb[0].mxu0
  %2295 = vmatprep.mubr.f32.mxu0 0.0
  %v2296 = vand.u32 %v1758, 4294901760
  %2297 = vmatmul.mubr.f32.gmra.mrb[0].mxu0 %v2296
  %v2298 = vpop.f32.mrb[0].mxu0
  %v2299 = vadd.f32 %v1996, %v2298
  %v2300 = vpop.f32.mrb[0].mxu0
  %2301 = vmatprep.mubr.f32.mxu0 0.0
  %v2302 = vand.u32 %v1761, 4294901760
  %2303 = vmatmul.mubr.f32.gmra.mrb[0].mxu0 %v2302
  %v2304 = vpop.f32.mrb[0].mxu0
  %v2305 = vadd.f32 %v2006, %v2304
  %v2306 = vpop.f32.mrb[0].mxu0
  %2307 = vmatprep.mubr.f32.mxu0 0.0
  %v2308 = vand.u32 %v1764, 4294901760
  %2309 = vmatmul.mubr.f32.gmra.mrb[0].mxu0 %v2308
  %v2310 = vpop.f32.mrb[0].mxu0
  %v2311 = vadd.f32 %v2016, %v2310
  %v2312 = vpop.f32.mrb[0].mxu0
  %2313 = vmatprep.mubr.f32.mxu0 0.0
  %v2314 = vand.u32 %v1767, 4294901760
  %2315 = vmatmul.mubr.f32.gmra.mrb[0].mxu0 %v2314
  %v2316 = vpop.f32.mrb[0].mxu0
  %v2317 = vadd.f32 %v2026, %v2316
  %v2318 = vpop.f32.mrb[0].mxu0
  %2319 = vmatprep.mubr.f32.mxu0 0.0
  %v2320 = vand.u32 %v1770, 4294901760
  %2321 = vmatmul.mubr.f32.gmra.mrb[0].mxu0 %v2320
  %v2322 = vpop.f32.mrb[0].mxu0
  %v2323 = vadd.f32 %v2036, %v2322
  %v2324 = vpop.f32.mrb[0].mxu0
  %2325 = vmatprep.mubr.f32.mxu0 0.0
  %v2326 = vand.u32 %v1773, 4294901760
  %2327 = vmatmul.mubr.f32.gmra.mrb[0].mxu0 %v2326
  %v2328 = vpop.f32.mrb[0].mxu0
  %v2329 = vadd.f32 %v2046, %v2328
  %v2330 = vpop.f32.mrb[0].mxu0
  %2331 = vmatprep.mubr.f32.mxu0 0.0
  %v2332 = vand.u32 %v1776, 4294901760
  %2333 = vmatmul.mubr.f32.gmra.mrb[0].mxu0 %v2332
  %v2334 = vpop.f32.mrb[0].mxu0
  %v2335 = vadd.f32 %v2056, %v2334
  %v2336 = vpop.f32.mrb[0].mxu0
  %2337 = vmatprep.mubr.f32.mxu0 0.0
  %v2338 = vand.u32 %v1779, 4294901760
  %2339 = vmatmul.mubr.f32.gmra.mrb[0].mxu0 %v2338
  %v2340 = vpop.f32.mrb[0].mxu0
  %v2341 = vadd.f32 %v2066, %v2340
  %v2342 = vpop.f32.mrb[0].mxu0
  %2343 = vmatprep.mubr.f32.mxu0 0.0
  %v2344 = vand.u32 %v1782, 4294901760
  %2345 = vmatmul.mubr.f32.gmra.mrb[0].mxu0 %v2344
  %v2346 = vpop.f32.mrb[0].mxu0
  %v2347 = vadd.f32 %v2076, %v2346
  %v2348 = vpop.f32.mrb[0].mxu0
  %2349 = vmatprep.mubr.f32.mxu0 0.0
  %v2350 = vand.u32 %v1785, 4294901760
  %2351 = vmatmul.mubr.f32.gmra.mrb[0].mxu0 %v2350
  %v2352 = vpop.f32.mrb[0].mxu0
  %v2353 = vadd.f32 %v2086, %v2352
  %v2354 = vpop.f32.mrb[0].mxu0
  %2355 = vmatprep.mubr.f32.mxu0 0.0
  %v2356 = vand.u32 %v1788, 4294901760
  %2357 = vmatmul.mubr.f32.gmra.mrb[0].mxu0 %v2356
  %v2358 = vpop.f32.mrb[0].mxu0
  %v2359 = vadd.f32 %v2096, %v2358
  %v2360 = vpop.f32.mrb[0].mxu0
  %2361 = vmatprep.mubr.f32.mxu0 0.0
  %v2362 = vand.u32 %v1791, 4294901760
  %2363 = vmatmul.mubr.f32.gmra.mrb[0].mxu0 %v2362
  %v2364 = vpop.f32.mrb[0].mxu0
  %v2365 = vadd.f32 %v2106, %v2364
  %v2366 = vpop.f32.mrb[0].mxu0
  %2367 = vmatprep.mubr.f32.mxu0 0.0
  %v2368 = vand.u32 %v1794, 4294901760
  %2369 = vmatmul.mubr.f32.gmra.mrb[0].mxu0 %v2368
  %v2370 = vpop.f32.mrb[0].mxu0
  %v2371 = vadd.f32 %v2116, %v2370
  %v2372 = vpop.f32.mrb[0].mxu0
  %2373 = vdwg.mxu0
  %2374 = vmatprep.subr.mxu0 0.0
  %v2375 = vand.u32 %v1705, 4294901760
  %v2376 = vsub.f32 %v1705, %v2375
  %2377 = vmatpush1.msra.mxu0 %v2376
  %2378 = vmatprep.subr.mxu0 0.0
  %v2379 = vand.u32 %v1706, 4294901760
  %v2380 = vsub.f32 %v1706, %v2379
  %2381 = vmatpush1.msra.mxu0 %v2380
  %2382 = vmatprep.subr.mxu0 0.0
  %v2383 = vand.u32 %v1707, 4294901760
  %v2384 = vsub.f32 %v1707, %v2383
  %2385 = vmatpush1.msra.mxu0 %v2384
  %2386 = vmatprep.subr.mxu0 0.0
  %v2387 = vand.u32 %v1708, 4294901760
  %v2388 = vsub.f32 %v1708, %v2387
  %2389 = vmatpush1.msra.mxu0 %v2388
  %2390 = vmatprep.subr.mxu0 0.0
  %v2391 = vand.u32 %v1709, 4294901760
  %v2392 = vsub.f32 %v1709, %v2391
  %2393 = vmatpush1.msra.mxu0 %v2392
  %2394 = vmatprep.subr.mxu0 0.0
  %v2395 = vand.u32 %v1710, 4294901760
  %v2396 = vsub.f32 %v1710, %v2395
  %2397 = vmatpush1.msra.mxu0 %v2396
  %2398 = vmatprep.subr.mxu0 0.0
  %v2399 = vand.u32 %v1711, 4294901760
  %v2400 = vsub.f32 %v1711, %v2399
  %2401 = vmatpush1.msra.mxu0 %v2400
  %2402 = vmatprep.subr.mxu0 0.0
  %v2403 = vand.u32 %v1712, 4294901760
  %v2404 = vsub.f32 %v1712, %v2403
  %2405 = vmatpush1.msra.mxu0 %v2404
  %2406 = vmatprep.subr.mxu0 0.0
  %2407 = vmatpush1.msra.mxu0 0.0
  %2408 = vmatprep.subr.mxu0 0.0
  %2409 = vmatpush1.msra.mxu0 0.0
  %2410 = vmatprep.subr.mxu0 0.0
  %2411 = vmatpush1.msra.mxu0 0.0
  %2412 = vmatprep.subr.mxu0 0.0
  %2413 = vmatpush1.msra.mxu0 0.0
  %2414 = vmatprep.subr.mxu0 0.0
  %2415 = vmatpush1.msra.mxu0 0.0
  %2416 = vmatprep.subr.mxu0 0.0
  %2417 = vmatpush1.msra.mxu0 0.0
  %2418 = vmatprep.subr.mxu0 0.0
  %2419 = vmatpush1.msra.mxu0 0.0
  %2420 = vmatprep.subr.mxu0 0.0
  %2421 = vmatpush1.msra.mxu0 0.0
  %2422 = vmatprep.subr.mxu0 0.0
  %2423 = vmatpush1.msra.mxu0 0.0
  %2424 = vmatprep.subr.mxu0 0.0
  %2425 = vmatpush1.msra.mxu0 0.0
  %2426 = vmatprep.subr.mxu0 0.0
  %2427 = vmatpush1.msra.mxu0 0.0
  %2428 = vmatprep.subr.mxu0 0.0
  %2429 = vmatpush1.msra.mxu0 0.0
  %2430 = vmatprep.subr.mxu0 0.0
  %2431 = vmatpush1.msra.mxu0 0.0
  %2432 = vmatprep.subr.mxu0 0.0
  %2433 = vmatpush1.msra.mxu0 0.0
  %2434 = vmatprep.subr.mxu0 0.0
  %2435 = vmatpush1.msra.mxu0 0.0
  %2436 = vmatprep.subr.mxu0 0.0
  %2437 = vmatpush1.msra.mxu0 0.0
  %2438 = vmatprep.subr.mxu0 0.0
  %2439 = vmatpush1.msra.mxu0 0.0
  %2440 = vmatprep.subr.mxu0 0.0
  %2441 = vmatpush1.msra.mxu0 0.0
  %2442 = vmatprep.subr.mxu0 0.0
  %2443 = vmatpush1.msra.mxu0 0.0
  %2444 = vmatprep.subr.mxu0 0.0
  %2445 = vmatpush1.msra.mxu0 0.0
  %2446 = vmatprep.subr.mxu0 0.0
  %2447 = vmatpush1.msra.mxu0 0.0
  %2448 = vmatprep.subr.mxu0 0.0
  %2449 = vmatpush1.msra.mxu0 0.0
  %2450 = vmatprep.subr.mxu0 0.0
  %2451 = vmatpush1.msra.mxu0 0.0
  %2452 = vmatprep.subr.mxu0 0.0
  %2453 = vmatpush1.msra.mxu0 0.0
  %2454 = vmatprep.mubr.f32.mxu0 0.0
  %v2455 = vand.u32 %v1722, 4294901760
  %v2456 = vsub.f32 %v1722, %v2455
  %2457 = vmatmul.mubr.f32.gmra.mrb[0].mxu0 %v2456
  %v2458 = vpop.f32.mrb[0].mxu0
  %v2459 = vadd.f32 %v2227, %v2458
  %v2460 = vpop.f32.mrb[0].mxu0
  %2461 = vmatprep.mubr.f32.mxu0 0.0
  %v2462 = vand.u32 %v1725, 4294901760
  %v2463 = vsub.f32 %v1725, %v2462
  %2464 = vmatmul.mubr.f32.gmra.mrb[0].mxu0 %v2463
  %v2465 = vpop.f32.mrb[0].mxu0
  %v2466 = vadd.f32 %v2233, %v2465
  %v2467 = vpop.f32.mrb[0].mxu0
  %2468 = vmatprep.mubr.f32.mxu0 0.0
  %v2469 = vand.u32 %v1728, 4294901760
  %v2470 = vsub.f32 %v1728, %v2469
  %2471 = vmatmul.mubr.f32.gmra.mrb[0].mxu0 %v2470
  %v2472 = vpop.f32.mrb[0].mxu0
  %v2473 = vadd.f32 %v2239, %v2472
  %v2474 = vpop.f32.mrb[0].mxu0
  %2475 = vmatprep.mubr.f32.mxu0 0.0
  %v2476 = vand.u32 %v1731, 4294901760
  %v2477 = vsub.f32 %v1731, %v2476
  %2478 = vmatmul.mubr.f32.gmra.mrb[0].mxu0 %v2477
  %v2479 = vpop.f32.mrb[0].mxu0
  %v2480 = vadd.f32 %v2245, %v2479
  %v2481 = vpop.f32.mrb[0].mxu0
  %2482 = vmatprep.mubr.f32.mxu0 0.0
  %v2483 = vand.u32 %v1734, 4294901760
  %v2484 = vsub.f32 %v1734, %v2483
  %2485 = vmatmul.mubr.f32.gmra.mrb[0].mxu0 %v2484
  %v2486 = vpop.f32.mrb[0].mxu0
  %v2487 = vadd.f32 %v2251, %v2486
  %v2488 = vpop.f32.mrb[0].mxu0
  %2489 = vmatprep.mubr.f32.mxu0 0.0
  %v2490 = vand.u32 %v1737, 4294901760
  %v2491 = vsub.f32 %v1737, %v2490
  %2492 = vmatmul.mubr.f32.gmra.mrb[0].mxu0 %v2491
  %v2493 = vpop.f32.mrb[0].mxu0
  %v2494 = vadd.f32 %v2257, %v2493
  %v2495 = vpop.f32.mrb[0].mxu0
  %2496 = vmatprep.mubr.f32.mxu0 0.0
  %v2497 = vand.u32 %v1740, 4294901760
  %v2498 = vsub.f32 %v1740, %v2497
  %2499 = vmatmul.mubr.f32.gmra.mrb[0].mxu0 %v2498
  %v2500 = vpop.f32.mrb[0].mxu0
  %v2501 = vadd.f32 %v2263, %v2500
  %v2502 = vpop.f32.mrb[0].mxu0
  %2503 = vmatprep.mubr.f32.mxu0 0.0
  %v2504 = vand.u32 %v1743, 4294901760
  %v2505 = vsub.f32 %v1743, %v2504
  %2506 = vmatmul.mubr.f32.gmra.mrb[0].mxu0 %v2505
  %v2507 = vpop.f32.mrb[0].mxu0
  %v2508 = vadd.f32 %v2269, %v2507
  %v2509 = vpop.f32.mrb[0].mxu0
  %2510 = vmatprep.mubr.f32.mxu0 0.0
  %v2511 = vand.u32 %v1746, 4294901760
  %v2512 = vsub.f32 %v1746, %v2511
  %2513 = vmatmul.mubr.f32.gmra.mrb[0].mxu0 %v2512
  %v2514 = vpop.f32.mrb[0].mxu0
  %v2515 = vadd.f32 %v2275, %v2514
  %v2516 = vpop.f32.mrb[0].mxu0
  %2517 = vmatprep.mubr.f32.mxu0 0.0
  %v2518 = vand.u32 %v1749, 4294901760
  %v2519 = vsub.f32 %v1749, %v2518
  %2520 = vmatmul.mubr.f32.gmra.mrb[0].mxu0 %v2519
  %v2521 = vpop.f32.mrb[0].mxu0
  %v2522 = vadd.f32 %v2281, %v2521
  %v2523 = vpop.f32.mrb[0].mxu0
  %2524 = vmatprep.mubr.f32.mxu0 0.0
  %v2525 = vand.u32 %v1752, 4294901760
  %v2526 = vsub.f32 %v1752, %v2525
  %2527 = vmatmul.mubr.f32.gmra.mrb[0].mxu0 %v2526
  %v2528 = vpop.f32.mrb[0].mxu0
  %v2529 = vadd.f32 %v2287, %v2528
  %v2530 = vpop.f32.mrb[0].mxu0
  %2531 = vmatprep.mubr.f32.mxu0 0.0
  %v2532 = vand.u32 %v1755, 4294901760
  %v2533 = vsub.f32 %v1755, %v2532
  %2534 = vmatmul.mubr.f32.gmra.mrb[0].mxu0 %v2533
  %v2535 = vpop.f32.mrb[0].mxu0
  %v2536 = vadd.f32 %v2293, %v2535
  %v2537 = vpop.f32.mrb[0].mxu0
  %2538 = vmatprep.mubr.f32.mxu0 0.0
  %v2539 = vand.u32 %v1758, 4294901760
  %v2540 = vsub.f32 %v1758, %v2539
  %2541 = vmatmul.mubr.f32.gmra.mrb[0].mxu0 %v2540
  %v2542 = vpop.f32.mrb[0].mxu0
  %v2543 = vadd.f32 %v2299, %v2542
  %v2544 = vpop.f32.mrb[0].mxu0
  %2545 = vmatprep.mubr.f32.mxu0 0.0
  %v2546 = vand.u32 %v1761, 4294901760
  %v2547 = vsub.f32 %v1761, %v2546
  %2548 = vmatmul.mubr.f32.gmra.mrb[0].mxu0 %v2547
  %v2549 = vpop.f32.mrb[0].mxu0
  %v2550 = vadd.f32 %v2305, %v2549
  %v2551 = vpop.f32.mrb[0].mxu0
  %2552 = vmatprep.mubr.f32.mxu0 0.0
  %v2553 = vand.u32 %v1764, 4294901760
  %v2554 = vsub.f32 %v1764, %v2553
  %2555 = vmatmul.mubr.f32.gmra.mrb[0].mxu0 %v2554
  %v2556 = vpop.f32.mrb[0].mxu0
  %v2557 = vadd.f32 %v2311, %v2556
  %v2558 = vpop.f32.mrb[0].mxu0
  %2559 = vmatprep.mubr.f32.mxu0 0.0
  %v2560 = vand.u32 %v1767, 4294901760
  %v2561 = vsub.f32 %v1767, %v2560
  %2562 = vmatmul.mubr.f32.gmra.mrb[0].mxu0 %v2561
  %v2563 = vpop.f32.mrb[0].mxu0
  %v2564 = vadd.f32 %v2317, %v2563
  %v2565 = vpop.f32.mrb[0].mxu0
  %2566 = vmatprep.mubr.f32.mxu0 0.0
  %v2567 = vand.u32 %v1770, 4294901760
  %v2568 = vsub.f32 %v1770, %v2567
  %2569 = vmatmul.mubr.f32.gmra.mrb[0].mxu0 %v2568
  %v2570 = vpop.f32.mrb[0].mxu0
  %v2571 = vadd.f32 %v2323, %v2570
  %v2572 = vpop.f32.mrb[0].mxu0
  %2573 = vmatprep.mubr.f32.mxu0 0.0
  %v2574 = vand.u32 %v1773, 4294901760
  %v2575 = vsub.f32 %v1773, %v2574
  %2576 = vmatmul.mubr.f32.gmra.mrb[0].mxu0 %v2575
  %v2577 = vpop.f32.mrb[0].mxu0
  %v2578 = vadd.f32 %v2329, %v2577
  %v2579 = vpop.f32.mrb[0].mxu0
  %2580 = vmatprep.mubr.f32.mxu0 0.0
  %v2581 = vand.u32 %v1776, 4294901760
  %v2582 = vsub.f32 %v1776, %v2581
  %2583 = vmatmul.mubr.f32.gmra.mrb[0].mxu0 %v2582
  %v2584 = vpop.f32.mrb[0].mxu0
  %v2585 = vadd.f32 %v2335, %v2584
  %v2586 = vpop.f32.mrb[0].mxu0
  %2587 = vmatprep.mubr.f32.mxu0 0.0
  %v2588 = vand.u32 %v1779, 4294901760
  %v2589 = vsub.f32 %v1779, %v2588
  %2590 = vmatmul.mubr.f32.gmra.mrb[0].mxu0 %v2589
  %v2591 = vpop.f32.mrb[0].mxu0
  %v2592 = vadd.f32 %v2341, %v2591
  %v2593 = vpop.f32.mrb[0].mxu0
  %2594 = vmatprep.mubr.f32.mxu0 0.0
  %v2595 = vand.u32 %v1782, 4294901760
  %v2596 = vsub.f32 %v1782, %v2595
  %2597 = vmatmul.mubr.f32.gmra.mrb[0].mxu0 %v2596
  %v2598 = vpop.f32.mrb[0].mxu0
  %v2599 = vadd.f32 %v2347, %v2598
  %v2600 = vpop.f32.mrb[0].mxu0
  %2601 = vmatprep.mubr.f32.mxu0 0.0
  %v2602 = vand.u32 %v1785, 4294901760
  %v2603 = vsub.f32 %v1785, %v2602
  %2604 = vmatmul.mubr.f32.gmra.mrb[0].mxu0 %v2603
  %v2605 = vpop.f32.mrb[0].mxu0
  %v2606 = vadd.f32 %v2353, %v2605
  %v2607 = vpop.f32.mrb[0].mxu0
  %2608 = vmatprep.mubr.f32.mxu0 0.0
  %v2609 = vand.u32 %v1788, 4294901760
  %v2610 = vsub.f32 %v1788, %v2609
  %2611 = vmatmul.mubr.f32.gmra.mrb[0].mxu0 %v2610
  %v2612 = vpop.f32.mrb[0].mxu0
  %v2613 = vadd.f32 %v2359, %v2612
  %v2614 = vpop.f32.mrb[0].mxu0
  %2615 = vmatprep.mubr.f32.mxu0 0.0
  %v2616 = vand.u32 %v1791, 4294901760
  %v2617 = vsub.f32 %v1791, %v2616
  %2618 = vmatmul.mubr.f32.gmra.mrb[0].mxu0 %v2617
  %v2619 = vpop.f32.mrb[0].mxu0
  %v2620 = vadd.f32 %v2365, %v2619
  %v2621 = vpop.f32.mrb[0].mxu0
  %2622 = vmatprep.mubr.f32.mxu0 0.0
  %v2623 = vand.u32 %v1794, 4294901760
  %v2624 = vsub.f32 %v1794, %v2623
  %2625 = vmatmul.mubr.f32.gmra.mrb[0].mxu0 %v2624
  %v2626 = vpop.f32.mrb[0].mxu0
  %v2627 = vadd.f32 %v2371, %v2626
  %v2628 = vpop.f32.mrb[0].mxu0
  %2629 = vdwg.mxu0
  %2630 = vmatprep.subr.mxu0 0.0
  %v2631 = vand.u32 %v1705, 4294901760
  %2632 = vmatpush1.msra.mxu0 %v2631
  %2633 = vmatprep.subr.mxu0 0.0
  %v2634 = vand.u32 %v1706, 4294901760
  %2635 = vmatpush1.msra.mxu0 %v2634
  %2636 = vmatprep.subr.mxu0 0.0
  %v2637 = vand.u32 %v1707, 4294901760
  %2638 = vmatpush1.msra.mxu0 %v2637
  %2639 = vmatprep.subr.mxu0 0.0
  %v2640 = vand.u32 %v1708, 4294901760
  %2641 = vmatpush1.msra.mxu0 %v2640
  %2642 = vmatprep.subr.mxu0 0.0
  %v2643 = vand.u32 %v1709, 4294901760
  %2644 = vmatpush1.msra.mxu0 %v2643
  %2645 = vmatprep.subr.mxu0 0.0
  %v2646 = vand.u32 %v1710, 4294901760
  %2647 = vmatpush1.msra.mxu0 %v2646
  %2648 = vmatprep.subr.mxu0 0.0
  %v2649 = vand.u32 %v1711, 4294901760
  %2650 = vmatpush1.msra.mxu0 %v2649
  %2651 = vmatprep.subr.mxu0 0.0
  %v2652 = vand.u32 %v1712, 4294901760
  %2653 = vmatpush1.msra.mxu0 %v2652
  %2654 = vmatprep.subr.mxu0 0.0
  %2655 = vmatpush1.msra.mxu0 0.0
  %2656 = vmatprep.subr.mxu0 0.0
  %2657 = vmatpush1.msra.mxu0 0.0
  %2658 = vmatprep.subr.mxu0 0.0
  %2659 = vmatpush1.msra.mxu0 0.0
  %2660 = vmatprep.subr.mxu0 0.0
  %2661 = vmatpush1.msra.mxu0 0.0
  %2662 = vmatprep.subr.mxu0 0.0
  %2663 = vmatpush1.msra.mxu0 0.0
  %2664 = vmatprep.subr.mxu0 0.0
  %2665 = vmatpush1.msra.mxu0 0.0
  %2666 = vmatprep.subr.mxu0 0.0
  %2667 = vmatpush1.msra.mxu0 0.0
  %2668 = vmatprep.subr.mxu0 0.0
  %2669 = vmatpush1.msra.mxu0 0.0
  %2670 = vmatprep.subr.mxu0 0.0
  %2671 = vmatpush1.msra.mxu0 0.0
  %2672 = vmatprep.subr.mxu0 0.0
  %2673 = vmatpush1.msra.mxu0 0.0
  %2674 = vmatprep.subr.mxu0 0.0
  %2675 = vmatpush1.msra.mxu0 0.0
  %2676 = vmatprep.subr.mxu0 0.0
  %2677 = vmatpush1.msra.mxu0 0.0
  %2678 = vmatprep.subr.mxu0 0.0
  %2679 = vmatpush1.msra.mxu0 0.0
  %2680 = vmatprep.subr.mxu0 0.0
  %2681 = vmatpush1.msra.mxu0 0.0
  %2682 = vmatprep.subr.mxu0 0.0
  %2683 = vmatpush1.msra.mxu0 0.0
  %2684 = vmatprep.subr.mxu0 0.0
  %2685 = vmatpush1.msra.mxu0 0.0
  %2686 = vmatprep.subr.mxu0 0.0
  %2687 = vmatpush1.msra.mxu0 0.0
  %2688 = vmatprep.subr.mxu0 0.0
  %2689 = vmatpush1.msra.mxu0 0.0
  %2690 = vmatprep.subr.mxu0 0.0
  %2691 = vmatpush1.msra.mxu0 0.0
  %2692 = vmatprep.subr.mxu0 0.0
  %2693 = vmatpush1.msra.mxu0 0.0
  %2694 = vmatprep.subr.mxu0 0.0
  %2695 = vmatpush1.msra.mxu0 0.0
  %2696 = vmatprep.subr.mxu0 0.0
  %2697 = vmatpush1.msra.mxu0 0.0
  %2698 = vmatprep.subr.mxu0 0.0
  %2699 = vmatpush1.msra.mxu0 0.0
  %2700 = vmatprep.subr.mxu0 0.0
  %2701 = vmatpush1.msra.mxu0 0.0
  %2702 = vmatprep.mubr.f32.mxu0 0.0
  %v2703 = vand.u32 %v1722, 4294901760
  %v2704 = vsub.f32 %v1722, %v2703
  %v2705 = vand.u32 %v2704, 4294901760
  %2706 = vmatmul.mubr.f32.gmra.mrb[0].mxu0 %v2705
  %v2707 = vpop.f32.mrb[0].mxu0
  %v2708 = vadd.f32 %v2459, %v2707
  %v2709 = vpop.f32.mrb[0].mxu0
  %2710 = vmatprep.mubr.f32.mxu0 0.0
  %v2711 = vand.u32 %v1725, 4294901760
  %v2712 = vsub.f32 %v1725, %v2711
  %v2713 = vand.u32 %v2712, 4294901760
  %2714 = vmatmul.mubr.f32.gmra.mrb[0].mxu0 %v2713
  %v2715 = vpop.f32.mrb[0].mxu0
  %v2716 = vadd.f32 %v2466, %v2715
  %v2717 = vpop.f32.mrb[0].mxu0
  %2718 = vmatprep.mubr.f32.mxu0 0.0
  %v2719 = vand.u32 %v1728, 4294901760
  %v2720 = vsub.f32 %v1728, %v2719
  %v2721 = vand.u32 %v2720, 4294901760
  %2722 = vmatmul.mubr.f32.gmra.mrb[0].mxu0 %v2721
  %v2723 = vpop.f32.mrb[0].mxu0
  %v2724 = vadd.f32 %v2473, %v2723
  %v2725 = vpop.f32.mrb[0].mxu0
  %2726 = vmatprep.mubr.f32.mxu0 0.0
  %v2727 = vand.u32 %v1731, 4294901760
  %v2728 = vsub.f32 %v1731, %v2727
  %v2729 = vand.u32 %v2728, 4294901760
  %2730 = vmatmul.mubr.f32.gmra.mrb[0].mxu0 %v2729
  %v2731 = vpop.f32.mrb[0].mxu0
  %v2732 = vadd.f32 %v2480, %v2731
  %v2733 = vpop.f32.mrb[0].mxu0
  %2734 = vmatprep.mubr.f32.mxu0 0.0
  %v2735 = vand.u32 %v1734, 4294901760
  %v2736 = vsub.f32 %v1734, %v2735
  %v2737 = vand.u32 %v2736, 4294901760
  %2738 = vmatmul.mubr.f32.gmra.mrb[0].mxu0 %v2737
  %v2739 = vpop.f32.mrb[0].mxu0
  %v2740 = vadd.f32 %v2487, %v2739
  %v2741 = vpop.f32.mrb[0].mxu0
  %2742 = vmatprep.mubr.f32.mxu0 0.0
  %v2743 = vand.u32 %v1737, 4294901760
  %v2744 = vsub.f32 %v1737, %v2743
  %v2745 = vand.u32 %v2744, 4294901760
  %2746 = vmatmul.mubr.f32.gmra.mrb[0].mxu0 %v2745
  %v2747 = vpop.f32.mrb[0].mxu0
  %v2748 = vadd.f32 %v2494, %v2747
  %v2749 = vpop.f32.mrb[0].mxu0
  %2750 = vmatprep.mubr.f32.mxu0 0.0
  %v2751 = vand.u32 %v1740, 4294901760
  %v2752 = vsub.f32 %v1740, %v2751
  %v2753 = vand.u32 %v2752, 4294901760
  %2754 = vmatmul.mubr.f32.gmra.mrb[0].mxu0 %v2753
  %v2755 = vpop.f32.mrb[0].mxu0
  %v2756 = vadd.f32 %v2501, %v2755
  %v2757 = vpop.f32.mrb[0].mxu0
  %2758 = vmatprep.mubr.f32.mxu0 0.0
  %v2759 = vand.u32 %v1743, 4294901760
  %v2760 = vsub.f32 %v1743, %v2759
  %v2761 = vand.u32 %v2760, 4294901760
  %2762 = vmatmul.mubr.f32.gmra.mrb[0].mxu0 %v2761
  %v2763 = vpop.f32.mrb[0].mxu0
  %v2764 = vadd.f32 %v2508, %v2763
  %v2765 = vpop.f32.mrb[0].mxu0
  %2766 = vmatprep.mubr.f32.mxu0 0.0
  %v2767 = vand.u32 %v1746, 4294901760
  %v2768 = vsub.f32 %v1746, %v2767
  %v2769 = vand.u32 %v2768, 4294901760
  %2770 = vmatmul.mubr.f32.gmra.mrb[0].mxu0 %v2769
  %v2771 = vpop.f32.mrb[0].mxu0
  %v2772 = vadd.f32 %v2515, %v2771
  %v2773 = vpop.f32.mrb[0].mxu0
  %2774 = vmatprep.mubr.f32.mxu0 0.0
  %v2775 = vand.u32 %v1749, 4294901760
  %v2776 = vsub.f32 %v1749, %v2775
  %v2777 = vand.u32 %v2776, 4294901760
  %2778 = vmatmul.mubr.f32.gmra.mrb[0].mxu0 %v2777
  %v2779 = vpop.f32.mrb[0].mxu0
  %v2780 = vadd.f32 %v2522, %v2779
  %v2781 = vpop.f32.mrb[0].mxu0
  %2782 = vmatprep.mubr.f32.mxu0 0.0
  %v2783 = vand.u32 %v1752, 4294901760
  %v2784 = vsub.f32 %v1752, %v2783
  %v2785 = vand.u32 %v2784, 4294901760
  %2786 = vmatmul.mubr.f32.gmra.mrb[0].mxu0 %v2785
  %v2787 = vpop.f32.mrb[0].mxu0
  %v2788 = vadd.f32 %v2529, %v2787
  %v2789 = vpop.f32.mrb[0].mxu0
  %2790 = vmatprep.mubr.f32.mxu0 0.0
  %v2791 = vand.u32 %v1755, 4294901760
  %v2792 = vsub.f32 %v1755, %v2791
  %v2793 = vand.u32 %v2792, 4294901760
  %2794 = vmatmul.mubr.f32.gmra.mrb[0].mxu0 %v2793
  %v2795 = vpop.f32.mrb[0].mxu0
  %v2796 = vadd.f32 %v2536, %v2795
  %v2797 = vpop.f32.mrb[0].mxu0
  %2798 = vmatprep.mubr.f32.mxu0 0.0
  %v2799 = vand.u32 %v1758, 4294901760
  %v2800 = vsub.f32 %v1758, %v2799
  %v2801 = vand.u32 %v2800, 4294901760
  %2802 = vmatmul.mubr.f32.gmra.mrb[0].mxu0 %v2801
  %v2803 = vpop.f32.mrb[0].mxu0
  %v2804 = vadd.f32 %v2543, %v2803
  %v2805 = vpop.f32.mrb[0].mxu0
  %2806 = vmatprep.mubr.f32.mxu0 0.0
  %v2807 = vand.u32 %v1761, 4294901760
  %v2808 = vsub.f32 %v1761, %v2807
  %v2809 = vand.u32 %v2808, 4294901760
  %2810 = vmatmul.mubr.f32.gmra.mrb[0].mxu0 %v2809
  %v2811 = vpop.f32.mrb[0].mxu0
  %v2812 = vadd.f32 %v2550, %v2811
  %v2813 = vpop.f32.mrb[0].mxu0
  %2814 = vmatprep.mubr.f32.mxu0 0.0
  %v2815 = vand.u32 %v1764, 4294901760
  %v2816 = vsub.f32 %v1764, %v2815
  %v2817 = vand.u32 %v2816, 4294901760
  %2818 = vmatmul.mubr.f32.gmra.mrb[0].mxu0 %v2817
  %v2819 = vpop.f32.mrb[0].mxu0
  %v2820 = vadd.f32 %v2557, %v2819
  %v2821 = vpop.f32.mrb[0].mxu0
  %2822 = vmatprep.mubr.f32.mxu0 0.0
  %v2823 = vand.u32 %v1767, 4294901760
  %v2824 = vsub.f32 %v1767, %v2823
  %v2825 = vand.u32 %v2824, 4294901760
  %2826 = vmatmul.mubr.f32.gmra.mrb[0].mxu0 %v2825
  %v2827 = vpop.f32.mrb[0].mxu0
  %v2828 = vadd.f32 %v2564, %v2827
  %v2829 = vpop.f32.mrb[0].mxu0
  %2830 = vmatprep.mubr.f32.mxu0 0.0
  %v2831 = vand.u32 %v1770, 4294901760
  %v2832 = vsub.f32 %v1770, %v2831
  %v2833 = vand.u32 %v2832, 4294901760
  %2834 = vmatmul.mubr.f32.gmra.mrb[0].mxu0 %v2833
  %v2835 = vpop.f32.mrb[0].mxu0
  %v2836 = vadd.f32 %v2571, %v2835
  %v2837 = vpop.f32.mrb[0].mxu0
  %2838 = vmatprep.mubr.f32.mxu0 0.0
  %v2839 = vand.u32 %v1773, 4294901760
  %v2840 = vsub.f32 %v1773, %v2839
  %v2841 = vand.u32 %v2840, 4294901760
  %2842 = vmatmul.mubr.f32.gmra.mrb[0].mxu0 %v2841
  %v2843 = vpop.f32.mrb[0].mxu0
  %v2844 = vadd.f32 %v2578, %v2843
  %v2845 = vpop.f32.mrb[0].mxu0
  %2846 = vmatprep.mubr.f32.mxu0 0.0
  %v2847 = vand.u32 %v1776, 4294901760
  %v2848 = vsub.f32 %v1776, %v2847
  %v2849 = vand.u32 %v2848, 4294901760
  %2850 = vmatmul.mubr.f32.gmra.mrb[0].mxu0 %v2849
  %v2851 = vpop.f32.mrb[0].mxu0
  %v2852 = vadd.f32 %v2585, %v2851
  %v2853 = vpop.f32.mrb[0].mxu0
  %2854 = vmatprep.mubr.f32.mxu0 0.0
  %v2855 = vand.u32 %v1779, 4294901760
  %v2856 = vsub.f32 %v1779, %v2855
  %v2857 = vand.u32 %v2856, 4294901760
  %2858 = vmatmul.mubr.f32.gmra.mrb[0].mxu0 %v2857
  %v2859 = vpop.f32.mrb[0].mxu0
  %v2860 = vadd.f32 %v2592, %v2859
  %v2861 = vpop.f32.mrb[0].mxu0
  %2862 = vmatprep.mubr.f32.mxu0 0.0
  %v2863 = vand.u32 %v1782, 4294901760
  %v2864 = vsub.f32 %v1782, %v2863
  %v2865 = vand.u32 %v2864, 4294901760
  %2866 = vmatmul.mubr.f32.gmra.mrb[0].mxu0 %v2865
  %v2867 = vpop.f32.mrb[0].mxu0
  %v2868 = vadd.f32 %v2599, %v2867
  %v2869 = vpop.f32.mrb[0].mxu0
  %2870 = vmatprep.mubr.f32.mxu0 0.0
  %v2871 = vand.u32 %v1785, 4294901760
  %v2872 = vsub.f32 %v1785, %v2871
  %v2873 = vand.u32 %v2872, 4294901760
  %2874 = vmatmul.mubr.f32.gmra.mrb[0].mxu0 %v2873
  %v2875 = vpop.f32.mrb[0].mxu0
  %v2876 = vadd.f32 %v2606, %v2875
  %v2877 = vpop.f32.mrb[0].mxu0
  %2878 = vmatprep.mubr.f32.mxu0 0.0
  %v2879 = vand.u32 %v1788, 4294901760
  %v2880 = vsub.f32 %v1788, %v2879
  %v2881 = vand.u32 %v2880, 4294901760
  %2882 = vmatmul.mubr.f32.gmra.mrb[0].mxu0 %v2881
  %v2883 = vpop.f32.mrb[0].mxu0
  %v2884 = vadd.f32 %v2613, %v2883
  %v2885 = vpop.f32.mrb[0].mxu0
  %2886 = vmatprep.mubr.f32.mxu0 0.0
  %v2887 = vand.u32 %v1791, 4294901760
  %v2888 = vsub.f32 %v1791, %v2887
  %v2889 = vand.u32 %v2888, 4294901760
  %2890 = vmatmul.mubr.f32.gmra.mrb[0].mxu0 %v2889
  %v2891 = vpop.f32.mrb[0].mxu0
  %v2892 = vadd.f32 %v2620, %v2891
  %v2893 = vpop.f32.mrb[0].mxu0
  %2894 = vmatprep.mubr.f32.mxu0 0.0
  %v2895 = vand.u32 %v1794, 4294901760
  %v2896 = vsub.f32 %v1794, %v2895
  %v2897 = vand.u32 %v2896, 4294901760
  %2898 = vmatmul.mubr.f32.gmra.mrb[0].mxu0 %v2897
  %v2899 = vpop.f32.mrb[0].mxu0
  %v2900 = vadd.f32 %v2627, %v2899
  %v2901 = vpop.f32.mrb[0].mxu0
  %2902 = vdwg.mxu0
  %2903 = vmatprep.subr.mxu0 0.0
  %v2904 = vand.u32 %v1705, 4294901760
  %v2905 = vsub.f32 %v1705, %v2904
  %v2906 = vand.u32 %v2905, 4294901760
  %2907 = vmatpush1.msra.mxu0 %v2906
  %2908 = vmatprep.subr.mxu0 0.0
  %v2909 = vand.u32 %v1706, 4294901760
  %v2910 = vsub.f32 %v1706, %v2909
  %v2911 = vand.u32 %v2910, 4294901760
  %2912 = vmatpush1.msra.mxu0 %v2911
  %2913 = vmatprep.subr.mxu0 0.0
  %v2914 = vand.u32 %v1707, 4294901760
  %v2915 = vsub.f32 %v1707, %v2914
  %v2916 = vand.u32 %v2915, 4294901760
  %2917 = vmatpush1.msra.mxu0 %v2916
  %2918 = vmatprep.subr.mxu0 0.0
  %v2919 = vand.u32 %v1708, 4294901760
  %v2920 = vsub.f32 %v1708, %v2919
  %v2921 = vand.u32 %v2920, 4294901760
  %2922 = vmatpush1.msra.mxu0 %v2921
  %2923 = vmatprep.subr.mxu0 0.0
  %v2924 = vand.u32 %v1709, 4294901760
  %v2925 = vsub.f32 %v1709, %v2924
  %v2926 = vand.u32 %v2925, 4294901760
  %2927 = vmatpush1.msra.mxu0 %v2926
  %2928 = vmatprep.subr.mxu0 0.0
  %v2929 = vand.u32 %v1710, 4294901760
  %v2930 = vsub.f32 %v1710, %v2929
  %v2931 = vand.u32 %v2930, 4294901760
  %2932 = vmatpush1.msra.mxu0 %v2931
  %2933 = vmatprep.subr.mxu0 0.0
  %v2934 = vand.u32 %v1711, 4294901760
  %v2935 = vsub.f32 %v1711, %v2934
  %v2936 = vand.u32 %v2935, 4294901760
  %2937 = vmatpush1.msra.mxu0 %v2936
  %2938 = vmatprep.subr.mxu0 0.0
  %v2939 = vand.u32 %v1712, 4294901760
  %v2940 = vsub.f32 %v1712, %v2939
  %v2941 = vand.u32 %v2940, 4294901760
  %2942 = vmatpush1.msra.mxu0 %v2941
  %2943 = vmatprep.subr.mxu0 0.0
  %2944 = vmatpush1.msra.mxu0 0.0
  %2945 = vmatprep.subr.mxu0 0.0
  %2946 = vmatpush1.msra.mxu0 0.0
  %2947 = vmatprep.subr.mxu0 0.0
  %2948 = vmatpush1.msra.mxu0 0.0
  %2949 = vmatprep.subr.mxu0 0.0
  %2950 = vmatpush1.msra.mxu0 0.0
  %2951 = vmatprep.subr.mxu0 0.0
  %2952 = vmatpush1.msra.mxu0 0.0
  %2953 = vmatprep.subr.mxu0 0.0
  %2954 = vmatpush1.msra.mxu0 0.0
  %2955 = vmatprep.subr.mxu0 0.0
  %2956 = vmatpush1.msra.mxu0 0.0
  %2957 = vmatprep.subr.mxu0 0.0
  %2958 = vmatpush1.msra.mxu0 0.0
  %2959 = vmatprep.subr.mxu0 0.0
  %2960 = vmatpush1.msra.mxu0 0.0
  %2961 = vmatprep.subr.mxu0 0.0
  %2962 = vmatpush1.msra.mxu0 0.0
  %2963 = vmatprep.subr.mxu0 0.0
  %2964 = vmatpush1.msra.mxu0 0.0
  %2965 = vmatprep.subr.mxu0 0.0
  %2966 = vmatpush1.msra.mxu0 0.0
  %2967 = vmatprep.subr.mxu0 0.0
  %2968 = vmatpush1.msra.mxu0 0.0
  %2969 = vmatprep.subr.mxu0 0.0
  %2970 = vmatpush1.msra.mxu0 0.0
  %2971 = vmatprep.subr.mxu0 0.0
  %2972 = vmatpush1.msra.mxu0 0.0
  %2973 = vmatprep.subr.mxu0 0.0
  %2974 = vmatpush1.msra.mxu0 0.0
  %2975 = vmatprep.subr.mxu0 0.0
  %2976 = vmatpush1.msra.mxu0 0.0
  %2977 = vmatprep.subr.mxu0 0.0
  %2978 = vmatpush1.msra.mxu0 0.0
  %2979 = vmatprep.subr.mxu0 0.0
  %2980 = vmatpush1.msra.mxu0 0.0
  %2981 = vmatprep.subr.mxu0 0.0
  %2982 = vmatpush1.msra.mxu0 0.0
  %2983 = vmatprep.subr.mxu0 0.0
  %2984 = vmatpush1.msra.mxu0 0.0
  %2985 = vmatprep.subr.mxu0 0.0
  %2986 = vmatpush1.msra.mxu0 0.0
  %2987 = vmatprep.subr.mxu0 0.0
  %2988 = vmatpush1.msra.mxu0 0.0
  %2989 = vmatprep.subr.mxu0 0.0
  %2990 = vmatpush1.msra.mxu0 0.0
  %2991 = vmatprep.mubr.f32.mxu0 0.0
  %v2992 = vand.u32 %v1722, 4294901760
  %2993 = vmatmul.mubr.f32.gmra.mrb[0].mxu0 %v2992
  %v2994 = vpop.f32.mrb[0].mxu0
  %v2995 = vadd.f32 %v2708, %v2994
  %v2996 = vpop.f32.mrb[0].mxu0
  %2997 = vmatprep.mubr.f32.mxu0 0.0
  %v2998 = vand.u32 %v1725, 4294901760
  %2999 = vmatmul.mubr.f32.gmra.mrb[0].mxu0 %v2998
  %v3000 = vpop.f32.mrb[0].mxu0
  %v3001 = vadd.f32 %v2716, %v3000
  %v3002 = vpop.f32.mrb[0].mxu0
  %3003 = vmatprep.mubr.f32.mxu0 0.0
  %v3004 = vand.u32 %v1728, 4294901760
  %3005 = vmatmul.mubr.f32.gmra.mrb[0].mxu0 %v3004
  %v3006 = vpop.f32.mrb[0].mxu0
  %v3007 = vadd.f32 %v2724, %v3006
  %v3008 = vpop.f32.mrb[0].mxu0
  %3009 = vmatprep.mubr.f32.mxu0 0.0
  %v3010 = vand.u32 %v1731, 4294901760
  %3011 = vmatmul.mubr.f32.gmra.mrb[0].mxu0 %v3010
  %v3012 = vpop.f32.mrb[0].mxu0
  %v3013 = vadd.f32 %v2732, %v3012
  %v3014 = vpop.f32.mrb[0].mxu0
  %3015 = vmatprep.mubr.f32.mxu0 0.0
  %v3016 = vand.u32 %v1734, 4294901760
  %3017 = vmatmul.mubr.f32.gmra.mrb[0].mxu0 %v3016
  %v3018 = vpop.f32.mrb[0].mxu0
  %v3019 = vadd.f32 %v2740, %v3018
  %v3020 = vpop.f32.mrb[0].mxu0
  %3021 = vmatprep.mubr.f32.mxu0 0.0
  %v3022 = vand.u32 %v1737, 4294901760
  %3023 = vmatmul.mubr.f32.gmra.mrb[0].mxu0 %v3022
  %v3024 = vpop.f32.mrb[0].mxu0
  %v3025 = vadd.f32 %v2748, %v3024
  %v3026 = vpop.f32.mrb[0].mxu0
  %3027 = vmatprep.mubr.f32.mxu0 0.0
  %v3028 = vand.u32 %v1740, 4294901760
  %3029 = vmatmul.mubr.f32.gmra.mrb[0].mxu0 %v3028
  %v3030 = vpop.f32.mrb[0].mxu0
  %v3031 = vadd.f32 %v2756, %v3030
  %v3032 = vpop.f32.mrb[0].mxu0
  %3033 = vmatprep.mubr.f32.mxu0 0.0
  %v3034 = vand.u32 %v1743, 4294901760
  %3035 = vmatmul.mubr.f32.gmra.mrb[0].mxu0 %v3034
  %v3036 = vpop.f32.mrb[0].mxu0
  %v3037 = vadd.f32 %v2764, %v3036
  %v3038 = vpop.f32.mrb[0].mxu0
  %3039 = vmatprep.mubr.f32.mxu0 0.0
  %v3040 = vand.u32 %v1746, 4294901760
  %3041 = vmatmul.mubr.f32.gmra.mrb[0].mxu0 %v3040
  %v3042 = vpop.f32.mrb[0].mxu0
  %v3043 = vadd.f32 %v2772, %v3042
  %v3044 = vpop.f32.mrb[0].mxu0
  %3045 = vmatprep.mubr.f32.mxu0 0.0
  %v3046 = vand.u32 %v1749, 4294901760
  %3047 = vmatmul.mubr.f32.gmra.mrb[0].mxu0 %v3046
  %v3048 = vpop.f32.mrb[0].mxu0
  %v3049 = vadd.f32 %v2780, %v3048
  %v3050 = vpop.f32.mrb[0].mxu0
  %3051 = vmatprep.mubr.f32.mxu0 0.0
  %v3052 = vand.u32 %v1752, 4294901760
  %3053 = vmatmul.mubr.f32.gmra.mrb[0].mxu0 %v3052
  %v3054 = vpop.f32.mrb[0].mxu0
  %v3055 = vadd.f32 %v2788, %v3054
  %v3056 = vpop.f32.mrb[0].mxu0
  %3057 = vmatprep.mubr.f32.mxu0 0.0
  %v3058 = vand.u32 %v1755, 4294901760
  %3059 = vmatmul.mubr.f32.gmra.mrb[0].mxu0 %v3058
  %v3060 = vpop.f32.mrb[0].mxu0
  %v3061 = vadd.f32 %v2796, %v3060
  %v3062 = vpop.f32.mrb[0].mxu0
  %3063 = vmatprep.mubr.f32.mxu0 0.0
  %v3064 = vand.u32 %v1758, 4294901760
  %3065 = vmatmul.mubr.f32.gmra.mrb[0].mxu0 %v3064
  %v3066 = vpop.f32.mrb[0].mxu0
  %v3067 = vadd.f32 %v2804, %v3066
  %v3068 = vpop.f32.mrb[0].mxu0
  %3069 = vmatprep.mubr.f32.mxu0 0.0
  %v3070 = vand.u32 %v1761, 4294901760
  %3071 = vmatmul.mubr.f32.gmra.mrb[0].mxu0 %v3070
  %v3072 = vpop.f32.mrb[0].mxu0
  %v3073 = vadd.f32 %v2812, %v3072
  %v3074 = vpop.f32.mrb[0].mxu0
  %3075 = vmatprep.mubr.f32.mxu0 0.0
  %v3076 = vand.u32 %v1764, 4294901760
  %3077 = vmatmul.mubr.f32.gmra.mrb[0].mxu0 %v3076
  %v3078 = vpop.f32.mrb[0].mxu0
  %v3079 = vadd.f32 %v2820, %v3078
  %v3080 = vpop.f32.mrb[0].mxu0
  %3081 = vmatprep.mubr.f32.mxu0 0.0
  %v3082 = vand.u32 %v1767, 4294901760
  %3083 = vmatmul.mubr.f32.gmra.mrb[0].mxu0 %v3082
  %v3084 = vpop.f32.mrb[0].mxu0
  %v3085 = vadd.f32 %v2828, %v3084
  %v3086 = vpop.f32.mrb[0].mxu0
  %3087 = vmatprep.mubr.f32.mxu0 0.0
  %v3088 = vand.u32 %v1770, 4294901760
  %3089 = vmatmul.mubr.f32.gmra.mrb[0].mxu0 %v3088
  %v3090 = vpop.f32.mrb[0].mxu0
  %v3091 = vadd.f32 %v2836, %v3090
  %v3092 = vpop.f32.mrb[0].mxu0
  %3093 = vmatprep.mubr.f32.mxu0 0.0
  %v3094 = vand.u32 %v1773, 4294901760
  %3095 = vmatmul.mubr.f32.gmra.mrb[0].mxu0 %v3094
  %v3096 = vpop.f32.mrb[0].mxu0
  %v3097 = vadd.f32 %v2844, %v3096
  %v3098 = vpop.f32.mrb[0].mxu0
  %3099 = vmatprep.mubr.f32.mxu0 0.0
  %v3100 = vand.u32 %v1776, 4294901760
  %3101 = vmatmul.mubr.f32.gmra.mrb[0].mxu0 %v3100
  %v3102 = vpop.f32.mrb[0].mxu0
  %v3103 = vadd.f32 %v2852, %v3102
  %v3104 = vpop.f32.mrb[0].mxu0
  %3105 = vmatprep.mubr.f32.mxu0 0.0
  %v3106 = vand.u32 %v1779, 4294901760
  %3107 = vmatmul.mubr.f32.gmra.mrb[0].mxu0 %v3106
  %v3108 = vpop.f32.mrb[0].mxu0
  %v3109 = vadd.f32 %v2860, %v3108
  %v3110 = vpop.f32.mrb[0].mxu0
  %3111 = vmatprep.mubr.f32.mxu0 0.0
  %v3112 = vand.u32 %v1782, 4294901760
  %3113 = vmatmul.mubr.f32.gmra.mrb[0].mxu0 %v3112
  %v3114 = vpop.f32.mrb[0].mxu0
  %v3115 = vadd.f32 %v2868, %v3114
  %v3116 = vpop.f32.mrb[0].mxu0
  %3117 = vmatprep.mubr.f32.mxu0 0.0
  %v3118 = vand.u32 %v1785, 4294901760
  %3119 = vmatmul.mubr.f32.gmra.mrb[0].mxu0 %v3118
  %v3120 = vpop.f32.mrb[0].mxu0
  %v3121 = vadd.f32 %v2876, %v3120
  %v3122 = vpop.f32.mrb[0].mxu0
  %3123 = vmatprep.mubr.f32.mxu0 0.0
  %v3124 = vand.u32 %v1788, 4294901760
  %3125 = vmatmul.mubr.f32.gmra.mrb[0].mxu0 %v3124
  %v3126 = vpop.f32.mrb[0].mxu0
  %v3127 = vadd.f32 %v2884, %v3126
  %v3128 = vpop.f32.mrb[0].mxu0
  %3129 = vmatprep.mubr.f32.mxu0 0.0
  %v3130 = vand.u32 %v1791, 4294901760
  %3131 = vmatmul.mubr.f32.gmra.mrb[0].mxu0 %v3130
  %v3132 = vpop.f32.mrb[0].mxu0
  %v3133 = vadd.f32 %v2892, %v3132
  %v3134 = vpop.f32.mrb[0].mxu0
  %3135 = vmatprep.mubr.f32.mxu0 0.0
  %v3136 = vand.u32 %v1794, 4294901760
  %3137 = vmatmul.mubr.f32.gmra.mrb[0].mxu0 %v3136
  %v3138 = vpop.f32.mrb[0].mxu0
  %v3139 = vadd.f32 %v2900, %v3138
  %v3140 = vpop.f32.mrb[0].mxu0
  %3141 = vdwg.mxu0
  %3142 = vmatprep.subr.mxu0 0.0
  %v3143 = vand.u32 %v1705, 4294901760
  %3144 = vmatpush1.msra.mxu0 %v3143
  %3145 = vmatprep.subr.mxu0 0.0
  %v3146 = vand.u32 %v1706, 4294901760
  %3147 = vmatpush1.msra.mxu0 %v3146
  %3148 = vmatprep.subr.mxu0 0.0
  %v3149 = vand.u32 %v1707, 4294901760
  %3150 = vmatpush1.msra.mxu0 %v3149
  %3151 = vmatprep.subr.mxu0 0.0
  %v3152 = vand.u32 %v1708, 4294901760
  %3153 = vmatpush1.msra.mxu0 %v3152
  %3154 = vmatprep.subr.mxu0 0.0
  %v3155 = vand.u32 %v1709, 4294901760
  %3156 = vmatpush1.msra.mxu0 %v3155
  %3157 = vmatprep.subr.mxu0 0.0
  %v3158 = vand.u32 %v1710, 4294901760
  %3159 = vmatpush1.msra.mxu0 %v3158
  %3160 = vmatprep.subr.mxu0 0.0
  %v3161 = vand.u32 %v1711, 4294901760
  %3162 = vmatpush1.msra.mxu0 %v3161
  %3163 = vmatprep.subr.mxu0 0.0
  %v3164 = vand.u32 %v1712, 4294901760
  %3165 = vmatpush1.msra.mxu0 %v3164
  %3166 = vmatprep.subr.mxu0 0.0
  %3167 = vmatpush1.msra.mxu0 0.0
  %3168 = vmatprep.subr.mxu0 0.0
  %3169 = vmatpush1.msra.mxu0 0.0
  %3170 = vmatprep.subr.mxu0 0.0
  %3171 = vmatpush1.msra.mxu0 0.0
  %3172 = vmatprep.subr.mxu0 0.0
  %3173 = vmatpush1.msra.mxu0 0.0
  %3174 = vmatprep.subr.mxu0 0.0
  %3175 = vmatpush1.msra.mxu0 0.0
  %3176 = vmatprep.subr.mxu0 0.0
  %3177 = vmatpush1.msra.mxu0 0.0
  %3178 = vmatprep.subr.mxu0 0.0
  %3179 = vmatpush1.msra.mxu0 0.0
  %3180 = vmatprep.subr.mxu0 0.0
  %3181 = vmatpush1.msra.mxu0 0.0
  %3182 = vmatprep.subr.mxu0 0.0
  %3183 = vmatpush1.msra.mxu0 0.0
  %3184 = vmatprep.subr.mxu0 0.0
  %3185 = vmatpush1.msra.mxu0 0.0
  %3186 = vmatprep.subr.mxu0 0.0
  %3187 = vmatpush1.msra.mxu0 0.0
  %3188 = vmatprep.subr.mxu0 0.0
  %3189 = vmatpush1.msra.mxu0 0.0
  %3190 = vmatprep.subr.mxu0 0.0
  %3191 = vmatpush1.msra.mxu0 0.0
  %3192 = vmatprep.subr.mxu0 0.0
  %3193 = vmatpush1.msra.mxu0 0.0
  %3194 = vmatprep.subr.mxu0 0.0
  %3195 = vmatpush1.msra.mxu0 0.0
  %3196 = vmatprep.subr.mxu0 0.0
  %3197 = vmatpush1.msra.mxu0 0.0
  %3198 = vmatprep.subr.mxu0 0.0
  %3199 = vmatpush1.msra.mxu0 0.0
  %3200 = vmatprep.subr.mxu0 0.0
  %3201 = vmatpush1.msra.mxu0 0.0
  %3202 = vmatprep.subr.mxu0 0.0
  %3203 = vmatpush1.msra.mxu0 0.0
  %3204 = vmatprep.subr.mxu0 0.0
  %3205 = vmatpush1.msra.mxu0 0.0
  %3206 = vmatprep.subr.mxu0 0.0
  %3207 = vmatpush1.msra.mxu0 0.0
  %3208 = vmatprep.subr.mxu0 0.0
  %3209 = vmatpush1.msra.mxu0 0.0
  %3210 = vmatprep.subr.mxu0 0.0
  %3211 = vmatpush1.msra.mxu0 0.0
  %3212 = vmatprep.subr.mxu0 0.0
  %3213 = vmatpush1.msra.mxu0 0.0
  %3214 = vmatprep.mubr.f32.mxu0 0.0
  %v3215 = vand.u32 %v1722, 4294901760
  %3216 = vmatmul.mubr.f32.gmra.mrb[0].mxu0 %v3215
  %v3217 = vpop.f32.mrb[0].mxu0
  %v3218 = vadd.f32 %v2995, %v3217
  %v3219 = vpop.f32.mrb[0].mxu0
  %3220 = vmatprep.mubr.f32.mxu0 0.0
  %v3221 = vand.u32 %v1725, 4294901760
  %3222 = vmatmul.mubr.f32.gmra.mrb[0].mxu0 %v3221
  %v3223 = vpop.f32.mrb[0].mxu0
  %v3224 = vadd.f32 %v3001, %v3223
  %v3225 = vpop.f32.mrb[0].mxu0
  %3226 = vmatprep.mubr.f32.mxu0 0.0
  %v3227 = vand.u32 %v1728, 4294901760
  %3228 = vmatmul.mubr.f32.gmra.mrb[0].mxu0 %v3227
  %v3229 = vpop.f32.mrb[0].mxu0
  %v3230 = vadd.f32 %v3007, %v3229
  %v3231 = vpop.f32.mrb[0].mxu0
  %3232 = vmatprep.mubr.f32.mxu0 0.0
  %v3233 = vand.u32 %v1731, 4294901760
  %3234 = vmatmul.mubr.f32.gmra.mrb[0].mxu0 %v3233
  %v3235 = vpop.f32.mrb[0].mxu0
  %v3236 = vadd.f32 %v3013, %v3235
  %v3237 = vpop.f32.mrb[0].mxu0
  %3238 = vmatprep.mubr.f32.mxu0 0.0
  %v3239 = vand.u32 %v1734, 4294901760
  %3240 = vmatmul.mubr.f32.gmra.mrb[0].mxu0 %v3239
  %v3241 = vpop.f32.mrb[0].mxu0
  %v3242 = vadd.f32 %v3019, %v3241
  %v3243 = vpop.f32.mrb[0].mxu0
  %3244 = vmatprep.mubr.f32.mxu0 0.0
  %v3245 = vand.u32 %v1737, 4294901760
  %3246 = vmatmul.mubr.f32.gmra.mrb[0].mxu0 %v3245
  %v3247 = vpop.f32.mrb[0].mxu0
  %v3248 = vadd.f32 %v3025, %v3247
  %v3249 = vpop.f32.mrb[0].mxu0
  %3250 = vmatprep.mubr.f32.mxu0 0.0
  %v3251 = vand.u32 %v1740, 4294901760
  %3252 = vmatmul.mubr.f32.gmra.mrb[0].mxu0 %v3251
  %v3253 = vpop.f32.mrb[0].mxu0
  %v3254 = vadd.f32 %v3031, %v3253
  %v3255 = vpop.f32.mrb[0].mxu0
  %3256 = vmatprep.mubr.f32.mxu0 0.0
  %v3257 = vand.u32 %v1743, 4294901760
  %3258 = vmatmul.mubr.f32.gmra.mrb[0].mxu0 %v3257
  %v3259 = vpop.f32.mrb[0].mxu0
  %v3260 = vadd.f32 %v3037, %v3259
  %v3261 = vpop.f32.mrb[0].mxu0
  %3262 = vmatprep.mubr.f32.mxu0 0.0
  %v3263 = vand.u32 %v1746, 4294901760
  %3264 = vmatmul.mubr.f32.gmra.mrb[0].mxu0 %v3263
  %v3265 = vpop.f32.mrb[0].mxu0
  %v3266 = vadd.f32 %v3043, %v3265
  %v3267 = vpop.f32.mrb[0].mxu0
  %3268 = vmatprep.mubr.f32.mxu0 0.0
  %v3269 = vand.u32 %v1749, 4294901760
  %3270 = vmatmul.mubr.f32.gmra.mrb[0].mxu0 %v3269
  %v3271 = vpop.f32.mrb[0].mxu0
  %v3272 = vadd.f32 %v3049, %v3271
  %v3273 = vpop.f32.mrb[0].mxu0
  %3274 = vmatprep.mubr.f32.mxu0 0.0
  %v3275 = vand.u32 %v1752, 4294901760
  %3276 = vmatmul.mubr.f32.gmra.mrb[0].mxu0 %v3275
  %v3277 = vpop.f32.mrb[0].mxu0
  %v3278 = vadd.f32 %v3055, %v3277
  %v3279 = vpop.f32.mrb[0].mxu0
  %3280 = vmatprep.mubr.f32.mxu0 0.0
  %v3281 = vand.u32 %v1755, 4294901760
  %3282 = vmatmul.mubr.f32.gmra.mrb[0].mxu0 %v3281
  %v3283 = vpop.f32.mrb[0].mxu0
  %v3284 = vadd.f32 %v3061, %v3283
  %v3285 = vpop.f32.mrb[0].mxu0
  %3286 = vmatprep.mubr.f32.mxu0 0.0
  %v3287 = vand.u32 %v1758, 4294901760
  %3288 = vmatmul.mubr.f32.gmra.mrb[0].mxu0 %v3287
  %v3289 = vpop.f32.mrb[0].mxu0
  %v3290 = vadd.f32 %v3067, %v3289
  %v3291 = vpop.f32.mrb[0].mxu0
  %3292 = vmatprep.mubr.f32.mxu0 0.0
  %v3293 = vand.u32 %v1761, 4294901760
  %3294 = vmatmul.mubr.f32.gmra.mrb[0].mxu0 %v3293
  %v3295 = vpop.f32.mrb[0].mxu0
  %v3296 = vadd.f32 %v3073, %v3295
  %v3297 = vpop.f32.mrb[0].mxu0
  %3298 = vmatprep.mubr.f32.mxu0 0.0
  %v3299 = vand.u32 %v1764, 4294901760
  %3300 = vmatmul.mubr.f32.gmra.mrb[0].mxu0 %v3299
  %v3301 = vpop.f32.mrb[0].mxu0
  %v3302 = vadd.f32 %v3079, %v3301
  %v3303 = vpop.f32.mrb[0].mxu0
  %3304 = vmatprep.mubr.f32.mxu0 0.0
  %v3305 = vand.u32 %v1767, 4294901760
  %3306 = vmatmul.mubr.f32.gmra.mrb[0].mxu0 %v3305
  %v3307 = vpop.f32.mrb[0].mxu0
  %v3308 = vadd.f32 %v3085, %v3307
  %v3309 = vpop.f32.mrb[0].mxu0
  %3310 = vmatprep.mubr.f32.mxu0 0.0
  %v3311 = vand.u32 %v1770, 4294901760
  %3312 = vmatmul.mubr.f32.gmra.mrb[0].mxu0 %v3311
  %v3313 = vpop.f32.mrb[0].mxu0
  %v3314 = vadd.f32 %v3091, %v3313
  %v3315 = vpop.f32.mrb[0].mxu0
  %3316 = vmatprep.mubr.f32.mxu0 0.0
  %v3317 = vand.u32 %v1773, 4294901760
  %3318 = vmatmul.mubr.f32.gmra.mrb[0].mxu0 %v3317
  %v3319 = vpop.f32.mrb[0].mxu0
  %v3320 = vadd.f32 %v3097, %v3319
  %v3321 = vpop.f32.mrb[0].mxu0
  %3322 = vmatprep.mubr.f32.mxu0 0.0
  %v3323 = vand.u32 %v1776, 4294901760
  %3324 = vmatmul.mubr.f32.gmra.mrb[0].mxu0 %v3323
  %v3325 = vpop.f32.mrb[0].mxu0
  %v3326 = vadd.f32 %v3103, %v3325
  %v3327 = vpop.f32.mrb[0].mxu0
  %3328 = vmatprep.mubr.f32.mxu0 0.0
  %v3329 = vand.u32 %v1779, 4294901760
  %3330 = vmatmul.mubr.f32.gmra.mrb[0].mxu0 %v3329
  %v3331 = vpop.f32.mrb[0].mxu0
  %v3332 = vadd.f32 %v3109, %v3331
  %v3333 = vpop.f32.mrb[0].mxu0
  %3334 = vmatprep.mubr.f32.mxu0 0.0
  %v3335 = vand.u32 %v1782, 4294901760
  %3336 = vmatmul.mubr.f32.gmra.mrb[0].mxu0 %v3335
  %v3337 = vpop.f32.mrb[0].mxu0
  %v3338 = vadd.f32 %v3115, %v3337
  %v3339 = vpop.f32.mrb[0].mxu0
  %3340 = vmatprep.mubr.f32.mxu0 0.0
  %v3341 = vand.u32 %v1785, 4294901760
  %3342 = vmatmul.mubr.f32.gmra.mrb[0].mxu0 %v3341
  %v3343 = vpop.f32.mrb[0].mxu0
  %v3344 = vadd.f32 %v3121, %v3343
  %v3345 = vpop.f32.mrb[0].mxu0
  %3346 = vmatprep.mubr.f32.mxu0 0.0
  %v3347 = vand.u32 %v1788, 4294901760
  %3348 = vmatmul.mubr.f32.gmra.mrb[0].mxu0 %v3347
  %v3349 = vpop.f32.mrb[0].mxu0
  %v3350 = vadd.f32 %v3127, %v3349
  %v3351 = vpop.f32.mrb[0].mxu0
  %3352 = vmatprep.mubr.f32.mxu0 0.0
  %v3353 = vand.u32 %v1791, 4294901760
  %3354 = vmatmul.mubr.f32.gmra.mrb[0].mxu0 %v3353
  %v3355 = vpop.f32.mrb[0].mxu0
  %v3356 = vadd.f32 %v3133, %v3355
  %v3357 = vpop.f32.mrb[0].mxu0
  %3358 = vmatprep.mubr.f32.mxu0 0.0
  %v3359 = vand.u32 %v1794, 4294901760
  %3360 = vmatmul.mubr.f32.gmra.mrb[0].mxu0 %v3359
  %v3361 = vpop.f32.mrb[0].mxu0
  %v3362 = vadd.f32 %v3139, %v3361
  %v3363 = vpop.f32.mrb[0].mxu0
  %3364 = vdwg.mxu0
  %v3365 = vtanh.pop %v3218
  %v3366 = vtanh.pop %v3224
  %v3367 = vtanh.pop %v3230
  %v3368 = vtanh.pop %v3236
  %v3369 = vtanh.pop %v3242
  %v3370 = vtanh.pop %v3248
  %v3371 = vtanh.pop %v3254
  %v3372 = vtanh.pop %v3260
  %v3373 = vtanh.pop %v3266
  %v3374 = vtanh.pop %v3272
  %v3375 = vtanh.pop %v3278
  %v3376 = vtanh.pop %v3284
  %v3377 = vtanh.pop %v3290
  %v3378 = vtanh.pop %v3296
  %v3379 = vtanh.pop %v3302
  %v3380 = vtanh.pop %v3308
  %v3381 = vtanh.pop %v3314
  %v3382 = vtanh.pop %v3320
  %v3383 = vtanh.pop %v3326
  %v3384 = vtanh.pop %v3332
  %v3385 = vtanh.pop %v3338
  %v3386 = vtanh.pop %v3344
  %v3387 = vtanh.pop %v3350
  %v3388 = vtanh.pop %v3356
  %v3389 = vtanh.pop %v3362
  %v3390 = vld [vmem:[%s5] sm:$0xff]
  %v3391 = vld [vmem:[%s5 + $0x8] sm:$0xff]
  %v3392 = vld [vmem:[%s5 + $0x10] sm:$0xff]
  %v3393 = vld [vmem:[%s5 + $0x18] sm:$0xff]
  %v3394 = vld [vmem:[%s5 + $0x20] sm:$0xff]
  %v3395 = vld [vmem:[%s5 + $0x28] sm:$0xff]
  %v3396 = vld [vmem:[%s5 + $0x30] sm:$0xff]
  %v3397 = vld [vmem:[%s5 + $0x38] sm:$0xff]
  %v3398 = vld [vmem:[%s6] sm:$0x1]
  %v3400 = vlaneseq
  %v3401 = vshrl.u32 %v3400, 7
  %v3402 = vsub.s32 0, %v3401
  %v3403 = vrot.slane %v3398, %v3402
  %v3406 = vsel %vm1720, %v3365, 0
  %v3409 = vsel %vm1720, %v3366, 0
  %v3412 = vsel %vm1720, %v3367, 0
  %v3415 = vsel %vm1720, %v3368, 0
  %v3418 = vsel %vm1720, %v3369, 0
  %v3421 = vsel %vm1720, %v3370, 0
  %v3424 = vsel %vm1720, %v3371, 0
  %v3427 = vsel %vm1720, %v3372, 0
  %v3430 = vsel %vm1720, %v3373, 0
  %v3433 = vsel %vm1720, %v3374, 0
  %v3436 = vsel %vm1720, %v3375, 0
  %v3439 = vsel %vm1720, %v3376, 0
  %v3442 = vsel %vm1720, %v3377, 0
  %v3445 = vsel %vm1720, %v3378, 0
  %v3448 = vsel %vm1720, %v3379, 0
  %v3451 = vsel %vm1720, %v3380, 0
  %v3454 = vsel %vm1720, %v3381, 0
  %v3457 = vsel %vm1720, %v3382, 0
  %v3460 = vsel %vm1720, %v3383, 0
  %v3463 = vsel %vm1720, %v3384, 0
  %v3466 = vsel %vm1720, %v3385, 0
  %v3469 = vsel %vm1720, %v3386, 0
  %v3472 = vsel %vm1720, %v3387, 0
  %v3475 = vsel %vm1720, %v3388, 0
  %v3478 = vsel %vm1720, %v3389, 0
  %3480 = vmatprep.subr.mxu0 0.0
  %v3481 = vand.u32 %v3390, 4294901760
  %3482 = vmatpush1.msra.mxu0 %v3481
  %3483 = vmatprep.subr.mxu0 0.0
  %v3484 = vand.u32 %v3391, 4294901760
  %3485 = vmatpush1.msra.mxu0 %v3484
  %3486 = vmatprep.subr.mxu0 0.0
  %v3487 = vand.u32 %v3392, 4294901760
  %3488 = vmatpush1.msra.mxu0 %v3487
  %3489 = vmatprep.subr.mxu0 0.0
  %v3490 = vand.u32 %v3393, 4294901760
  %3491 = vmatpush1.msra.mxu0 %v3490
  %3492 = vmatprep.subr.mxu0 0.0
  %v3493 = vand.u32 %v3394, 4294901760
  %3494 = vmatpush1.msra.mxu0 %v3493
  %3495 = vmatprep.subr.mxu0 0.0
  %v3496 = vand.u32 %v3395, 4294901760
  %3497 = vmatpush1.msra.mxu0 %v3496
  %3498 = vmatprep.subr.mxu0 0.0
  %v3499 = vand.u32 %v3396, 4294901760
  %3500 = vmatpush1.msra.mxu0 %v3499
  %3501 = vmatprep.subr.mxu0 0.0
  %v3502 = vand.u32 %v3397, 4294901760
  %3503 = vmatpush1.msra.mxu0 %v3502
  %3504 = vmatprep.subr.mxu0 0.0
  %3505 = vmatpush1.msra.mxu0 0.0
  %3506 = vmatprep.subr.mxu0 0.0
  %3507 = vmatpush1.msra.mxu0 0.0
  %3508 = vmatprep.subr.mxu0 0.0
  %3509 = vmatpush1.msra.mxu0 0.0
  %3510 = vmatprep.subr.mxu0 0.0
  %3511 = vmatpush1.msra.mxu0 0.0
  %3512 = vmatprep.subr.mxu0 0.0
  %3513 = vmatpush1.msra.mxu0 0.0
  %3514 = vmatprep.subr.mxu0 0.0
  %3515 = vmatpush1.msra.mxu0 0.0
  %3516 = vmatprep.subr.mxu0 0.0
  %3517 = vmatpush1.msra.mxu0 0.0
  %3518 = vmatprep.subr.mxu0 0.0
  %3519 = vmatpush1.msra.mxu0 0.0
  %3520 = vmatprep.subr.mxu0 0.0
  %3521 = vmatpush1.msra.mxu0 0.0
  %3522 = vmatprep.subr.mxu0 0.0
  %3523 = vmatpush1.msra.mxu0 0.0
  %3524 = vmatprep.subr.mxu0 0.0
  %3525 = vmatpush1.msra.mxu0 0.0
  %3526 = vmatprep.subr.mxu0 0.0
  %3527 = vmatpush1.msra.mxu0 0.0
  %3528 = vmatprep.subr.mxu0 0.0
  %3529 = vmatpush1.msra.mxu0 0.0
  %3530 = vmatprep.subr.mxu0 0.0
  %3531 = vmatpush1.msra.mxu0 0.0
  %3532 = vmatprep.subr.mxu0 0.0
  %3533 = vmatpush1.msra.mxu0 0.0
  %3534 = vmatprep.subr.mxu0 0.0
  %3535 = vmatpush1.msra.mxu0 0.0
  %3536 = vmatprep.subr.mxu0 0.0
  %3537 = vmatpush1.msra.mxu0 0.0
  %3538 = vmatprep.subr.mxu0 0.0
  %3539 = vmatpush1.msra.mxu0 0.0
  %3540 = vmatprep.subr.mxu0 0.0
  %3541 = vmatpush1.msra.mxu0 0.0
  %3542 = vmatprep.subr.mxu0 0.0
  %3543 = vmatpush1.msra.mxu0 0.0
  %3544 = vmatprep.subr.mxu0 0.0
  %3545 = vmatpush1.msra.mxu0 0.0
  %3546 = vmatprep.subr.mxu0 0.0
  %3547 = vmatpush1.msra.mxu0 0.0
  %3548 = vmatprep.subr.mxu0 0.0
  %3549 = vmatpush1.msra.mxu0 0.0
  %3550 = vmatprep.subr.mxu0 0.0
  %3551 = vmatpush1.msra.mxu0 0.0
  %3552 = vmatprep.mubr.f32.mxu0 0.0
  %v3553 = vand.u32 %v3406, 4294901760
  %v3554 = vsub.f32 %v3406, %v3553
  %v3555 = vand.u32 %v3554, 4294901760
  %v3556 = vsub.f32 %v3554, %v3555
  %v3557 = vand.u32 %v3556, 4294901760
  %3558 = vmatmul.mubr.f32.gmra.mrb[0].mxu0 %v3557
  %v3559 = vpop.f32.mrb[0].mxu0
  %v3560 = vadd.f32 %v3403, %v3559
  %v3561 = vpop.f32.mrb[0].mxu0
  %3562 = vmatprep.mubr.f32.mxu0 0.0
  %v3563 = vand.u32 %v3409, 4294901760
  %v3564 = vsub.f32 %v3409, %v3563
  %v3565 = vand.u32 %v3564, 4294901760
  %v3566 = vsub.f32 %v3564, %v3565
  %v3567 = vand.u32 %v3566, 4294901760
  %3568 = vmatmul.mubr.f32.gmra.mrb[0].mxu0 %v3567
  %v3569 = vpop.f32.mrb[0].mxu0
  %v3570 = vadd.f32 %v3403, %v3569
  %v3571 = vpop.f32.mrb[0].mxu0
  %3572 = vmatprep.mubr.f32.mxu0 0.0
  %v3573 = vand.u32 %v3412, 4294901760
  %v3574 = vsub.f32 %v3412, %v3573
  %v3575 = vand.u32 %v3574, 4294901760
  %v3576 = vsub.f32 %v3574, %v3575
  %v3577 = vand.u32 %v3576, 4294901760
  %3578 = vmatmul.mubr.f32.gmra.mrb[0].mxu0 %v3577
  %v3579 = vpop.f32.mrb[0].mxu0
  %v3580 = vadd.f32 %v3403, %v3579
  %v3581 = vpop.f32.mrb[0].mxu0
  %3582 = vmatprep.mubr.f32.mxu0 0.0
  %v3583 = vand.u32 %v3415, 4294901760
  %v3584 = vsub.f32 %v3415, %v3583
  %v3585 = vand.u32 %v3584, 4294901760
  %v3586 = vsub.f32 %v3584, %v3585
  %v3587 = vand.u32 %v3586, 4294901760
  %3588 = vmatmul.mubr.f32.gmra.mrb[0].mxu0 %v3587
  %v3589 = vpop.f32.mrb[0].mxu0
  %v3590 = vadd.f32 %v3403, %v3589
  %v3591 = vpop.f32.mrb[0].mxu0
  %3592 = vmatprep.mubr.f32.mxu0 0.0
  %v3593 = vand.u32 %v3418, 4294901760
  %v3594 = vsub.f32 %v3418, %v3593
  %v3595 = vand.u32 %v3594, 4294901760
  %v3596 = vsub.f32 %v3594, %v3595
  %v3597 = vand.u32 %v3596, 4294901760
  %3598 = vmatmul.mubr.f32.gmra.mrb[0].mxu0 %v3597
  %v3599 = vpop.f32.mrb[0].mxu0
  %v3600 = vadd.f32 %v3403, %v3599
  %v3601 = vpop.f32.mrb[0].mxu0
  %3602 = vmatprep.mubr.f32.mxu0 0.0
  %v3603 = vand.u32 %v3421, 4294901760
  %v3604 = vsub.f32 %v3421, %v3603
  %v3605 = vand.u32 %v3604, 4294901760
  %v3606 = vsub.f32 %v3604, %v3605
  %v3607 = vand.u32 %v3606, 4294901760
  %3608 = vmatmul.mubr.f32.gmra.mrb[0].mxu0 %v3607
  %v3609 = vpop.f32.mrb[0].mxu0
  %v3610 = vadd.f32 %v3403, %v3609
  %v3611 = vpop.f32.mrb[0].mxu0
  %3612 = vmatprep.mubr.f32.mxu0 0.0
  %v3613 = vand.u32 %v3424, 4294901760
  %v3614 = vsub.f32 %v3424, %v3613
  %v3615 = vand.u32 %v3614, 4294901760
  %v3616 = vsub.f32 %v3614, %v3615
  %v3617 = vand.u32 %v3616, 4294901760
  %3618 = vmatmul.mubr.f32.gmra.mrb[0].mxu0 %v3617
  %v3619 = vpop.f32.mrb[0].mxu0
  %v3620 = vadd.f32 %v3403, %v3619
  %v3621 = vpop.f32.mrb[0].mxu0
  %3622 = vmatprep.mubr.f32.mxu0 0.0
  %v3623 = vand.u32 %v3427, 4294901760
  %v3624 = vsub.f32 %v3427, %v3623
  %v3625 = vand.u32 %v3624, 4294901760
  %v3626 = vsub.f32 %v3624, %v3625
  %v3627 = vand.u32 %v3626, 4294901760
  %3628 = vmatmul.mubr.f32.gmra.mrb[0].mxu0 %v3627
  %v3629 = vpop.f32.mrb[0].mxu0
  %v3630 = vadd.f32 %v3403, %v3629
  %v3631 = vpop.f32.mrb[0].mxu0
  %3632 = vmatprep.mubr.f32.mxu0 0.0
  %v3633 = vand.u32 %v3430, 4294901760
  %v3634 = vsub.f32 %v3430, %v3633
  %v3635 = vand.u32 %v3634, 4294901760
  %v3636 = vsub.f32 %v3634, %v3635
  %v3637 = vand.u32 %v3636, 4294901760
  %3638 = vmatmul.mubr.f32.gmra.mrb[0].mxu0 %v3637
  %v3639 = vpop.f32.mrb[0].mxu0
  %v3640 = vadd.f32 %v3403, %v3639
  %v3641 = vpop.f32.mrb[0].mxu0
  %3642 = vmatprep.mubr.f32.mxu0 0.0
  %v3643 = vand.u32 %v3433, 4294901760
  %v3644 = vsub.f32 %v3433, %v3643
  %v3645 = vand.u32 %v3644, 4294901760
  %v3646 = vsub.f32 %v3644, %v3645
  %v3647 = vand.u32 %v3646, 4294901760
  %3648 = vmatmul.mubr.f32.gmra.mrb[0].mxu0 %v3647
  %v3649 = vpop.f32.mrb[0].mxu0
  %v3650 = vadd.f32 %v3403, %v3649
  %v3651 = vpop.f32.mrb[0].mxu0
  %3652 = vmatprep.mubr.f32.mxu0 0.0
  %v3653 = vand.u32 %v3436, 4294901760
  %v3654 = vsub.f32 %v3436, %v3653
  %v3655 = vand.u32 %v3654, 4294901760
  %v3656 = vsub.f32 %v3654, %v3655
  %v3657 = vand.u32 %v3656, 4294901760
  %3658 = vmatmul.mubr.f32.gmra.mrb[0].mxu0 %v3657
  %v3659 = vpop.f32.mrb[0].mxu0
  %v3660 = vadd.f32 %v3403, %v3659
  %v3661 = vpop.f32.mrb[0].mxu0
  %3662 = vmatprep.mubr.f32.mxu0 0.0
  %v3663 = vand.u32 %v3439, 4294901760
  %v3664 = vsub.f32 %v3439, %v3663
  %v3665 = vand.u32 %v3664, 4294901760
  %v3666 = vsub.f32 %v3664, %v3665
  %v3667 = vand.u32 %v3666, 4294901760
  %3668 = vmatmul.mubr.f32.gmra.mrb[0].mxu0 %v3667
  %v3669 = vpop.f32.mrb[0].mxu0
  %v3670 = vadd.f32 %v3403, %v3669
  %v3671 = vpop.f32.mrb[0].mxu0
  %3672 = vmatprep.mubr.f32.mxu0 0.0
  %v3673 = vand.u32 %v3442, 4294901760
  %v3674 = vsub.f32 %v3442, %v3673
  %v3675 = vand.u32 %v3674, 4294901760
  %v3676 = vsub.f32 %v3674, %v3675
  %v3677 = vand.u32 %v3676, 4294901760
  %3678 = vmatmul.mubr.f32.gmra.mrb[0].mxu0 %v3677
  %v3679 = vpop.f32.mrb[0].mxu0
  %v3680 = vadd.f32 %v3403, %v3679
  %v3681 = vpop.f32.mrb[0].mxu0
  %3682 = vmatprep.mubr.f32.mxu0 0.0
  %v3683 = vand.u32 %v3445, 4294901760
  %v3684 = vsub.f32 %v3445, %v3683
  %v3685 = vand.u32 %v3684, 4294901760
  %v3686 = vsub.f32 %v3684, %v3685
  %v3687 = vand.u32 %v3686, 4294901760
  %3688 = vmatmul.mubr.f32.gmra.mrb[0].mxu0 %v3687
  %v3689 = vpop.f32.mrb[0].mxu0
  %v3690 = vadd.f32 %v3403, %v3689
  %v3691 = vpop.f32.mrb[0].mxu0
  %3692 = vmatprep.mubr.f32.mxu0 0.0
  %v3693 = vand.u32 %v3448, 4294901760
  %v3694 = vsub.f32 %v3448, %v3693
  %v3695 = vand.u32 %v3694, 4294901760
  %v3696 = vsub.f32 %v3694, %v3695
  %v3697 = vand.u32 %v3696, 4294901760
  %3698 = vmatmul.mubr.f32.gmra.mrb[0].mxu0 %v3697
  %v3699 = vpop.f32.mrb[0].mxu0
  %v3700 = vadd.f32 %v3403, %v3699
  %v3701 = vpop.f32.mrb[0].mxu0
  %3702 = vmatprep.mubr.f32.mxu0 0.0
  %v3703 = vand.u32 %v3451, 4294901760
  %v3704 = vsub.f32 %v3451, %v3703
  %v3705 = vand.u32 %v3704, 4294901760
  %v3706 = vsub.f32 %v3704, %v3705
  %v3707 = vand.u32 %v3706, 4294901760
  %3708 = vmatmul.mubr.f32.gmra.mrb[0].mxu0 %v3707
  %v3709 = vpop.f32.mrb[0].mxu0
  %v3710 = vadd.f32 %v3403, %v3709
  %v3711 = vpop.f32.mrb[0].mxu0
  %3712 = vmatprep.mubr.f32.mxu0 0.0
  %v3713 = vand.u32 %v3454, 4294901760
  %v3714 = vsub.f32 %v3454, %v3713
  %v3715 = vand.u32 %v3714, 4294901760
  %v3716 = vsub.f32 %v3714, %v3715
  %v3717 = vand.u32 %v3716, 4294901760
  %3718 = vmatmul.mubr.f32.gmra.mrb[0].mxu0 %v3717
  %v3719 = vpop.f32.mrb[0].mxu0
  %v3720 = vadd.f32 %v3403, %v3719
  %v3721 = vpop.f32.mrb[0].mxu0
  %3722 = vmatprep.mubr.f32.mxu0 0.0
  %v3723 = vand.u32 %v3457, 4294901760
  %v3724 = vsub.f32 %v3457, %v3723
  %v3725 = vand.u32 %v3724, 4294901760
  %v3726 = vsub.f32 %v3724, %v3725
  %v3727 = vand.u32 %v3726, 4294901760
  %3728 = vmatmul.mubr.f32.gmra.mrb[0].mxu0 %v3727
  %v3729 = vpop.f32.mrb[0].mxu0
  %v3730 = vadd.f32 %v3403, %v3729
  %v3731 = vpop.f32.mrb[0].mxu0
  %3732 = vmatprep.mubr.f32.mxu0 0.0
  %v3733 = vand.u32 %v3460, 4294901760
  %v3734 = vsub.f32 %v3460, %v3733
  %v3735 = vand.u32 %v3734, 4294901760
  %v3736 = vsub.f32 %v3734, %v3735
  %v3737 = vand.u32 %v3736, 4294901760
  %3738 = vmatmul.mubr.f32.gmra.mrb[0].mxu0 %v3737
  %v3739 = vpop.f32.mrb[0].mxu0
  %v3740 = vadd.f32 %v3403, %v3739
  %v3741 = vpop.f32.mrb[0].mxu0
  %3742 = vmatprep.mubr.f32.mxu0 0.0
  %v3743 = vand.u32 %v3463, 4294901760
  %v3744 = vsub.f32 %v3463, %v3743
  %v3745 = vand.u32 %v3744, 4294901760
  %v3746 = vsub.f32 %v3744, %v3745
  %v3747 = vand.u32 %v3746, 4294901760
  %3748 = vmatmul.mubr.f32.gmra.mrb[0].mxu0 %v3747
  %v3749 = vpop.f32.mrb[0].mxu0
  %v3750 = vadd.f32 %v3403, %v3749
  %v3751 = vpop.f32.mrb[0].mxu0
  %3752 = vmatprep.mubr.f32.mxu0 0.0
  %v3753 = vand.u32 %v3466, 4294901760
  %v3754 = vsub.f32 %v3466, %v3753
  %v3755 = vand.u32 %v3754, 4294901760
  %v3756 = vsub.f32 %v3754, %v3755
  %v3757 = vand.u32 %v3756, 4294901760
  %3758 = vmatmul.mubr.f32.gmra.mrb[0].mxu0 %v3757
  %v3759 = vpop.f32.mrb[0].mxu0
  %v3760 = vadd.f32 %v3403, %v3759
  %v3761 = vpop.f32.mrb[0].mxu0
  %3762 = vmatprep.mubr.f32.mxu0 0.0
  %v3763 = vand.u32 %v3469, 4294901760
  %v3764 = vsub.f32 %v3469, %v3763
  %v3765 = vand.u32 %v3764, 4294901760
  %v3766 = vsub.f32 %v3764, %v3765
  %v3767 = vand.u32 %v3766, 4294901760
  %3768 = vmatmul.mubr.f32.gmra.mrb[0].mxu0 %v3767
  %v3769 = vpop.f32.mrb[0].mxu0
  %v3770 = vadd.f32 %v3403, %v3769
  %v3771 = vpop.f32.mrb[0].mxu0
  %3772 = vmatprep.mubr.f32.mxu0 0.0
  %v3773 = vand.u32 %v3472, 4294901760
  %v3774 = vsub.f32 %v3472, %v3773
  %v3775 = vand.u32 %v3774, 4294901760
  %v3776 = vsub.f32 %v3774, %v3775
  %v3777 = vand.u32 %v3776, 4294901760
  %3778 = vmatmul.mubr.f32.gmra.mrb[0].mxu0 %v3777
  %v3779 = vpop.f32.mrb[0].mxu0
  %v3780 = vadd.f32 %v3403, %v3779
  %v3781 = vpop.f32.mrb[0].mxu0
  %3782 = vmatprep.mubr.f32.mxu0 0.0
  %v3783 = vand.u32 %v3475, 4294901760
  %v3784 = vsub.f32 %v3475, %v3783
  %v3785 = vand.u32 %v3784, 4294901760
  %v3786 = vsub.f32 %v3784, %v3785
  %v3787 = vand.u32 %v3786, 4294901760
  %3788 = vmatmul.mubr.f32.gmra.mrb[0].mxu0 %v3787
  %v3789 = vpop.f32.mrb[0].mxu0
  %v3790 = vadd.f32 %v3403, %v3789
  %v3791 = vpop.f32.mrb[0].mxu0
  %3792 = vmatprep.mubr.f32.mxu0 0.0
  %v3793 = vand.u32 %v3478, 4294901760
  %v3794 = vsub.f32 %v3478, %v3793
  %v3795 = vand.u32 %v3794, 4294901760
  %v3796 = vsub.f32 %v3794, %v3795
  %v3797 = vand.u32 %v3796, 4294901760
  %3798 = vmatmul.mubr.f32.gmra.mrb[0].mxu0 %v3797
  %v3799 = vpop.f32.mrb[0].mxu0
  %v3800 = vadd.f32 %v3403, %v3799
  %v3801 = vpop.f32.mrb[0].mxu0
  %3802 = vdwg.mxu0
  %3803 = vmatprep.subr.mxu0 0.0
  %v3804 = vand.u32 %v3390, 4294901760
  %v3805 = vsub.f32 %v3390, %v3804
  %v3806 = vand.u32 %v3805, 4294901760
  %v3807 = vsub.f32 %v3805, %v3806
  %v3808 = vand.u32 %v3807, 4294901760
  %3809 = vmatpush1.msra.mxu0 %v3808
  %3810 = vmatprep.subr.mxu0 0.0
  %v3811 = vand.u32 %v3391, 4294901760
  %v3812 = vsub.f32 %v3391, %v3811
  %v3813 = vand.u32 %v3812, 4294901760
  %v3814 = vsub.f32 %v3812, %v3813
  %v3815 = vand.u32 %v3814, 4294901760
  %3816 = vmatpush1.msra.mxu0 %v3815
  %3817 = vmatprep.subr.mxu0 0.0
  %v3818 = vand.u32 %v3392, 4294901760
  %v3819 = vsub.f32 %v3392, %v3818
  %v3820 = vand.u32 %v3819, 4294901760
  %v3821 = vsub.f32 %v3819, %v3820
  %v3822 = vand.u32 %v3821, 4294901760
  %3823 = vmatpush1.msra.mxu0 %v3822
  %3824 = vmatprep.subr.mxu0 0.0
  %v3825 = vand.u32 %v3393, 4294901760
  %v3826 = vsub.f32 %v3393, %v3825
  %v3827 = vand.u32 %v3826, 4294901760
  %v3828 = vsub.f32 %v3826, %v3827
  %v3829 = vand.u32 %v3828, 4294901760
  %3830 = vmatpush1.msra.mxu0 %v3829
  %3831 = vmatprep.subr.mxu0 0.0
  %v3832 = vand.u32 %v3394, 4294901760
  %v3833 = vsub.f32 %v3394, %v3832
  %v3834 = vand.u32 %v3833, 4294901760
  %v3835 = vsub.f32 %v3833, %v3834
  %v3836 = vand.u32 %v3835, 4294901760
  %3837 = vmatpush1.msra.mxu0 %v3836
  %3838 = vmatprep.subr.mxu0 0.0
  %v3839 = vand.u32 %v3395, 4294901760
  %v3840 = vsub.f32 %v3395, %v3839
  %v3841 = vand.u32 %v3840, 4294901760
  %v3842 = vsub.f32 %v3840, %v3841
  %v3843 = vand.u32 %v3842, 4294901760
  %3844 = vmatpush1.msra.mxu0 %v3843
  %3845 = vmatprep.subr.mxu0 0.0
  %v3846 = vand.u32 %v3396, 4294901760
  %v3847 = vsub.f32 %v3396, %v3846
  %v3848 = vand.u32 %v3847, 4294901760
  %v3849 = vsub.f32 %v3847, %v3848
  %v3850 = vand.u32 %v3849, 4294901760
  %3851 = vmatpush1.msra.mxu0 %v3850
  %3852 = vmatprep.subr.mxu0 0.0
  %v3853 = vand.u32 %v3397, 4294901760
  %v3854 = vsub.f32 %v3397, %v3853
  %v3855 = vand.u32 %v3854, 4294901760
  %v3856 = vsub.f32 %v3854, %v3855
  %v3857 = vand.u32 %v3856, 4294901760
  %3858 = vmatpush1.msra.mxu0 %v3857
  %3859 = vmatprep.subr.mxu0 0.0
  %3860 = vmatpush1.msra.mxu0 0.0
  %3861 = vmatprep.subr.mxu0 0.0
  %3862 = vmatpush1.msra.mxu0 0.0
  %3863 = vmatprep.subr.mxu0 0.0
  %3864 = vmatpush1.msra.mxu0 0.0
  %3865 = vmatprep.subr.mxu0 0.0
  %3866 = vmatpush1.msra.mxu0 0.0
  %3867 = vmatprep.subr.mxu0 0.0
  %3868 = vmatpush1.msra.mxu0 0.0
  %3869 = vmatprep.subr.mxu0 0.0
  %3870 = vmatpush1.msra.mxu0 0.0
  %3871 = vmatprep.subr.mxu0 0.0
  %3872 = vmatpush1.msra.mxu0 0.0
  %3873 = vmatprep.subr.mxu0 0.0
  %3874 = vmatpush1.msra.mxu0 0.0
  %3875 = vmatprep.subr.mxu0 0.0
  %3876 = vmatpush1.msra.mxu0 0.0
  %3877 = vmatprep.subr.mxu0 0.0
  %3878 = vmatpush1.msra.mxu0 0.0
  %3879 = vmatprep.subr.mxu0 0.0
  %3880 = vmatpush1.msra.mxu0 0.0
  %3881 = vmatprep.subr.mxu0 0.0
  %3882 = vmatpush1.msra.mxu0 0.0
  %3883 = vmatprep.subr.mxu0 0.0
  %3884 = vmatpush1.msra.mxu0 0.0
  %3885 = vmatprep.subr.mxu0 0.0
  %3886 = vmatpush1.msra.mxu0 0.0
  %3887 = vmatprep.subr.mxu0 0.0
  %3888 = vmatpush1.msra.mxu0 0.0
  %3889 = vmatprep.subr.mxu0 0.0
  %3890 = vmatpush1.msra.mxu0 0.0
  %3891 = vmatprep.subr.mxu0 0.0
  %3892 = vmatpush1.msra.mxu0 0.0
  %3893 = vmatprep.subr.mxu0 0.0
  %3894 = vmatpush1.msra.mxu0 0.0
  %3895 = vmatprep.subr.mxu0 0.0
  %3896 = vmatpush1.msra.mxu0 0.0
  %3897 = vmatprep.subr.mxu0 0.0
  %3898 = vmatpush1.msra.mxu0 0.0
  %3899 = vmatprep.subr.mxu0 0.0
  %3900 = vmatpush1.msra.mxu0 0.0
  %3901 = vmatprep.subr.mxu0 0.0
  %3902 = vmatpush1.msra.mxu0 0.0
  %3903 = vmatprep.subr.mxu0 0.0
  %3904 = vmatpush1.msra.mxu0 0.0
  %3905 = vmatprep.subr.mxu0 0.0
  %3906 = vmatpush1.msra.mxu0 0.0
  %3907 = vmatprep.mubr.f32.mxu0 0.0
  %v3908 = vand.u32 %v3406, 4294901760
  %3909 = vmatmul.mubr.f32.gmra.mrb[0].mxu0 %v3908
  %v3910 = vpop.f32.mrb[0].mxu0
  %v3911 = vadd.f32 %v3560, %v3910
  %v3912 = vpop.f32.mrb[0].mxu0
  %3913 = vmatprep.mubr.f32.mxu0 0.0
  %v3914 = vand.u32 %v3409, 4294901760
  %3915 = vmatmul.mubr.f32.gmra.mrb[0].mxu0 %v3914
  %v3916 = vpop.f32.mrb[0].mxu0
  %v3917 = vadd.f32 %v3570, %v3916
  %v3918 = vpop.f32.mrb[0].mxu0
  %3919 = vmatprep.mubr.f32.mxu0 0.0
  %v3920 = vand.u32 %v3412, 4294901760
  %3921 = vmatmul.mubr.f32.gmra.mrb[0].mxu0 %v3920
  %v3922 = vpop.f32.mrb[0].mxu0
  %v3923 = vadd.f32 %v3580, %v3922
  %v3924 = vpop.f32.mrb[0].mxu0
  %3925 = vmatprep.mubr.f32.mxu0 0.0
  %v3926 = vand.u32 %v3415, 4294901760
  %3927 = vmatmul.mubr.f32.gmra.mrb[0].mxu0 %v3926
  %v3928 = vpop.f32.mrb[0].mxu0
  %v3929 = vadd.f32 %v3590, %v3928
  %v3930 = vpop.f32.mrb[0].mxu0
  %3931 = vmatprep.mubr.f32.mxu0 0.0
  %v3932 = vand.u32 %v3418, 4294901760
  %3933 = vmatmul.mubr.f32.gmra.mrb[0].mxu0 %v3932
  %v3934 = vpop.f32.mrb[0].mxu0
  %v3935 = vadd.f32 %v3600, %v3934
  %v3936 = vpop.f32.mrb[0].mxu0
  %3937 = vmatprep.mubr.f32.mxu0 0.0
  %v3938 = vand.u32 %v3421, 4294901760
  %3939 = vmatmul.mubr.f32.gmra.mrb[0].mxu0 %v3938
  %v3940 = vpop.f32.mrb[0].mxu0
  %v3941 = vadd.f32 %v3610, %v3940
  %v3942 = vpop.f32.mrb[0].mxu0
  %3943 = vmatprep.mubr.f32.mxu0 0.0
  %v3944 = vand.u32 %v3424, 4294901760
  %3945 = vmatmul.mubr.f32.gmra.mrb[0].mxu0 %v3944
  %v3946 = vpop.f32.mrb[0].mxu0
  %v3947 = vadd.f32 %v3620, %v3946
  %v3948 = vpop.f32.mrb[0].mxu0
  %3949 = vmatprep.mubr.f32.mxu0 0.0
  %v3950 = vand.u32 %v3427, 4294901760
  %3951 = vmatmul.mubr.f32.gmra.mrb[0].mxu0 %v3950
  %v3952 = vpop.f32.mrb[0].mxu0
  %v3953 = vadd.f32 %v3630, %v3952
  %v3954 = vpop.f32.mrb[0].mxu0
  %3955 = vmatprep.mubr.f32.mxu0 0.0
  %v3956 = vand.u32 %v3430, 4294901760
  %3957 = vmatmul.mubr.f32.gmra.mrb[0].mxu0 %v3956
  %v3958 = vpop.f32.mrb[0].mxu0
  %v3959 = vadd.f32 %v3640, %v3958
  %v3960 = vpop.f32.mrb[0].mxu0
  %3961 = vmatprep.mubr.f32.mxu0 0.0
  %v3962 = vand.u32 %v3433, 4294901760
  %3963 = vmatmul.mubr.f32.gmra.mrb[0].mxu0 %v3962
  %v3964 = vpop.f32.mrb[0].mxu0
  %v3965 = vadd.f32 %v3650, %v3964
  %v3966 = vpop.f32.mrb[0].mxu0
  %3967 = vmatprep.mubr.f32.mxu0 0.0
  %v3968 = vand.u32 %v3436, 4294901760
  %3969 = vmatmul.mubr.f32.gmra.mrb[0].mxu0 %v3968
  %v3970 = vpop.f32.mrb[0].mxu0
  %v3971 = vadd.f32 %v3660, %v3970
  %v3972 = vpop.f32.mrb[0].mxu0
  %3973 = vmatprep.mubr.f32.mxu0 0.0
  %v3974 = vand.u32 %v3439, 4294901760
  %3975 = vmatmul.mubr.f32.gmra.mrb[0].mxu0 %v3974
  %v3976 = vpop.f32.mrb[0].mxu0
  %v3977 = vadd.f32 %v3670, %v3976
  %v3978 = vpop.f32.mrb[0].mxu0
  %3979 = vmatprep.mubr.f32.mxu0 0.0
  %v3980 = vand.u32 %v3442, 4294901760
  %3981 = vmatmul.mubr.f32.gmra.mrb[0].mxu0 %v3980
  %v3982 = vpop.f32.mrb[0].mxu0
  %v3983 = vadd.f32 %v3680, %v3982
  %v3984 = vpop.f32.mrb[0].mxu0
  %3985 = vmatprep.mubr.f32.mxu0 0.0
  %v3986 = vand.u32 %v3445, 4294901760
  %3987 = vmatmul.mubr.f32.gmra.mrb[0].mxu0 %v3986
  %v3988 = vpop.f32.mrb[0].mxu0
  %v3989 = vadd.f32 %v3690, %v3988
  %v3990 = vpop.f32.mrb[0].mxu0
  %3991 = vmatprep.mubr.f32.mxu0 0.0
  %v3992 = vand.u32 %v3448, 4294901760
  %3993 = vmatmul.mubr.f32.gmra.mrb[0].mxu0 %v3992
  %v3994 = vpop.f32.mrb[0].mxu0
  %v3995 = vadd.f32 %v3700, %v3994
  %v3996 = vpop.f32.mrb[0].mxu0
  %3997 = vmatprep.mubr.f32.mxu0 0.0
  %v3998 = vand.u32 %v3451, 4294901760
  %3999 = vmatmul.mubr.f32.gmra.mrb[0].mxu0 %v3998
  %v4000 = vpop.f32.mrb[0].mxu0
  %v4001 = vadd.f32 %v3710, %v4000
  %v4002 = vpop.f32.mrb[0].mxu0
  %4003 = vmatprep.mubr.f32.mxu0 0.0
  %v4004 = vand.u32 %v3454, 4294901760
  %4005 = vmatmul.mubr.f32.gmra.mrb[0].mxu0 %v4004
  %v4006 = vpop.f32.mrb[0].mxu0
  %v4007 = vadd.f32 %v3720, %v4006
  %v4008 = vpop.f32.mrb[0].mxu0
  %4009 = vmatprep.mubr.f32.mxu0 0.0
  %v4010 = vand.u32 %v3457, 4294901760
  %4011 = vmatmul.mubr.f32.gmra.mrb[0].mxu0 %v4010
  %v4012 = vpop.f32.mrb[0].mxu0
  %v4013 = vadd.f32 %v3730, %v4012
  %v4014 = vpop.f32.mrb[0].mxu0
  %4015 = vmatprep.mubr.f32.mxu0 0.0
  %v4016 = vand.u32 %v3460, 4294901760
  %4017 = vmatmul.mubr.f32.gmra.mrb[0].mxu0 %v4016
  %v4018 = vpop.f32.mrb[0].mxu0
  %v4019 = vadd.f32 %v3740, %v4018
  %v4020 = vpop.f32.mrb[0].mxu0
  %4021 = vmatprep.mubr.f32.mxu0 0.0
  %v4022 = vand.u32 %v3463, 4294901760
  %4023 = vmatmul.mubr.f32.gmra.mrb[0].mxu0 %v4022
  %v4024 = vpop.f32.mrb[0].mxu0
  %v4025 = vadd.f32 %v3750, %v4024
  %v4026 = vpop.f32.mrb[0].mxu0
  %4027 = vmatprep.mubr.f32.mxu0 0.0
  %v4028 = vand.u32 %v3466, 4294901760
  %4029 = vmatmul.mubr.f32.gmra.mrb[0].mxu0 %v4028
  %v4030 = vpop.f32.mrb[0].mxu0
  %v4031 = vadd.f32 %v3760, %v4030
  %v4032 = vpop.f32.mrb[0].mxu0
  %4033 = vmatprep.mubr.f32.mxu0 0.0
  %v4034 = vand.u32 %v3469, 4294901760
  %4035 = vmatmul.mubr.f32.gmra.mrb[0].mxu0 %v4034
  %v4036 = vpop.f32.mrb[0].mxu0
  %v4037 = vadd.f32 %v3770, %v4036
  %v4038 = vpop.f32.mrb[0].mxu0
  %4039 = vmatprep.mubr.f32.mxu0 0.0
  %v4040 = vand.u32 %v3472, 4294901760
  %4041 = vmatmul.mubr.f32.gmra.mrb[0].mxu0 %v4040
  %v4042 = vpop.f32.mrb[0].mxu0
  %v4043 = vadd.f32 %v3780, %v4042
  %v4044 = vpop.f32.mrb[0].mxu0
  %4045 = vmatprep.mubr.f32.mxu0 0.0
  %v4046 = vand.u32 %v3475, 4294901760
  %4047 = vmatmul.mubr.f32.gmra.mrb[0].mxu0 %v4046
  %v4048 = vpop.f32.mrb[0].mxu0
  %v4049 = vadd.f32 %v3790, %v4048
  %v4050 = vpop.f32.mrb[0].mxu0
  %4051 = vmatprep.mubr.f32.mxu0 0.0
  %v4052 = vand.u32 %v3478, 4294901760
  %4053 = vmatmul.mubr.f32.gmra.mrb[0].mxu0 %v4052
  %v4054 = vpop.f32.mrb[0].mxu0
  %v4055 = vadd.f32 %v3800, %v4054
  %v4056 = vpop.f32.mrb[0].mxu0
  %4057 = vdwg.mxu0
  %4058 = vmatprep.subr.mxu0 0.0
  %v4059 = vand.u32 %v3390, 4294901760
  %v4060 = vsub.f32 %v3390, %v4059
  %4061 = vmatpush1.msra.mxu0 %v4060
  %4062 = vmatprep.subr.mxu0 0.0
  %v4063 = vand.u32 %v3391, 4294901760
  %v4064 = vsub.f32 %v3391, %v4063
  %4065 = vmatpush1.msra.mxu0 %v4064
  %4066 = vmatprep.subr.mxu0 0.0
  %v4067 = vand.u32 %v3392, 4294901760
  %v4068 = vsub.f32 %v3392, %v4067
  %4069 = vmatpush1.msra.mxu0 %v4068
  %4070 = vmatprep.subr.mxu0 0.0
  %v4071 = vand.u32 %v3393, 4294901760
  %v4072 = vsub.f32 %v3393, %v4071
  %4073 = vmatpush1.msra.mxu0 %v4072
  %4074 = vmatprep.subr.mxu0 0.0
  %v4075 = vand.u32 %v3394, 4294901760
  %v4076 = vsub.f32 %v3394, %v4075
  %4077 = vmatpush1.msra.mxu0 %v4076
  %4078 = vmatprep.subr.mxu0 0.0
  %v4079 = vand.u32 %v3395, 4294901760
  %v4080 = vsub.f32 %v3395, %v4079
  %4081 = vmatpush1.msra.mxu0 %v4080
  %4082 = vmatprep.subr.mxu0 0.0
  %v4083 = vand.u32 %v3396, 4294901760
  %v4084 = vsub.f32 %v3396, %v4083
  %4085 = vmatpush1.msra.mxu0 %v4084
  %4086 = vmatprep.subr.mxu0 0.0
  %v4087 = vand.u32 %v3397, 4294901760
  %v4088 = vsub.f32 %v3397, %v4087
  %4089 = vmatpush1.msra.mxu0 %v4088
  %4090 = vmatprep.subr.mxu0 0.0
  %4091 = vmatpush1.msra.mxu0 0.0
  %4092 = vmatprep.subr.mxu0 0.0
  %4093 = vmatpush1.msra.mxu0 0.0
  %4094 = vmatprep.subr.mxu0 0.0
  %4095 = vmatpush1.msra.mxu0 0.0
  %4096 = vmatprep.subr.mxu0 0.0
  %4097 = vmatpush1.msra.mxu0 0.0
  %4098 = vmatprep.subr.mxu0 0.0
  %4099 = vmatpush1.msra.mxu0 0.0
  %4100 = vmatprep.subr.mxu0 0.0
  %4101 = vmatpush1.msra.mxu0 0.0
  %4102 = vmatprep.subr.mxu0 0.0
  %4103 = vmatpush1.msra.mxu0 0.0
  %4104 = vmatprep.subr.mxu0 0.0
  %4105 = vmatpush1.msra.mxu0 0.0
  %4106 = vmatprep.subr.mxu0 0.0
  %4107 = vmatpush1.msra.mxu0 0.0
  %4108 = vmatprep.subr.mxu0 0.0
  %4109 = vmatpush1.msra.mxu0 0.0
  %4110 = vmatprep.subr.mxu0 0.0
  %4111 = vmatpush1.msra.mxu0 0.0
  %4112 = vmatprep.subr.mxu0 0.0
  %4113 = vmatpush1.msra.mxu0 0.0
  %4114 = vmatprep.subr.mxu0 0.0
  %4115 = vmatpush1.msra.mxu0 0.0
  %4116 = vmatprep.subr.mxu0 0.0
  %4117 = vmatpush1.msra.mxu0 0.0
  %4118 = vmatprep.subr.mxu0 0.0
  %4119 = vmatpush1.msra.mxu0 0.0
  %4120 = vmatprep.subr.mxu0 0.0
  %4121 = vmatpush1.msra.mxu0 0.0
  %4122 = vmatprep.subr.mxu0 0.0
  %4123 = vmatpush1.msra.mxu0 0.0
  %4124 = vmatprep.subr.mxu0 0.0
  %4125 = vmatpush1.msra.mxu0 0.0
  %4126 = vmatprep.subr.mxu0 0.0
  %4127 = vmatpush1.msra.mxu0 0.0
  %4128 = vmatprep.subr.mxu0 0.0
  %4129 = vmatpush1.msra.mxu0 0.0
  %4130 = vmatprep.subr.mxu0 0.0
  %4131 = vmatpush1.msra.mxu0 0.0
  %4132 = vmatprep.subr.mxu0 0.0
  %4133 = vmatpush1.msra.mxu0 0.0
  %4134 = vmatprep.subr.mxu0 0.0
  %4135 = vmatpush1.msra.mxu0 0.0
  %4136 = vmatprep.subr.mxu0 0.0
  %4137 = vmatpush1.msra.mxu0 0.0
  %4138 = vmatprep.mubr.f32.mxu0 0.0
  %v4139 = vand.u32 %v3406, 4294901760
  %v4140 = vsub.f32 %v3406, %v4139
  %4141 = vmatmul.mubr.f32.gmra.mrb[0].mxu0 %v4140
  %v4142 = vpop.f32.mrb[0].mxu0
  %v4143 = vadd.f32 %v3911, %v4142
  %v4144 = vpop.f32.mrb[0].mxu0
  %4145 = vmatprep.mubr.f32.mxu0 0.0
  %v4146 = vand.u32 %v3409, 4294901760
  %v4147 = vsub.f32 %v3409, %v4146
  %4148 = vmatmul.mubr.f32.gmra.mrb[0].mxu0 %v4147
  %v4149 = vpop.f32.mrb[0].mxu0
  %v4150 = vadd.f32 %v3917, %v4149
  %v4151 = vpop.f32.mrb[0].mxu0
  %4152 = vmatprep.mubr.f32.mxu0 0.0
  %v4153 = vand.u32 %v3412, 4294901760
  %v4154 = vsub.f32 %v3412, %v4153
  %4155 = vmatmul.mubr.f32.gmra.mrb[0].mxu0 %v4154
  %v4156 = vpop.f32.mrb[0].mxu0
  %v4157 = vadd.f32 %v3923, %v4156
  %v4158 = vpop.f32.mrb[0].mxu0
  %4159 = vmatprep.mubr.f32.mxu0 0.0
  %v4160 = vand.u32 %v3415, 4294901760
  %v4161 = vsub.f32 %v3415, %v4160
  %4162 = vmatmul.mubr.f32.gmra.mrb[0].mxu0 %v4161
  %v4163 = vpop.f32.mrb[0].mxu0
  %v4164 = vadd.f32 %v3929, %v4163
  %v4165 = vpop.f32.mrb[0].mxu0
  %4166 = vmatprep.mubr.f32.mxu0 0.0
  %v4167 = vand.u32 %v3418, 4294901760
  %v4168 = vsub.f32 %v3418, %v4167
  %4169 = vmatmul.mubr.f32.gmra.mrb[0].mxu0 %v4168
  %v4170 = vpop.f32.mrb[0].mxu0
  %v4171 = vadd.f32 %v3935, %v4170
  %v4172 = vpop.f32.mrb[0].mxu0
  %4173 = vmatprep.mubr.f32.mxu0 0.0
  %v4174 = vand.u32 %v3421, 4294901760
  %v4175 = vsub.f32 %v3421, %v4174
  %4176 = vmatmul.mubr.f32.gmra.mrb[0].mxu0 %v4175
  %v4177 = vpop.f32.mrb[0].mxu0
  %v4178 = vadd.f32 %v3941, %v4177
  %v4179 = vpop.f32.mrb[0].mxu0
  %4180 = vmatprep.mubr.f32.mxu0 0.0
  %v4181 = vand.u32 %v3424, 4294901760
  %v4182 = vsub.f32 %v3424, %v4181
  %4183 = vmatmul.mubr.f32.gmra.mrb[0].mxu0 %v4182
  %v4184 = vpop.f32.mrb[0].mxu0
  %v4185 = vadd.f32 %v3947, %v4184
  %v4186 = vpop.f32.mrb[0].mxu0
  %4187 = vmatprep.mubr.f32.mxu0 0.0
  %v4188 = vand.u32 %v3427, 4294901760
  %v4189 = vsub.f32 %v3427, %v4188
  %4190 = vmatmul.mubr.f32.gmra.mrb[0].mxu0 %v4189
  %v4191 = vpop.f32.mrb[0].mxu0
  %v4192 = vadd.f32 %v3953, %v4191
  %v4193 = vpop.f32.mrb[0].mxu0
  %4194 = vmatprep.mubr.f32.mxu0 0.0
  %v4195 = vand.u32 %v3430, 4294901760
  %v4196 = vsub.f32 %v3430, %v4195
  %4197 = vmatmul.mubr.f32.gmra.mrb[0].mxu0 %v4196
  %v4198 = vpop.f32.mrb[0].mxu0
  %v4199 = vadd.f32 %v3959, %v4198
  %v4200 = vpop.f32.mrb[0].mxu0
  %4201 = vmatprep.mubr.f32.mxu0 0.0
  %v4202 = vand.u32 %v3433, 4294901760
  %v4203 = vsub.f32 %v3433, %v4202
  %4204 = vmatmul.mubr.f32.gmra.mrb[0].mxu0 %v4203
  %v4205 = vpop.f32.mrb[0].mxu0
  %v4206 = vadd.f32 %v3965, %v4205
  %v4207 = vpop.f32.mrb[0].mxu0
  %4208 = vmatprep.mubr.f32.mxu0 0.0
  %v4209 = vand.u32 %v3436, 4294901760
  %v4210 = vsub.f32 %v3436, %v4209
  %4211 = vmatmul.mubr.f32.gmra.mrb[0].mxu0 %v4210
  %v4212 = vpop.f32.mrb[0].mxu0
  %v4213 = vadd.f32 %v3971, %v4212
  %v4214 = vpop.f32.mrb[0].mxu0
  %4215 = vmatprep.mubr.f32.mxu0 0.0
  %v4216 = vand.u32 %v3439, 4294901760
  %v4217 = vsub.f32 %v3439, %v4216
  %4218 = vmatmul.mubr.f32.gmra.mrb[0].mxu0 %v4217
  %v4219 = vpop.f32.mrb[0].mxu0
  %v4220 = vadd.f32 %v3977, %v4219
  %v4221 = vpop.f32.mrb[0].mxu0
  %4222 = vmatprep.mubr.f32.mxu0 0.0
  %v4223 = vand.u32 %v3442, 4294901760
  %v4224 = vsub.f32 %v3442, %v4223
  %4225 = vmatmul.mubr.f32.gmra.mrb[0].mxu0 %v4224
  %v4226 = vpop.f32.mrb[0].mxu0
  %v4227 = vadd.f32 %v3983, %v4226
  %v4228 = vpop.f32.mrb[0].mxu0
  %4229 = vmatprep.mubr.f32.mxu0 0.0
  %v4230 = vand.u32 %v3445, 4294901760
  %v4231 = vsub.f32 %v3445, %v4230
  %4232 = vmatmul.mubr.f32.gmra.mrb[0].mxu0 %v4231
  %v4233 = vpop.f32.mrb[0].mxu0
  %v4234 = vadd.f32 %v3989, %v4233
  %v4235 = vpop.f32.mrb[0].mxu0
  %4236 = vmatprep.mubr.f32.mxu0 0.0
  %v4237 = vand.u32 %v3448, 4294901760
  %v4238 = vsub.f32 %v3448, %v4237
  %4239 = vmatmul.mubr.f32.gmra.mrb[0].mxu0 %v4238
  %v4240 = vpop.f32.mrb[0].mxu0
  %v4241 = vadd.f32 %v3995, %v4240
  %v4242 = vpop.f32.mrb[0].mxu0
  %4243 = vmatprep.mubr.f32.mxu0 0.0
  %v4244 = vand.u32 %v3451, 4294901760
  %v4245 = vsub.f32 %v3451, %v4244
  %4246 = vmatmul.mubr.f32.gmra.mrb[0].mxu0 %v4245
  %v4247 = vpop.f32.mrb[0].mxu0
  %v4248 = vadd.f32 %v4001, %v4247
  %v4249 = vpop.f32.mrb[0].mxu0
  %4250 = vmatprep.mubr.f32.mxu0 0.0
  %v4251 = vand.u32 %v3454, 4294901760
  %v4252 = vsub.f32 %v3454, %v4251
  %4253 = vmatmul.mubr.f32.gmra.mrb[0].mxu0 %v4252
  %v4254 = vpop.f32.mrb[0].mxu0
  %v4255 = vadd.f32 %v4007, %v4254
  %v4256 = vpop.f32.mrb[0].mxu0
  %4257 = vmatprep.mubr.f32.mxu0 0.0
  %v4258 = vand.u32 %v3457, 4294901760
  %v4259 = vsub.f32 %v3457, %v4258
  %4260 = vmatmul.mubr.f32.gmra.mrb[0].mxu0 %v4259
  %v4261 = vpop.f32.mrb[0].mxu0
  %v4262 = vadd.f32 %v4013, %v4261
  %v4263 = vpop.f32.mrb[0].mxu0
  %4264 = vmatprep.mubr.f32.mxu0 0.0
  %v4265 = vand.u32 %v3460, 4294901760
  %v4266 = vsub.f32 %v3460, %v4265
  %4267 = vmatmul.mubr.f32.gmra.mrb[0].mxu0 %v4266
  %v4268 = vpop.f32.mrb[0].mxu0
  %v4269 = vadd.f32 %v4019, %v4268
  %v4270 = vpop.f32.mrb[0].mxu0
  %4271 = vmatprep.mubr.f32.mxu0 0.0
  %v4272 = vand.u32 %v3463, 4294901760
  %v4273 = vsub.f32 %v3463, %v4272
  %4274 = vmatmul.mubr.f32.gmra.mrb[0].mxu0 %v4273
  %v4275 = vpop.f32.mrb[0].mxu0
  %v4276 = vadd.f32 %v4025, %v4275
  %v4277 = vpop.f32.mrb[0].mxu0
  %4278 = vmatprep.mubr.f32.mxu0 0.0
  %v4279 = vand.u32 %v3466, 4294901760
  %v4280 = vsub.f32 %v3466, %v4279
  %4281 = vmatmul.mubr.f32.gmra.mrb[0].mxu0 %v4280
  %v4282 = vpop.f32.mrb[0].mxu0
  %v4283 = vadd.f32 %v4031, %v4282
  %v4284 = vpop.f32.mrb[0].mxu0
  %4285 = vmatprep.mubr.f32.mxu0 0.0
  %v4286 = vand.u32 %v3469, 4294901760
  %v4287 = vsub.f32 %v3469, %v4286
  %4288 = vmatmul.mubr.f32.gmra.mrb[0].mxu0 %v4287
  %v4289 = vpop.f32.mrb[0].mxu0
  %v4290 = vadd.f32 %v4037, %v4289
  %v4291 = vpop.f32.mrb[0].mxu0
  %4292 = vmatprep.mubr.f32.mxu0 0.0
  %v4293 = vand.u32 %v3472, 4294901760
  %v4294 = vsub.f32 %v3472, %v4293
  %4295 = vmatmul.mubr.f32.gmra.mrb[0].mxu0 %v4294
  %v4296 = vpop.f32.mrb[0].mxu0
  %v4297 = vadd.f32 %v4043, %v4296
  %v4298 = vpop.f32.mrb[0].mxu0
  %4299 = vmatprep.mubr.f32.mxu0 0.0
  %v4300 = vand.u32 %v3475, 4294901760
  %v4301 = vsub.f32 %v3475, %v4300
  %4302 = vmatmul.mubr.f32.gmra.mrb[0].mxu0 %v4301
  %v4303 = vpop.f32.mrb[0].mxu0
  %v4304 = vadd.f32 %v4049, %v4303
  %v4305 = vpop.f32.mrb[0].mxu0
  %4306 = vmatprep.mubr.f32.mxu0 0.0
  %v4307 = vand.u32 %v3478, 4294901760
  %v4308 = vsub.f32 %v3478, %v4307
  %4309 = vmatmul.mubr.f32.gmra.mrb[0].mxu0 %v4308
  %v4310 = vpop.f32.mrb[0].mxu0
  %v4311 = vadd.f32 %v4055, %v4310
  %v4312 = vpop.f32.mrb[0].mxu0
  %4313 = vdwg.mxu0
  %4314 = vmatprep.subr.mxu0 0.0
  %v4315 = vand.u32 %v3390, 4294901760
  %4316 = vmatpush1.msra.mxu0 %v4315
  %4317 = vmatprep.subr.mxu0 0.0
  %v4318 = vand.u32 %v3391, 4294901760
  %4319 = vmatpush1.msra.mxu0 %v4318
  %4320 = vmatprep.subr.mxu0 0.0
  %v4321 = vand.u32 %v3392, 4294901760
  %4322 = vmatpush1.msra.mxu0 %v4321
  %4323 = vmatprep.subr.mxu0 0.0
  %v4324 = vand.u32 %v3393, 4294901760
  %4325 = vmatpush1.msra.mxu0 %v4324
  %4326 = vmatprep.subr.mxu0 0.0
  %v4327 = vand.u32 %v3394, 4294901760
  %4328 = vmatpush1.msra.mxu0 %v4327
  %4329 = vmatprep.subr.mxu0 0.0
  %v4330 = vand.u32 %v3395, 4294901760
  %4331 = vmatpush1.msra.mxu0 %v4330
  %4332 = vmatprep.subr.mxu0 0.0
  %v4333 = vand.u32 %v3396, 4294901760
  %4334 = vmatpush1.msra.mxu0 %v4333
  %4335 = vmatprep.subr.mxu0 0.0
  %v4336 = vand.u32 %v3397, 4294901760
  %4337 = vmatpush1.msra.mxu0 %v4336
  %4338 = vmatprep.subr.mxu0 0.0
  %4339 = vmatpush1.msra.mxu0 0.0
  %4340 = vmatprep.subr.mxu0 0.0
  %4341 = vmatpush1.msra.mxu0 0.0
  %4342 = vmatprep.subr.mxu0 0.0
  %4343 = vmatpush1.msra.mxu0 0.0
  %4344 = vmatprep.subr.mxu0 0.0
  %4345 = vmatpush1.msra.mxu0 0.0
  %4346 = vmatprep.subr.mxu0 0.0
  %4347 = vmatpush1.msra.mxu0 0.0
  %4348 = vmatprep.subr.mxu0 0.0
  %4349 = vmatpush1.msra.mxu0 0.0
  %4350 = vmatprep.subr.mxu0 0.0
  %4351 = vmatpush1.msra.mxu0 0.0
  %4352 = vmatprep.subr.mxu0 0.0
  %4353 = vmatpush1.msra.mxu0 0.0
  %4354 = vmatprep.subr.mxu0 0.0
  %4355 = vmatpush1.msra.mxu0 0.0
  %4356 = vmatprep.subr.mxu0 0.0
  %4357 = vmatpush1.msra.mxu0 0.0
  %4358 = vmatprep.subr.mxu0 0.0
  %4359 = vmatpush1.msra.mxu0 0.0
  %4360 = vmatprep.subr.mxu0 0.0
  %4361 = vmatpush1.msra.mxu0 0.0
  %4362 = vmatprep.subr.mxu0 0.0
  %4363 = vmatpush1.msra.mxu0 0.0
  %4364 = vmatprep.subr.mxu0 0.0
  %4365 = vmatpush1.msra.mxu0 0.0
  %4366 = vmatprep.subr.mxu0 0.0
  %4367 = vmatpush1.msra.mxu0 0.0
  %4368 = vmatprep.subr.mxu0 0.0
  %4369 = vmatpush1.msra.mxu0 0.0
  %4370 = vmatprep.subr.mxu0 0.0
  %4371 = vmatpush1.msra.mxu0 0.0
  %4372 = vmatprep.subr.mxu0 0.0
  %4373 = vmatpush1.msra.mxu0 0.0
  %4374 = vmatprep.subr.mxu0 0.0
  %4375 = vmatpush1.msra.mxu0 0.0
  %4376 = vmatprep.subr.mxu0 0.0
  %4377 = vmatpush1.msra.mxu0 0.0
  %4378 = vmatprep.subr.mxu0 0.0
  %4379 = vmatpush1.msra.mxu0 0.0
  %4380 = vmatprep.subr.mxu0 0.0
  %4381 = vmatpush1.msra.mxu0 0.0
  %4382 = vmatprep.subr.mxu0 0.0
  %4383 = vmatpush1.msra.mxu0 0.0
  %4384 = vmatprep.subr.mxu0 0.0
  %4385 = vmatpush1.msra.mxu0 0.0
  %4386 = vmatprep.mubr.f32.mxu0 0.0
  %v4387 = vand.u32 %v3406, 4294901760
  %v4388 = vsub.f32 %v3406, %v4387
  %v4389 = vand.u32 %v4388, 4294901760
  %4390 = vmatmul.mubr.f32.gmra.mrb[0].mxu0 %v4389
  %v4391 = vpop.f32.mrb[0].mxu0
  %v4392 = vadd.f32 %v4143, %v4391
  %v4393 = vpop.f32.mrb[0].mxu0
  %4394 = vmatprep.mubr.f32.mxu0 0.0
  %v4395 = vand.u32 %v3409, 4294901760
  %v4396 = vsub.f32 %v3409, %v4395
  %v4397 = vand.u32 %v4396, 4294901760
  %4398 = vmatmul.mubr.f32.gmra.mrb[0].mxu0 %v4397
  %v4399 = vpop.f32.mrb[0].mxu0
  %v4400 = vadd.f32 %v4150, %v4399
  %v4401 = vpop.f32.mrb[0].mxu0
  %4402 = vmatprep.mubr.f32.mxu0 0.0
  %v4403 = vand.u32 %v3412, 4294901760
  %v4404 = vsub.f32 %v3412, %v4403
  %v4405 = vand.u32 %v4404, 4294901760
  %4406 = vmatmul.mubr.f32.gmra.mrb[0].mxu0 %v4405
  %v4407 = vpop.f32.mrb[0].mxu0
  %v4408 = vadd.f32 %v4157, %v4407
  %v4409 = vpop.f32.mrb[0].mxu0
  %4410 = vmatprep.mubr.f32.mxu0 0.0
  %v4411 = vand.u32 %v3415, 4294901760
  %v4412 = vsub.f32 %v3415, %v4411
  %v4413 = vand.u32 %v4412, 4294901760
  %4414 = vmatmul.mubr.f32.gmra.mrb[0].mxu0 %v4413
  %v4415 = vpop.f32.mrb[0].mxu0
  %v4416 = vadd.f32 %v4164, %v4415
  %v4417 = vpop.f32.mrb[0].mxu0
  %4418 = vmatprep.mubr.f32.mxu0 0.0
  %v4419 = vand.u32 %v3418, 4294901760
  %v4420 = vsub.f32 %v3418, %v4419
  %v4421 = vand.u32 %v4420, 4294901760
  %4422 = vmatmul.mubr.f32.gmra.mrb[0].mxu0 %v4421
  %v4423 = vpop.f32.mrb[0].mxu0
  %v4424 = vadd.f32 %v4171, %v4423
  %v4425 = vpop.f32.mrb[0].mxu0
  %4426 = vmatprep.mubr.f32.mxu0 0.0
  %v4427 = vand.u32 %v3421, 4294901760
  %v4428 = vsub.f32 %v3421, %v4427
  %v4429 = vand.u32 %v4428, 4294901760
  %4430 = vmatmul.mubr.f32.gmra.mrb[0].mxu0 %v4429
  %v4431 = vpop.f32.mrb[0].mxu0
  %v4432 = vadd.f32 %v4178, %v4431
  %v4433 = vpop.f32.mrb[0].mxu0
  %4434 = vmatprep.mubr.f32.mxu0 0.0
  %v4435 = vand.u32 %v3424, 4294901760
  %v4436 = vsub.f32 %v3424, %v4435
  %v4437 = vand.u32 %v4436, 4294901760
  %4438 = vmatmul.mubr.f32.gmra.mrb[0].mxu0 %v4437
  %v4439 = vpop.f32.mrb[0].mxu0
  %v4440 = vadd.f32 %v4185, %v4439
  %v4441 = vpop.f32.mrb[0].mxu0
  %4442 = vmatprep.mubr.f32.mxu0 0.0
  %v4443 = vand.u32 %v3427, 4294901760
  %v4444 = vsub.f32 %v3427, %v4443
  %v4445 = vand.u32 %v4444, 4294901760
  %4446 = vmatmul.mubr.f32.gmra.mrb[0].mxu0 %v4445
  %v4447 = vpop.f32.mrb[0].mxu0
  %v4448 = vadd.f32 %v4192, %v4447
  %v4449 = vpop.f32.mrb[0].mxu0
  %4450 = vmatprep.mubr.f32.mxu0 0.0
  %v4451 = vand.u32 %v3430, 4294901760
  %v4452 = vsub.f32 %v3430, %v4451
  %v4453 = vand.u32 %v4452, 4294901760
  %4454 = vmatmul.mubr.f32.gmra.mrb[0].mxu0 %v4453
  %v4455 = vpop.f32.mrb[0].mxu0
  %v4456 = vadd.f32 %v4199, %v4455
  %v4457 = vpop.f32.mrb[0].mxu0
  %4458 = vmatprep.mubr.f32.mxu0 0.0
  %v4459 = vand.u32 %v3433, 4294901760
  %v4460 = vsub.f32 %v3433, %v4459
  %v4461 = vand.u32 %v4460, 4294901760
  %4462 = vmatmul.mubr.f32.gmra.mrb[0].mxu0 %v4461
  %v4463 = vpop.f32.mrb[0].mxu0
  %v4464 = vadd.f32 %v4206, %v4463
  %v4465 = vpop.f32.mrb[0].mxu0
  %4466 = vmatprep.mubr.f32.mxu0 0.0
  %v4467 = vand.u32 %v3436, 4294901760
  %v4468 = vsub.f32 %v3436, %v4467
  %v4469 = vand.u32 %v4468, 4294901760
  %4470 = vmatmul.mubr.f32.gmra.mrb[0].mxu0 %v4469
  %v4471 = vpop.f32.mrb[0].mxu0
  %v4472 = vadd.f32 %v4213, %v4471
  %v4473 = vpop.f32.mrb[0].mxu0
  %4474 = vmatprep.mubr.f32.mxu0 0.0
  %v4475 = vand.u32 %v3439, 4294901760
  %v4476 = vsub.f32 %v3439, %v4475
  %v4477 = vand.u32 %v4476, 4294901760
  %4478 = vmatmul.mubr.f32.gmra.mrb[0].mxu0 %v4477
  %v4479 = vpop.f32.mrb[0].mxu0
  %v4480 = vadd.f32 %v4220, %v4479
  %v4481 = vpop.f32.mrb[0].mxu0
  %4482 = vmatprep.mubr.f32.mxu0 0.0
  %v4483 = vand.u32 %v3442, 4294901760
  %v4484 = vsub.f32 %v3442, %v4483
  %v4485 = vand.u32 %v4484, 4294901760
  %4486 = vmatmul.mubr.f32.gmra.mrb[0].mxu0 %v4485
  %v4487 = vpop.f32.mrb[0].mxu0
  %v4488 = vadd.f32 %v4227, %v4487
  %v4489 = vpop.f32.mrb[0].mxu0
  %4490 = vmatprep.mubr.f32.mxu0 0.0
  %v4491 = vand.u32 %v3445, 4294901760
  %v4492 = vsub.f32 %v3445, %v4491
  %v4493 = vand.u32 %v4492, 4294901760
  %4494 = vmatmul.mubr.f32.gmra.mrb[0].mxu0 %v4493
  %v4495 = vpop.f32.mrb[0].mxu0
  %v4496 = vadd.f32 %v4234, %v4495
  %v4497 = vpop.f32.mrb[0].mxu0
  %4498 = vmatprep.mubr.f32.mxu0 0.0
  %v4499 = vand.u32 %v3448, 4294901760
  %v4500 = vsub.f32 %v3448, %v4499
  %v4501 = vand.u32 %v4500, 4294901760
  %4502 = vmatmul.mubr.f32.gmra.mrb[0].mxu0 %v4501
  %v4503 = vpop.f32.mrb[0].mxu0
  %v4504 = vadd.f32 %v4241, %v4503
  %v4505 = vpop.f32.mrb[0].mxu0
  %4506 = vmatprep.mubr.f32.mxu0 0.0
  %v4507 = vand.u32 %v3451, 4294901760
  %v4508 = vsub.f32 %v3451, %v4507
  %v4509 = vand.u32 %v4508, 4294901760
  %4510 = vmatmul.mubr.f32.gmra.mrb[0].mxu0 %v4509
  %v4511 = vpop.f32.mrb[0].mxu0
  %v4512 = vadd.f32 %v4248, %v4511
  %v4513 = vpop.f32.mrb[0].mxu0
  %4514 = vmatprep.mubr.f32.mxu0 0.0
  %v4515 = vand.u32 %v3454, 4294901760
  %v4516 = vsub.f32 %v3454, %v4515
  %v4517 = vand.u32 %v4516, 4294901760
  %4518 = vmatmul.mubr.f32.gmra.mrb[0].mxu0 %v4517
  %v4519 = vpop.f32.mrb[0].mxu0
  %v4520 = vadd.f32 %v4255, %v4519
  %v4521 = vpop.f32.mrb[0].mxu0
  %4522 = vmatprep.mubr.f32.mxu0 0.0
  %v4523 = vand.u32 %v3457, 4294901760
  %v4524 = vsub.f32 %v3457, %v4523
  %v4525 = vand.u32 %v4524, 4294901760
  %4526 = vmatmul.mubr.f32.gmra.mrb[0].mxu0 %v4525
  %v4527 = vpop.f32.mrb[0].mxu0
  %v4528 = vadd.f32 %v4262, %v4527
  %v4529 = vpop.f32.mrb[0].mxu0
  %4530 = vmatprep.mubr.f32.mxu0 0.0
  %v4531 = vand.u32 %v3460, 4294901760
  %v4532 = vsub.f32 %v3460, %v4531
  %v4533 = vand.u32 %v4532, 4294901760
  %4534 = vmatmul.mubr.f32.gmra.mrb[0].mxu0 %v4533
  %v4535 = vpop.f32.mrb[0].mxu0
  %v4536 = vadd.f32 %v4269, %v4535
  %v4537 = vpop.f32.mrb[0].mxu0
  %4538 = vmatprep.mubr.f32.mxu0 0.0
  %v4539 = vand.u32 %v3463, 4294901760
  %v4540 = vsub.f32 %v3463, %v4539
  %v4541 = vand.u32 %v4540, 4294901760
  %4542 = vmatmul.mubr.f32.gmra.mrb[0].mxu0 %v4541
  %v4543 = vpop.f32.mrb[0].mxu0
  %v4544 = vadd.f32 %v4276, %v4543
  %v4545 = vpop.f32.mrb[0].mxu0
  %4546 = vmatprep.mubr.f32.mxu0 0.0
  %v4547 = vand.u32 %v3466, 4294901760
  %v4548 = vsub.f32 %v3466, %v4547
  %v4549 = vand.u32 %v4548, 4294901760
  %4550 = vmatmul.mubr.f32.gmra.mrb[0].mxu0 %v4549
  %v4551 = vpop.f32.mrb[0].mxu0
  %v4552 = vadd.f32 %v4283, %v4551
  %v4553 = vpop.f32.mrb[0].mxu0
  %4554 = vmatprep.mubr.f32.mxu0 0.0
  %v4555 = vand.u32 %v3469, 4294901760
  %v4556 = vsub.f32 %v3469, %v4555
  %v4557 = vand.u32 %v4556, 4294901760
  %4558 = vmatmul.mubr.f32.gmra.mrb[0].mxu0 %v4557
  %v4559 = vpop.f32.mrb[0].mxu0
  %v4560 = vadd.f32 %v4290, %v4559
  %v4561 = vpop.f32.mrb[0].mxu0
  %4562 = vmatprep.mubr.f32.mxu0 0.0
  %v4563 = vand.u32 %v3472, 4294901760
  %v4564 = vsub.f32 %v3472, %v4563
  %v4565 = vand.u32 %v4564, 4294901760
  %4566 = vmatmul.mubr.f32.gmra.mrb[0].mxu0 %v4565
  %v4567 = vpop.f32.mrb[0].mxu0
  %v4568 = vadd.f32 %v4297, %v4567
  %v4569 = vpop.f32.mrb[0].mxu0
  %4570 = vmatprep.mubr.f32.mxu0 0.0
  %v4571 = vand.u32 %v3475, 4294901760
  %v4572 = vsub.f32 %v3475, %v4571
  %v4573 = vand.u32 %v4572, 4294901760
  %4574 = vmatmul.mubr.f32.gmra.mrb[0].mxu0 %v4573
  %v4575 = vpop.f32.mrb[0].mxu0
  %v4576 = vadd.f32 %v4304, %v4575
  %v4577 = vpop.f32.mrb[0].mxu0
  %4578 = vmatprep.mubr.f32.mxu0 0.0
  %v4579 = vand.u32 %v3478, 4294901760
  %v4580 = vsub.f32 %v3478, %v4579
  %v4581 = vand.u32 %v4580, 4294901760
  %4582 = vmatmul.mubr.f32.gmra.mrb[0].mxu0 %v4581
  %v4583 = vpop.f32.mrb[0].mxu0
  %v4584 = vadd.f32 %v4311, %v4583
  %v4585 = vpop.f32.mrb[0].mxu0
  %4586 = vdwg.mxu0
  %4587 = vmatprep.subr.mxu0 0.0
  %v4588 = vand.u32 %v3390, 4294901760
  %v4589 = vsub.f32 %v3390, %v4588
  %v4590 = vand.u32 %v4589, 4294901760
  %4591 = vmatpush1.msra.mxu0 %v4590
  %4592 = vmatprep.subr.mxu0 0.0
  %v4593 = vand.u32 %v3391, 4294901760
  %v4594 = vsub.f32 %v3391, %v4593
  %v4595 = vand.u32 %v4594, 4294901760
  %4596 = vmatpush1.msra.mxu0 %v4595
  %4597 = vmatprep.subr.mxu0 0.0
  %v4598 = vand.u32 %v3392, 4294901760
  %v4599 = vsub.f32 %v3392, %v4598
  %v4600 = vand.u32 %v4599, 4294901760
  %4601 = vmatpush1.msra.mxu0 %v4600
  %4602 = vmatprep.subr.mxu0 0.0
  %v4603 = vand.u32 %v3393, 4294901760
  %v4604 = vsub.f32 %v3393, %v4603
  %v4605 = vand.u32 %v4604, 4294901760
  %4606 = vmatpush1.msra.mxu0 %v4605
  %4607 = vmatprep.subr.mxu0 0.0
  %v4608 = vand.u32 %v3394, 4294901760
  %v4609 = vsub.f32 %v3394, %v4608
  %v4610 = vand.u32 %v4609, 4294901760
  %4611 = vmatpush1.msra.mxu0 %v4610
  %4612 = vmatprep.subr.mxu0 0.0
  %v4613 = vand.u32 %v3395, 4294901760
  %v4614 = vsub.f32 %v3395, %v4613
  %v4615 = vand.u32 %v4614, 4294901760
  %4616 = vmatpush1.msra.mxu0 %v4615
  %4617 = vmatprep.subr.mxu0 0.0
  %v4618 = vand.u32 %v3396, 4294901760
  %v4619 = vsub.f32 %v3396, %v4618
  %v4620 = vand.u32 %v4619, 4294901760
  %4621 = vmatpush1.msra.mxu0 %v4620
  %4622 = vmatprep.subr.mxu0 0.0
  %v4623 = vand.u32 %v3397, 4294901760
  %v4624 = vsub.f32 %v3397, %v4623
  %v4625 = vand.u32 %v4624, 4294901760
  %4626 = vmatpush1.msra.mxu0 %v4625
  %4627 = vmatprep.subr.mxu0 0.0
  %4628 = vmatpush1.msra.mxu0 0.0
  %4629 = vmatprep.subr.mxu0 0.0
  %4630 = vmatpush1.msra.mxu0 0.0
  %4631 = vmatprep.subr.mxu0 0.0
  %4632 = vmatpush1.msra.mxu0 0.0
  %4633 = vmatprep.subr.mxu0 0.0
  %4634 = vmatpush1.msra.mxu0 0.0
  %4635 = vmatprep.subr.mxu0 0.0
  %4636 = vmatpush1.msra.mxu0 0.0
  %4637 = vmatprep.subr.mxu0 0.0
  %4638 = vmatpush1.msra.mxu0 0.0
  %4639 = vmatprep.subr.mxu0 0.0
  %4640 = vmatpush1.msra.mxu0 0.0
  %4641 = vmatprep.subr.mxu0 0.0
  %4642 = vmatpush1.msra.mxu0 0.0
  %4643 = vmatprep.subr.mxu0 0.0
  %4644 = vmatpush1.msra.mxu0 0.0
  %4645 = vmatprep.subr.mxu0 0.0
  %4646 = vmatpush1.msra.mxu0 0.0
  %4647 = vmatprep.subr.mxu0 0.0
  %4648 = vmatpush1.msra.mxu0 0.0
  %4649 = vmatprep.subr.mxu0 0.0
  %4650 = vmatpush1.msra.mxu0 0.0
  %4651 = vmatprep.subr.mxu0 0.0
  %4652 = vmatpush1.msra.mxu0 0.0
  %4653 = vmatprep.subr.mxu0 0.0
  %4654 = vmatpush1.msra.mxu0 0.0
  %4655 = vmatprep.subr.mxu0 0.0
  %4656 = vmatpush1.msra.mxu0 0.0
  %4657 = vmatprep.subr.mxu0 0.0
  %4658 = vmatpush1.msra.mxu0 0.0
  %4659 = vmatprep.subr.mxu0 0.0
  %4660 = vmatpush1.msra.mxu0 0.0
  %4661 = vmatprep.subr.mxu0 0.0
  %4662 = vmatpush1.msra.mxu0 0.0
  %4663 = vmatprep.subr.mxu0 0.0
  %4664 = vmatpush1.msra.mxu0 0.0
  %4665 = vmatprep.subr.mxu0 0.0
  %4666 = vmatpush1.msra.mxu0 0.0
  %4667 = vmatprep.subr.mxu0 0.0
  %4668 = vmatpush1.msra.mxu0 0.0
  %4669 = vmatprep.subr.mxu0 0.0
  %4670 = vmatpush1.msra.mxu0 0.0
  %4671 = vmatprep.subr.mxu0 0.0
  %4672 = vmatpush1.msra.mxu0 0.0
  %4673 = vmatprep.subr.mxu0 0.0
  %4674 = vmatpush1.msra.mxu0 0.0
  %4675 = vmatprep.mubr.f32.mxu0 0.0
  %v4676 = vand.u32 %v3406, 4294901760
  %4677 = vmatmul.mubr.f32.gmra.mrb[0].mxu0 %v4676
  %v4678 = vpop.f32.mrb[0].mxu0
  %v4679 = vadd.f32 %v4392, %v4678
  %v4680 = vpop.f32.mrb[0].mxu0
  %4681 = vmatprep.mubr.f32.mxu0 0.0
  %v4682 = vand.u32 %v3409, 4294901760
  %4683 = vmatmul.mubr.f32.gmra.mrb[0].mxu0 %v4682
  %v4684 = vpop.f32.mrb[0].mxu0
  %v4685 = vadd.f32 %v4400, %v4684
  %v4686 = vpop.f32.mrb[0].mxu0
  %4687 = vmatprep.mubr.f32.mxu0 0.0
  %v4688 = vand.u32 %v3412, 4294901760
  %4689 = vmatmul.mubr.f32.gmra.mrb[0].mxu0 %v4688
  %v4690 = vpop.f32.mrb[0].mxu0
  %v4691 = vadd.f32 %v4408, %v4690
  %v4692 = vpop.f32.mrb[0].mxu0
  %4693 = vmatprep.mubr.f32.mxu0 0.0
  %v4694 = vand.u32 %v3415, 4294901760
  %4695 = vmatmul.mubr.f32.gmra.mrb[0].mxu0 %v4694
  %v4696 = vpop.f32.mrb[0].mxu0
  %v4697 = vadd.f32 %v4416, %v4696
  %v4698 = vpop.f32.mrb[0].mxu0
  %4699 = vmatprep.mubr.f32.mxu0 0.0
  %v4700 = vand.u32 %v3418, 4294901760
  %4701 = vmatmul.mubr.f32.gmra.mrb[0].mxu0 %v4700
  %v4702 = vpop.f32.mrb[0].mxu0
  %v4703 = vadd.f32 %v4424, %v4702
  %v4704 = vpop.f32.mrb[0].mxu0
  %4705 = vmatprep.mubr.f32.mxu0 0.0
  %v4706 = vand.u32 %v3421, 4294901760
  %4707 = vmatmul.mubr.f32.gmra.mrb[0].mxu0 %v4706
  %v4708 = vpop.f32.mrb[0].mxu0
  %v4709 = vadd.f32 %v4432, %v4708
  %v4710 = vpop.f32.mrb[0].mxu0
  %4711 = vmatprep.mubr.f32.mxu0 0.0
  %v4712 = vand.u32 %v3424, 4294901760
  %4713 = vmatmul.mubr.f32.gmra.mrb[0].mxu0 %v4712
  %v4714 = vpop.f32.mrb[0].mxu0
  %v4715 = vadd.f32 %v4440, %v4714
  %v4716 = vpop.f32.mrb[0].mxu0
  %4717 = vmatprep.mubr.f32.mxu0 0.0
  %v4718 = vand.u32 %v3427, 4294901760
  %4719 = vmatmul.mubr.f32.gmra.mrb[0].mxu0 %v4718
  %v4720 = vpop.f32.mrb[0].mxu0
  %v4721 = vadd.f32 %v4448, %v4720
  %v4722 = vpop.f32.mrb[0].mxu0
  %4723 = vmatprep.mubr.f32.mxu0 0.0
  %v4724 = vand.u32 %v3430, 4294901760
  %4725 = vmatmul.mubr.f32.gmra.mrb[0].mxu0 %v4724
  %v4726 = vpop.f32.mrb[0].mxu0
  %v4727 = vadd.f32 %v4456, %v4726
  %v4728 = vpop.f32.mrb[0].mxu0
  %4729 = vmatprep.mubr.f32.mxu0 0.0
  %v4730 = vand.u32 %v3433, 4294901760
  %4731 = vmatmul.mubr.f32.gmra.mrb[0].mxu0 %v4730
  %v4732 = vpop.f32.mrb[0].mxu0
  %v4733 = vadd.f32 %v4464, %v4732
  %v4734 = vpop.f32.mrb[0].mxu0
  %4735 = vmatprep.mubr.f32.mxu0 0.0
  %v4736 = vand.u32 %v3436, 4294901760
  %4737 = vmatmul.mubr.f32.gmra.mrb[0].mxu0 %v4736
  %v4738 = vpop.f32.mrb[0].mxu0
  %v4739 = vadd.f32 %v4472, %v4738
  %v4740 = vpop.f32.mrb[0].mxu0
  %4741 = vmatprep.mubr.f32.mxu0 0.0
  %v4742 = vand.u32 %v3439, 4294901760
  %4743 = vmatmul.mubr.f32.gmra.mrb[0].mxu0 %v4742
  %v4744 = vpop.f32.mrb[0].mxu0
  %v4745 = vadd.f32 %v4480, %v4744
  %v4746 = vpop.f32.mrb[0].mxu0
  %4747 = vmatprep.mubr.f32.mxu0 0.0
  %v4748 = vand.u32 %v3442, 4294901760
  %4749 = vmatmul.mubr.f32.gmra.mrb[0].mxu0 %v4748
  %v4750 = vpop.f32.mrb[0].mxu0
  %v4751 = vadd.f32 %v4488, %v4750
  %v4752 = vpop.f32.mrb[0].mxu0
  %4753 = vmatprep.mubr.f32.mxu0 0.0
  %v4754 = vand.u32 %v3445, 4294901760
  %4755 = vmatmul.mubr.f32.gmra.mrb[0].mxu0 %v4754
  %v4756 = vpop.f32.mrb[0].mxu0
  %v4757 = vadd.f32 %v4496, %v4756
  %v4758 = vpop.f32.mrb[0].mxu0
  %4759 = vmatprep.mubr.f32.mxu0 0.0
  %v4760 = vand.u32 %v3448, 4294901760
  %4761 = vmatmul.mubr.f32.gmra.mrb[0].mxu0 %v4760
  %v4762 = vpop.f32.mrb[0].mxu0
  %v4763 = vadd.f32 %v4504, %v4762
  %v4764 = vpop.f32.mrb[0].mxu0
  %4765 = vmatprep.mubr.f32.mxu0 0.0
  %v4766 = vand.u32 %v3451, 4294901760
  %4767 = vmatmul.mubr.f32.gmra.mrb[0].mxu0 %v4766
  %v4768 = vpop.f32.mrb[0].mxu0
  %v4769 = vadd.f32 %v4512, %v4768
  %v4770 = vpop.f32.mrb[0].mxu0
  %4771 = vmatprep.mubr.f32.mxu0 0.0
  %v4772 = vand.u32 %v3454, 4294901760
  %4773 = vmatmul.mubr.f32.gmra.mrb[0].mxu0 %v4772
  %v4774 = vpop.f32.mrb[0].mxu0
  %v4775 = vadd.f32 %v4520, %v4774
  %v4776 = vpop.f32.mrb[0].mxu0
  %4777 = vmatprep.mubr.f32.mxu0 0.0
  %v4778 = vand.u32 %v3457, 4294901760
  %4779 = vmatmul.mubr.f32.gmra.mrb[0].mxu0 %v4778
  %v4780 = vpop.f32.mrb[0].mxu0
  %v4781 = vadd.f32 %v4528, %v4780
  %v4782 = vpop.f32.mrb[0].mxu0
  %4783 = vmatprep.mubr.f32.mxu0 0.0
  %v4784 = vand.u32 %v3460, 4294901760
  %4785 = vmatmul.mubr.f32.gmra.mrb[0].mxu0 %v4784
  %v4786 = vpop.f32.mrb[0].mxu0
  %v4787 = vadd.f32 %v4536, %v4786
  %v4788 = vpop.f32.mrb[0].mxu0
  %4789 = vmatprep.mubr.f32.mxu0 0.0
  %v4790 = vand.u32 %v3463, 4294901760
  %4791 = vmatmul.mubr.f32.gmra.mrb[0].mxu0 %v4790
  %v4792 = vpop.f32.mrb[0].mxu0
  %v4793 = vadd.f32 %v4544, %v4792
  %v4794 = vpop.f32.mrb[0].mxu0
  %4795 = vmatprep.mubr.f32.mxu0 0.0
  %v4796 = vand.u32 %v3466, 4294901760
  %4797 = vmatmul.mubr.f32.gmra.mrb[0].mxu0 %v4796
  %v4798 = vpop.f32.mrb[0].mxu0
  %v4799 = vadd.f32 %v4552, %v4798
  %v4800 = vpop.f32.mrb[0].mxu0
  %4801 = vmatprep.mubr.f32.mxu0 0.0
  %v4802 = vand.u32 %v3469, 4294901760
  %4803 = vmatmul.mubr.f32.gmra.mrb[0].mxu0 %v4802
  %v4804 = vpop.f32.mrb[0].mxu0
  %v4805 = vadd.f32 %v4560, %v4804
  %v4806 = vpop.f32.mrb[0].mxu0
  %4807 = vmatprep.mubr.f32.mxu0 0.0
  %v4808 = vand.u32 %v3472, 4294901760
  %4809 = vmatmul.mubr.f32.gmra.mrb[0].mxu0 %v4808
  %v4810 = vpop.f32.mrb[0].mxu0
  %v4811 = vadd.f32 %v4568, %v4810
  %v4812 = vpop.f32.mrb[0].mxu0
  %4813 = vmatprep.mubr.f32.mxu0 0.0
  %v4814 = vand.u32 %v3475, 4294901760
  %4815 = vmatmul.mubr.f32.gmra.mrb[0].mxu0 %v4814
  %v4816 = vpop.f32.mrb[0].mxu0
  %v4817 = vadd.f32 %v4576, %v4816
  %v4818 = vpop.f32.mrb[0].mxu0
  %4819 = vmatprep.mubr.f32.mxu0 0.0
  %v4820 = vand.u32 %v3478, 4294901760
  %4821 = vmatmul.mubr.f32.gmra.mrb[0].mxu0 %v4820
  %v4822 = vpop.f32.mrb[0].mxu0
  %v4823 = vadd.f32 %v4584, %v4822
  %v4824 = vpop.f32.mrb[0].mxu0
  %4825 = vdwg.mxu0
  %4826 = vmatprep.subr.mxu0 0.0
  %v4827 = vand.u32 %v3390, 4294901760
  %4828 = vmatpush1.msra.mxu0 %v4827
  %4829 = vmatprep.subr.mxu0 0.0
  %v4830 = vand.u32 %v3391, 4294901760
  %4831 = vmatpush1.msra.mxu0 %v4830
  %4832 = vmatprep.subr.mxu0 0.0
  %v4833 = vand.u32 %v3392, 4294901760
  %4834 = vmatpush1.msra.mxu0 %v4833
  %4835 = vmatprep.subr.mxu0 0.0
  %v4836 = vand.u32 %v3393, 4294901760
  %4837 = vmatpush1.msra.mxu0 %v4836
  %4838 = vmatprep.subr.mxu0 0.0
  %v4839 = vand.u32 %v3394, 4294901760
  %4840 = vmatpush1.msra.mxu0 %v4839
  %4841 = vmatprep.subr.mxu0 0.0
  %v4842 = vand.u32 %v3395, 4294901760
  %4843 = vmatpush1.msra.mxu0 %v4842
  %4844 = vmatprep.subr.mxu0 0.0
  %v4845 = vand.u32 %v3396, 4294901760
  %4846 = vmatpush1.msra.mxu0 %v4845
  %4847 = vmatprep.subr.mxu0 0.0
  %v4848 = vand.u32 %v3397, 4294901760
  %4849 = vmatpush1.msra.mxu0 %v4848
  %4850 = vmatprep.subr.mxu0 0.0
  %4851 = vmatpush1.msra.mxu0 0.0
  %4852 = vmatprep.subr.mxu0 0.0
  %4853 = vmatpush1.msra.mxu0 0.0
  %4854 = vmatprep.subr.mxu0 0.0
  %4855 = vmatpush1.msra.mxu0 0.0
  %4856 = vmatprep.subr.mxu0 0.0
  %4857 = vmatpush1.msra.mxu0 0.0
  %4858 = vmatprep.subr.mxu0 0.0
  %4859 = vmatpush1.msra.mxu0 0.0
  %4860 = vmatprep.subr.mxu0 0.0
  %4861 = vmatpush1.msra.mxu0 0.0
  %4862 = vmatprep.subr.mxu0 0.0
  %4863 = vmatpush1.msra.mxu0 0.0
  %4864 = vmatprep.subr.mxu0 0.0
  %4865 = vmatpush1.msra.mxu0 0.0
  %4866 = vmatprep.subr.mxu0 0.0
  %4867 = vmatpush1.msra.mxu0 0.0
  %4868 = vmatprep.subr.mxu0 0.0
  %4869 = vmatpush1.msra.mxu0 0.0
  %4870 = vmatprep.subr.mxu0 0.0
  %4871 = vmatpush1.msra.mxu0 0.0
  %4872 = vmatprep.subr.mxu0 0.0
  %4873 = vmatpush1.msra.mxu0 0.0
  %4874 = vmatprep.subr.mxu0 0.0
  %4875 = vmatpush1.msra.mxu0 0.0
  %4876 = vmatprep.subr.mxu0 0.0
  %4877 = vmatpush1.msra.mxu0 0.0
  %4878 = vmatprep.subr.mxu0 0.0
  %4879 = vmatpush1.msra.mxu0 0.0
  %4880 = vmatprep.subr.mxu0 0.0
  %4881 = vmatpush1.msra.mxu0 0.0
  %4882 = vmatprep.subr.mxu0 0.0
  %4883 = vmatpush1.msra.mxu0 0.0
  %4884 = vmatprep.subr.mxu0 0.0
  %4885 = vmatpush1.msra.mxu0 0.0
  %4886 = vmatprep.subr.mxu0 0.0
  %4887 = vmatpush1.msra.mxu0 0.0
  %4888 = vmatprep.subr.mxu0 0.0
  %4889 = vmatpush1.msra.mxu0 0.0
  %4890 = vmatprep.subr.mxu0 0.0
  %4891 = vmatpush1.msra.mxu0 0.0
  %4892 = vmatprep.subr.mxu0 0.0
  %4893 = vmatpush1.msra.mxu0 0.0
  %4894 = vmatprep.subr.mxu0 0.0
  %4895 = vmatpush1.msra.mxu0 0.0
  %4896 = vmatprep.subr.mxu0 0.0
  %4897 = vmatpush1.msra.mxu0 0.0
  %4898 = vmatprep.mubr.f32.mxu0 0.0
  %v4899 = vand.u32 %v3406, 4294901760
  %4900 = vmatmul.mubr.f32.gmra.mrb[0].mxu0 %v4899
  %v4901 = vpop.f32.mrb[0].mxu0
  %v4902 = vadd.f32 %v4679, %v4901
  %v4903 = vpop.f32.mrb[0].mxu0
  %4904 = vmatprep.mubr.f32.mxu0 0.0
  %v4905 = vand.u32 %v3409, 4294901760
  %4906 = vmatmul.mubr.f32.gmra.mrb[0].mxu0 %v4905
  %v4907 = vpop.f32.mrb[0].mxu0
  %v4908 = vadd.f32 %v4685, %v4907
  %v4909 = vpop.f32.mrb[0].mxu0
  %4910 = vmatprep.mubr.f32.mxu0 0.0
  %v4911 = vand.u32 %v3412, 4294901760
  %4912 = vmatmul.mubr.f32.gmra.mrb[0].mxu0 %v4911
  %v4913 = vpop.f32.mrb[0].mxu0
  %v4914 = vadd.f32 %v4691, %v4913
  %v4915 = vpop.f32.mrb[0].mxu0
  %4916 = vmatprep.mubr.f32.mxu0 0.0
  %v4917 = vand.u32 %v3415, 4294901760
  %4918 = vmatmul.mubr.f32.gmra.mrb[0].mxu0 %v4917
  %v4919 = vpop.f32.mrb[0].mxu0
  %v4920 = vadd.f32 %v4697, %v4919
  %v4921 = vpop.f32.mrb[0].mxu0
  %4922 = vmatprep.mubr.f32.mxu0 0.0
  %v4923 = vand.u32 %v3418, 4294901760
  %4924 = vmatmul.mubr.f32.gmra.mrb[0].mxu0 %v4923
  %v4925 = vpop.f32.mrb[0].mxu0
  %v4926 = vadd.f32 %v4703, %v4925
  %v4927 = vpop.f32.mrb[0].mxu0
  %4928 = vmatprep.mubr.f32.mxu0 0.0
  %v4929 = vand.u32 %v3421, 4294901760
  %4930 = vmatmul.mubr.f32.gmra.mrb[0].mxu0 %v4929
  %v4931 = vpop.f32.mrb[0].mxu0
  %v4932 = vadd.f32 %v4709, %v4931
  %v4933 = vpop.f32.mrb[0].mxu0
  %4934 = vmatprep.mubr.f32.mxu0 0.0
  %v4935 = vand.u32 %v3424, 4294901760
  %4936 = vmatmul.mubr.f32.gmra.mrb[0].mxu0 %v4935
  %v4937 = vpop.f32.mrb[0].mxu0
  %v4938 = vadd.f32 %v4715, %v4937
  %v4939 = vpop.f32.mrb[0].mxu0
  %4940 = vmatprep.mubr.f32.mxu0 0.0
  %v4941 = vand.u32 %v3427, 4294901760
  %4942 = vmatmul.mubr.f32.gmra.mrb[0].mxu0 %v4941
  %v4943 = vpop.f32.mrb[0].mxu0
  %v4944 = vadd.f32 %v4721, %v4943
  %v4945 = vpop.f32.mrb[0].mxu0
  %4946 = vmatprep.mubr.f32.mxu0 0.0
  %v4947 = vand.u32 %v3430, 4294901760
  %4948 = vmatmul.mubr.f32.gmra.mrb[0].mxu0 %v4947
  %v4949 = vpop.f32.mrb[0].mxu0
  %v4950 = vadd.f32 %v4727, %v4949
  %v4951 = vpop.f32.mrb[0].mxu0
  %4952 = vmatprep.mubr.f32.mxu0 0.0
  %v4953 = vand.u32 %v3433, 4294901760
  %4954 = vmatmul.mubr.f32.gmra.mrb[0].mxu0 %v4953
  %v4955 = vpop.f32.mrb[0].mxu0
  %v4956 = vadd.f32 %v4733, %v4955
  %v4957 = vpop.f32.mrb[0].mxu0
  %4958 = vmatprep.mubr.f32.mxu0 0.0
  %v4959 = vand.u32 %v3436, 4294901760
  %4960 = vmatmul.mubr.f32.gmra.mrb[0].mxu0 %v4959
  %v4961 = vpop.f32.mrb[0].mxu0
  %v4962 = vadd.f32 %v4739, %v4961
  %v4963 = vpop.f32.mrb[0].mxu0
  %4964 = vmatprep.mubr.f32.mxu0 0.0
  %v4965 = vand.u32 %v3439, 4294901760
  %4966 = vmatmul.mubr.f32.gmra.mrb[0].mxu0 %v4965
  %v4967 = vpop.f32.mrb[0].mxu0
  %v4968 = vadd.f32 %v4745, %v4967
  %v4969 = vpop.f32.mrb[0].mxu0
  %4970 = vmatprep.mubr.f32.mxu0 0.0
  %v4971 = vand.u32 %v3442, 4294901760
  %4972 = vmatmul.mubr.f32.gmra.mrb[0].mxu0 %v4971
  %v4973 = vpop.f32.mrb[0].mxu0
  %v4974 = vadd.f32 %v4751, %v4973
  %v4975 = vpop.f32.mrb[0].mxu0
  %4976 = vmatprep.mubr.f32.mxu0 0.0
  %v4977 = vand.u32 %v3445, 4294901760
  %4978 = vmatmul.mubr.f32.gmra.mrb[0].mxu0 %v4977
  %v4979 = vpop.f32.mrb[0].mxu0
  %v4980 = vadd.f32 %v4757, %v4979
  %v4981 = vpop.f32.mrb[0].mxu0
  %4982 = vmatprep.mubr.f32.mxu0 0.0
  %v4983 = vand.u32 %v3448, 4294901760
  %4984 = vmatmul.mubr.f32.gmra.mrb[0].mxu0 %v4983
  %v4985 = vpop.f32.mrb[0].mxu0
  %v4986 = vadd.f32 %v4763, %v4985
  %v4987 = vpop.f32.mrb[0].mxu0
  %4988 = vmatprep.mubr.f32.mxu0 0.0
  %v4989 = vand.u32 %v3451, 4294901760
  %4990 = vmatmul.mubr.f32.gmra.mrb[0].mxu0 %v4989
  %v4991 = vpop.f32.mrb[0].mxu0
  %v4992 = vadd.f32 %v4769, %v4991
  %v4993 = vpop.f32.mrb[0].mxu0
  %4994 = vmatprep.mubr.f32.mxu0 0.0
  %v4995 = vand.u32 %v3454, 4294901760
  %4996 = vmatmul.mubr.f32.gmra.mrb[0].mxu0 %v4995
  %v4997 = vpop.f32.mrb[0].mxu0
  %v4998 = vadd.f32 %v4775, %v4997
  %v4999 = vpop.f32.mrb[0].mxu0
  %5000 = vmatprep.mubr.f32.mxu0 0.0
  %v5001 = vand.u32 %v3457, 4294901760
  %5002 = vmatmul.mubr.f32.gmra.mrb[0].mxu0 %v5001
  %v5003 = vpop.f32.mrb[0].mxu0
  %v5004 = vadd.f32 %v4781, %v5003
  %v5005 = vpop.f32.mrb[0].mxu0
  %5006 = vmatprep.mubr.f32.mxu0 0.0
  %v5007 = vand.u32 %v3460, 4294901760
  %5008 = vmatmul.mubr.f32.gmra.mrb[0].mxu0 %v5007
  %v5009 = vpop.f32.mrb[0].mxu0
  %v5010 = vadd.f32 %v4787, %v5009
  %v5011 = vpop.f32.mrb[0].mxu0
  %5012 = vmatprep.mubr.f32.mxu0 0.0
  %v5013 = vand.u32 %v3463, 4294901760
  %5014 = vmatmul.mubr.f32.gmra.mrb[0].mxu0 %v5013
  %v5015 = vpop.f32.mrb[0].mxu0
  %v5016 = vadd.f32 %v4793, %v5015
  %v5017 = vpop.f32.mrb[0].mxu0
  %5018 = vmatprep.mubr.f32.mxu0 0.0
  %v5019 = vand.u32 %v3466, 4294901760
  %5020 = vmatmul.mubr.f32.gmra.mrb[0].mxu0 %v5019
  %v5021 = vpop.f32.mrb[0].mxu0
  %v5022 = vadd.f32 %v4799, %v5021
  %v5023 = vpop.f32.mrb[0].mxu0
  %5024 = vmatprep.mubr.f32.mxu0 0.0
  %v5025 = vand.u32 %v3469, 4294901760
  %5026 = vmatmul.mubr.f32.gmra.mrb[0].mxu0 %v5025
  %v5027 = vpop.f32.mrb[0].mxu0
  %v5028 = vadd.f32 %v4805, %v5027
  %v5029 = vpop.f32.mrb[0].mxu0
  %5030 = vmatprep.mubr.f32.mxu0 0.0
  %v5031 = vand.u32 %v3472, 4294901760
  %5032 = vmatmul.mubr.f32.gmra.mrb[0].mxu0 %v5031
  %v5033 = vpop.f32.mrb[0].mxu0
  %v5034 = vadd.f32 %v4811, %v5033
  %v5035 = vpop.f32.mrb[0].mxu0
  %5036 = vmatprep.mubr.f32.mxu0 0.0
  %v5037 = vand.u32 %v3475, 4294901760
  %5038 = vmatmul.mubr.f32.gmra.mrb[0].mxu0 %v5037
  %v5039 = vpop.f32.mrb[0].mxu0
  %v5040 = vadd.f32 %v4817, %v5039
  %v5041 = vpop.f32.mrb[0].mxu0
  %5042 = vmatprep.mubr.f32.mxu0 0.0
  %v5043 = vand.u32 %v3478, 4294901760
  %5044 = vmatmul.mubr.f32.gmra.mrb[0].mxu0 %v5043
  %v5045 = vpop.f32.mrb[0].mxu0
  %v5046 = vadd.f32 %v4823, %v5045
  %v5047 = vpop.f32.mrb[0].mxu0
  %5048 = vdwg.mxu0
  %vm5049 = vcmask 130048
  %5050 = vst.msk [vmem:[%s7] sm:$0xff] %vm5049, %v4902
  %5051 = vst.msk [vmem:[%s7 + $0x8] sm:$0xff] %vm5049, %v4908
  %5052 = vst.msk [vmem:[%s7 + $0x10] sm:$0xff] %vm5049, %v4914
  %5053 = vst.msk [vmem:[%s7 + $0x18] sm:$0xff] %vm5049, %v4920
  %5054 = vst.msk [vmem:[%s7 + $0x20] sm:$0xff] %vm5049, %v4926
  %5055 = vst.msk [vmem:[%s7 + $0x28] sm:$0xff] %vm5049, %v4932
  %5056 = vst.msk [vmem:[%s7 + $0x30] sm:$0xff] %vm5049, %v4938
  %5057 = vst.msk [vmem:[%s7 + $0x38] sm:$0xff] %vm5049, %v4944
  %5058 = vst.msk [vmem:[%s7 + $0x40] sm:$0xff] %vm5049, %v4950
  %5059 = vst.msk [vmem:[%s7 + $0x48] sm:$0xff] %vm5049, %v4956
  %5060 = vst.msk [vmem:[%s7 + $0x50] sm:$0xff] %vm5049, %v4962
  %5061 = vst.msk [vmem:[%s7 + $0x58] sm:$0xff] %vm5049, %v4968
  %5062 = vst.msk [vmem:[%s7 + $0x60] sm:$0xff] %vm5049, %v4974
  %5063 = vst.msk [vmem:[%s7 + $0x68] sm:$0xff] %vm5049, %v4980
  %5064 = vst.msk [vmem:[%s7 + $0x70] sm:$0xff] %vm5049, %v4986
  %5065 = vst.msk [vmem:[%s7 + $0x78] sm:$0xff] %vm5049, %v4992
  %5066 = vst.msk [vmem:[%s7 + $0x80] sm:$0xff] %vm5049, %v4998
  %5067 = vst.msk [vmem:[%s7 + $0x88] sm:$0xff] %vm5049, %v5004
  %5068 = vst.msk [vmem:[%s7 + $0x90] sm:$0xff] %vm5049, %v5010
  %5069 = vst.msk [vmem:[%s7 + $0x98] sm:$0xff] %vm5049, %v5016
  %5070 = vst.msk [vmem:[%s7 + $0xa0] sm:$0xff] %vm5049, %v5022
  %5071 = vst.msk [vmem:[%s7 + $0xa8] sm:$0xff] %vm5049, %v5028
  %5072 = vst.msk [vmem:[%s7 + $0xb0] sm:$0xff] %vm5049, %v5034
  %5073 = vst.msk [vmem:[%s7 + $0xb8] sm:$0xff] %vm5049, %v5040
  %5074 = vst.msk [vmem:[%s7 + $0xc0] sm:$0xff] %vm5049, %v5046
  // Predicated region
  $region30: #{_mlp_forward_impl.1} parent=0 // pred_check
    _
  $region31: #{_mlp_forward_impl.1} parent=0 // pred_check_branch
    %5076 = sbr.rel (0) target = $region33
  $region32: #{_mlp_forward_impl.1} parent=0 // pred_region
    _
  $region33: #{_mlp_forward_impl.1} parent=0 // pred_fallthru
    _
  // Predicated region
  $region34: #{_mlp_forward_impl.1} parent=0 // pred_check
    _
  $region35: #{_mlp_forward_impl.1} parent=0 // pred_check_branch
    %5078 = sbr.rel (0) target = $region37
  $region36: #{_mlp_forward_impl.1} parent=0 // pred_region
    _
  $region37: #{_mlp_forward_impl.1} parent=0 // pred_fallthru
    _

</llo_original>
